<compile_context>
chip_gen: v6e
topology: v6e:2x2x1
jax: 0.10.0
libtpu: 0.0.40
codegen_flags: <defaults>
</compile_context>

<pallas_src>
import jax
import jax.numpy as jnp
from jax import lax
from jax.experimental import pallas as pl
from jax.experimental.pallas import tpu as pltpu


def bottleneck_kernel(x_ref, w1_ref, b1_ref, w2_ref, b2_ref, w3_ref, b3_ref,
                      out_ref, patch_ref):
    NB, H, W, Cin = x_ref.shape
    P = w1_ref.shape[1]            # planes
    Cout = w3_ref.shape[1]         # 1024
    rows = NB * H * W

    xb = x_ref[...]                # bf16 activations
    x2d = xb.reshape(rows, Cin)

    # conv1 (1x1, BN scale folded into w1) + bias + ReLU; bf16 MXU, f32 accum.
    h1 = jnp.dot(x2d, w1_ref[...], preferred_element_type=jnp.float32)
    h1 = jnp.maximum(h1 + b1_ref[...], 0.0)
    h1b = h1.astype(jnp.bfloat16).reshape(NB, H, W, P)   # one cast for im2col

    # conv2 (3x3, stride=1, pad=1) as ONE K = 9*P im2col matmul (bf16 patch).
    # Single dense zero store replaces the per-tap border-band zeroing; the tap
    # loop writes only the valid interior band of each tap. Tap order
    # (kh, kw, cin) matches w2_hwio.reshape(9*P, 256) on the host.
    patch_ref[...] = jnp.zeros_like(patch_ref)
    for t in range(9):
        sy, sx = t // 3 - 1, t % 3 - 1
        y0, y1 = max(0, -sy), min(H, H - sy)
        x0, x1 = max(0, -sx), min(W, W - sx)
        c0 = t * P
        patch_ref[:, y0:y1, x0:x1, c0:c0 + P] = \
            h1b[:, y0 + sy:y1 + sy, x0 + sx:x1 + sx, :]

    patch = patch_ref[...].reshape(rows, 9 * P)
    h2 = jnp.dot(patch, w2_ref[...], preferred_element_type=jnp.float32)
    h2 = jnp.maximum(h2 + b2_ref[...], 0.0)

    # conv3 (1x1) + bias + residual (f32) + ReLU; single bf16 cast at the store.
    h3 = jnp.dot(h2.astype(jnp.bfloat16), w3_ref[...],
                 preferred_element_type=jnp.float32)
    h3 = h3 + b3_ref[...]
    y = jnp.maximum(h3 + x2d.astype(jnp.float32), 0.0)
    out_ref[...] = y.astype(out_ref.dtype).reshape(NB, H, W, Cout)


def _pick_block_n(n, hw, max_rows=512):
    """Largest divisor of n so the per-step matmul M = nb*hw stays <= max_rows."""
    nb = 1
    for cand in range(1, n + 1):
        if n % cand == 0 and cand * hw <= max_rows:
            nb = cand
    return nb


def bottleneck3_5(x_nhwc, w1, b1, w2, b2, w3, b3, *, block_n=None):
    N, H, W, Cin = x_nhwc.shape
    P = w1.shape[1]
    Cmid = w2.shape[1]
    Cout = w3.shape[1]

    # No-downsample residual + stride=1 semantics of the source module.
    assert Cin == Cout, "no-downsample residual requires inplanes == 1024"
    assert w2.shape[0] == 9 * P, "conv2 weight must be (9*planes, 256)"

    nb = block_n or _pick_block_n(N, H * W)
    grid = (N // nb,)

    def const2d(shape):
        return pl.BlockSpec(shape, lambda n: (0, 0))

    flops = 2 * N * H * W * (Cin * P + 9 * P * Cmid + Cmid * Cout)
    bytes_accessed = (x_nhwc.size * 2 + N * H * W * Cout * 2
                      + (w1.size + w2.size + w3.size) * 2
                      + (b1.size + b2.size + b3.size) * 4)

    return pl.pallas_call(
        bottleneck_kernel,
        out_shape=jax.ShapeDtypeStruct((N, H, W, Cout), jnp.bfloat16),
        grid_spec=pltpu.PrefetchScalarGridSpec(
            num_scalar_prefetch=0,
            grid=grid,
            in_specs=[
                pl.BlockSpec((nb, H, W, Cin), lambda n: (n, 0, 0, 0)),
                const2d((Cin, P)), const2d((1, P)),
                const2d((9 * P, Cmid)), const2d((1, Cmid)),
                const2d((Cmid, Cout)), const2d((1, Cout)),
            ],
            out_specs=pl.BlockSpec((nb, H, W, Cout), lambda n: (n, 0, 0, 0)),
            scratch_shapes=[pltpu.VMEM((nb, H, W, 9 * P), jnp.bfloat16)],
        ),
        compiler_params=pltpu.CompilerParams(
            dimension_semantics=("parallel",),
            vmem_limit_bytes=32 * 1024 * 1024),
        cost_estimate=pl.CostEstimate(flops=flops, transcendentals=0,
                                      bytes_accessed=bytes_accessed),
    )(x_nhwc, w1, b1, w2, b2, w3, b3)


def fold_bn(w_f32, gamma, beta, mean, var, eps=1e-5):
    """Fold inference-mode BN scale into the conv weight (last dim = out ch)."""
    scale = gamma / jnp.sqrt(var + eps)
    bias = (beta - mean * scale).reshape(1, -1).astype(jnp.float32)
    w = (w_f32 * scale).astype(jnp.bfloat16)
    return w, bias


def make_bn_raw(key, c):
    k1, k2, k3, k4 = jax.random.split(key, 4)
    gamma = jax.random.uniform(k1, (c,), jnp.float32, 0.5, 1.5)
    beta = 0.1 * jax.random.normal(k2, (c,), jnp.float32)
    mean = 0.1 * jax.random.normal(k3, (c,), jnp.float32)
    var = jax.random.uniform(k4, (c,), jnp.float32, 0.5, 1.5)
    return gamma, beta, mean, var


def reference(x_bf16, w1, b1, w2_hwio, b2, w3, b3):
    # Mirrors the kernel's numerics: bf16 matmul operands, f32 accumulation,
    # f32 bias / residual / ReLU, bf16 output.
    h1 = jnp.einsum('nhwc,cp->nhwp', x_bf16, w1,
                    preferred_element_type=jnp.float32)
    h1 = jnp.maximum(h1 + b1[0], 0.0)
    h2 = lax.conv_general_dilated(h1.astype(jnp.bfloat16), w2_hwio, (1, 1),
                                  'SAME',
                                  dimension_numbers=('NHWC', 'HWIO', 'NHWC'),
                                  preferred_element_type=jnp.float32)
    h2 = jnp.maximum(h2 + b2[0], 0.0)
    h3 = jnp.einsum('nhwc,co->nhwo', h2.astype(jnp.bfloat16), w3,
                    preferred_element_type=jnp.float32)
    h3 = h3 + b3[0]
    return jnp.maximum(h3 + x_bf16.astype(jnp.float32), 0.0).astype(jnp.bfloat16)


if __name__ == "__main__":
    # Module-implied shapes: conv2 -> 256 ch, conv3 -> 1024 ch; residual with
    # no downsample forces inplanes = 1024, stride = 1. Keep spatial small.
    N, H, W = 2, 8, 8
    inplanes, planes = 1024, 64

    key = jax.random.PRNGKey(0)
    kx, kw1, kw2, kw3, kb1, kb2, kb3 = jax.random.split(key, 7)

    # bf16 activations at the HBM boundary.
    x_nhwc = jax.random.normal(kx, (N, H, W, inplanes),
                               jnp.float32).astype(jnp.bfloat16)

    w1_f32 = 0.02 * jax.random.normal(kw1, (inplanes, planes), jnp.float32)
    w2_hwio_f32 = 0.02 * jax.random.normal(kw2, (3, 3, planes, 256), jnp.float32)
    w3_f32 = 0.02 * jax.random.normal(kw3, (256, 1024), jnp.float32)

    # Fold BN scales into bf16 weights; biases stay f32.
    w1, b1 = fold_bn(w1_f32, *make_bn_raw(kb1, planes))
    w2_hwio, b2 = fold_bn(w2_hwio_f32, *make_bn_raw(kb2, 256))
    w3, b3 = fold_bn(w3_f32, *make_bn_raw(kb3, 1024))
    w2 = w2_hwio.reshape(9 * planes, 256)   # (kh, kw, cin) flattened -> K = 576

    out = bottleneck3_5(x_nhwc, w1, b1, w2, b2, w3, b3)
    out = jax.block_until_ready(out)

    ref = reference(x_nhwc, w1, b1, w2_hwio, b2, w3, b3)
    ref = jax.block_until_ready(ref)

    out32 = out.astype(jnp.float32)
    ref32 = ref.astype(jnp.float32)
    if not bool(jnp.allclose(out32, ref32, rtol=2e-2, atol=5e-2)):
        raise AssertionError(
            f"mismatch vs reference, max abs diff = "
            f"{float(jnp.max(jnp.abs(out32 - ref32)))}")

    print("KERNEL_OK")
</pallas_src>

<mosaic_0001>
module attributes {stable_mosaic.version = 11 : i64} {
  func.func @bottleneck_kernel(%arg0: i32, %arg1: memref<2x8x8x1024xbf16, #tpu.memory_space<vmem>>, %arg2: memref<1024x64xbf16, #tpu.memory_space<vmem>>, %arg3: memref<1x64xf32, #tpu.memory_space<vmem>>, %arg4: memref<576x256xbf16, #tpu.memory_space<vmem>>, %arg5: memref<1x256xf32, #tpu.memory_space<vmem>>, %arg6: memref<256x1024xbf16, #tpu.memory_space<vmem>>, %arg7: memref<1x1024xf32, #tpu.memory_space<vmem>>, %arg8: memref<2x8x8x1024xbf16, #tpu.memory_space<vmem>>, %arg9: memref<2x8x8x576xbf16, #tpu.memory_space<vmem>>) attributes {dimension_semantics = [#tpu.dimension_semantics<parallel>], iteration_bounds = array<i64: 1>, scalar_prefetch = 0 : i64, scratch_operands = 1 : i64, tpu.core_type = #tpu.core_type<tc>, window_params = [{transform_indices = @transform_0, window_bounds = array<i64: 2, 8, 8, 1024>}, {pipeline_mode = #tpu.pipeline_mode<synchronous>, transform_indices = @transform_1, window_bounds = array<i64: 1024, 64>}, {pipeline_mode = #tpu.pipeline_mode<synchronous>, transform_indices = @transform_2, window_bounds = array<i64: 1, 64>}, {pipeline_mode = #tpu.pipeline_mode<synchronous>, transform_indices = @transform_3, window_bounds = array<i64: 576, 256>}, {pipeline_mode = #tpu.pipeline_mode<synchronous>, transform_indices = @transform_4, window_bounds = array<i64: 1, 256>}, {pipeline_mode = #tpu.pipeline_mode<synchronous>, transform_indices = @transform_5, window_bounds = array<i64: 256, 1024>}, {pipeline_mode = #tpu.pipeline_mode<synchronous>, transform_indices = @transform_6, window_bounds = array<i64: 1, 1024>}, {transform_indices = @transform_7, window_bounds = array<i64: 2, 8, 8, 1024>}]} {
    %c0 = arith.constant 0 : index
    %c0_0 = arith.constant 0 : index
    %c0_1 = arith.constant 0 : index
    %c0_2 = arith.constant 0 : index
    %0 = vector.load %arg1[%c0, %c0_0, %c0_1, %c0_2] : memref<2x8x8x1024xbf16, #tpu.memory_space<vmem>>, vector<2x8x8x1024xbf16>
    %1 = vector.shape_cast %0 : vector<2x8x8x1024xbf16> to vector<128x1024xbf16>
    %c0_3 = arith.constant 0 : index
    %c0_4 = arith.constant 0 : index
    %2 = vector.load %arg2[%c0_3, %c0_4] : memref<1024x64xbf16, #tpu.memory_space<vmem>>, vector<1024x64xbf16>
    %cst = arith.constant dense<0.000000e+00> : vector<128x64xf32>
    %3 = tpu.matmul %1, %2, %cst {dimension_numbers = #tpu.dot_dimension_numbers<[1], [0], [0], [1], [0, 0, 1, 1], [], []>} : vector<128x1024xbf16>, vector<1024x64xbf16>, vector<128x64xf32> -> vector<128x64xf32>
    %c0_5 = arith.constant 0 : index
    %c0_6 = arith.constant 0 : index
    %4 = vector.load %arg3[%c0_5, %c0_6] : memref<1x64xf32, #tpu.memory_space<vmem>>, vector<1x64xf32>
    %5 = vector.broadcast %4 : vector<1x64xf32> to vector<128x64xf32>
    %6 = arith.addf %3, %5 : vector<128x64xf32>
    %cst_7 = arith.constant 0.000000e+00 : f32
    %7 = vector.broadcast %cst_7 : f32 to vector<128x64xf32>
    %8 = arith.maximumf %6, %7 : vector<128x64xf32>
    %9 = arith.truncf %8 : vector<128x64xf32> to vector<128x64xbf16>
    %10 = vector.shape_cast %9 : vector<128x64xbf16> to vector<2x8x8x64xbf16>
    %cst_8 = arith.constant 0.000000e+00 : bf16
    %11 = vector.broadcast %cst_8 : bf16 to vector<2x8x8x576xbf16>
    %c0_9 = arith.constant 0 : index
    %c0_10 = arith.constant 0 : index
    %c0_11 = arith.constant 0 : index
    %c0_12 = arith.constant 0 : index
    %12 = vector.load %arg9[%c0_9, %c0_10, %c0_11, %c0_12] : memref<2x8x8x576xbf16, #tpu.memory_space<vmem>>, vector<2x8x8x576xbf16>
    tpu.vector_store %arg9[%c0_9, %c0_10, %c0_11, %c0_12], %11 {strides = array<i32>} : memref<2x8x8x576xbf16, #tpu.memory_space<vmem>>, vector<2x8x8x576xbf16>,
    %13 = vector.extract_strided_slice %10 {offsets = [0, 0, 0, 0], sizes = [2, 7, 7, 64], strides = [1, 1, 1, 1]} : vector<2x8x8x64xbf16> to vector<2x7x7x64xbf16>
    %c0_13 = arith.constant 0 : index
    %c1 = arith.constant 1 : index
    %c1_14 = arith.constant 1 : index
    %c0_15 = arith.constant 0 : index
    %14 = vector.load %arg9[%c0_13, %c1, %c1_14, %c0_15] : memref<2x8x8x576xbf16, #tpu.memory_space<vmem>>, vector<2x7x7x64xbf16>
    tpu.vector_store %arg9[%c0_13, %c1, %c1_14, %c0_15], %13 {strides = array<i32>} : memref<2x8x8x576xbf16, #tpu.memory_space<vmem>>, vector<2x7x7x64xbf16>,
    %15 = vector.extract_strided_slice %10 {offsets = [0, 0, 0, 0], sizes = [2, 7, 8, 64], strides = [1, 1, 1, 1]} : vector<2x8x8x64xbf16> to vector<2x7x8x64xbf16>
    %c0_16 = arith.constant 0 : index
    %c1_17 = arith.constant 1 : index
    %c0_18 = arith.constant 0 : index
    %c64 = arith.constant 64 : index
    %16 = vector.load %arg9[%c0_16, %c1_17, %c0_18, %c64] : memref<2x8x8x576xbf16, #tpu.memory_space<vmem>>, vector<2x7x8x64xbf16>
    tpu.vector_store %arg9[%c0_16, %c1_17, %c0_18, %c64], %15 {strides = array<i32>} : memref<2x8x8x576xbf16, #tpu.memory_space<vmem>>, vector<2x7x8x64xbf16>,
    %17 = vector.extract_strided_slice %10 {offsets = [0, 0, 1, 0], sizes = [2, 7, 7, 64], strides = [1, 1, 1, 1]} : vector<2x8x8x64xbf16> to vector<2x7x7x64xbf16>
    %c0_19 = arith.constant 0 : index
    %c1_20 = arith.constant 1 : index
    %c0_21 = arith.constant 0 : index
    %c128 = arith.constant 128 : index
    %18 = vector.load %arg9[%c0_19, %c1_20, %c0_21, %c128] : memref<2x8x8x576xbf16, #tpu.memory_space<vmem>>, vector<2x7x7x64xbf16>
    tpu.vector_store %arg9[%c0_19, %c1_20, %c0_21, %c128], %17 {strides = array<i32>} : memref<2x8x8x576xbf16, #tpu.memory_space<vmem>>, vector<2x7x7x64xbf16>,
    %19 = vector.extract_strided_slice %10 {offsets = [0, 0, 0, 0], sizes = [2, 8, 7, 64], strides = [1, 1, 1, 1]} : vector<2x8x8x64xbf16> to vector<2x8x7x64xbf16>
    %c0_22 = arith.constant 0 : index
    %c0_23 = arith.constant 0 : index
    %c1_24 = arith.constant 1 : index
    %c192 = arith.constant 192 : index
    %20 = vector.load %arg9[%c0_22, %c0_23, %c1_24, %c192] : memref<2x8x8x576xbf16, #tpu.memory_space<vmem>>, vector<2x8x7x64xbf16>
    tpu.vector_store %arg9[%c0_22, %c0_23, %c1_24, %c192], %19 {strides = array<i32>} : memref<2x8x8x576xbf16, #tpu.memory_space<vmem>>, vector<2x8x7x64xbf16>,
    %c0_25 = arith.constant 0 : index
    %c0_26 = arith.constant 0 : index
    %c0_27 = arith.constant 0 : index
    %c256 = arith.constant 256 : index
    %21 = vector.load %arg9[%c0_25, %c0_26, %c0_27, %c256] : memref<2x8x8x576xbf16, #tpu.memory_space<vmem>>, vector<2x8x8x64xbf16>
    tpu.vector_store %arg9[%c0_25, %c0_26, %c0_27, %c256], %10 {strides = array<i32>} : memref<2x8x8x576xbf16, #tpu.memory_space<vmem>>, vector<2x8x8x64xbf16>,
    %22 = vector.extract_strided_slice %10 {offsets = [0, 0, 1, 0], sizes = [2, 8, 7, 64], strides = [1, 1, 1, 1]} : vector<2x8x8x64xbf16> to vector<2x8x7x64xbf16>
    %c0_28 = arith.constant 0 : index
    %c0_29 = arith.constant 0 : index
    %c0_30 = arith.constant 0 : index
    %c320 = arith.constant 320 : index
    %23 = vector.load %arg9[%c0_28, %c0_29, %c0_30, %c320] : memref<2x8x8x576xbf16, #tpu.memory_space<vmem>>, vector<2x8x7x64xbf16>
    tpu.vector_store %arg9[%c0_28, %c0_29, %c0_30, %c320], %22 {strides = array<i32>} : memref<2x8x8x576xbf16, #tpu.memory_space<vmem>>, vector<2x8x7x64xbf16>,
    %24 = vector.extract_strided_slice %10 {offsets = [0, 1, 0, 0], sizes = [2, 7, 7, 64], strides = [1, 1, 1, 1]} : vector<2x8x8x64xbf16> to vector<2x7x7x64xbf16>
    %c0_31 = arith.constant 0 : index
    %c0_32 = arith.constant 0 : index
    %c1_33 = arith.constant 1 : index
    %c384 = arith.constant 384 : index
    %25 = vector.load %arg9[%c0_31, %c0_32, %c1_33, %c384] : memref<2x8x8x576xbf16, #tpu.memory_space<vmem>>, vector<2x7x7x64xbf16>
    tpu.vector_store %arg9[%c0_31, %c0_32, %c1_33, %c384], %24 {strides = array<i32>} : memref<2x8x8x576xbf16, #tpu.memory_space<vmem>>, vector<2x7x7x64xbf16>,
    %26 = vector.extract_strided_slice %10 {offsets = [0, 1, 0, 0], sizes = [2, 7, 8, 64], strides = [1, 1, 1, 1]} : vector<2x8x8x64xbf16> to vector<2x7x8x64xbf16>
    %c0_34 = arith.constant 0 : index
    %c0_35 = arith.constant 0 : index
    %c0_36 = arith.constant 0 : index
    %c448 = arith.constant 448 : index
    %27 = vector.load %arg9[%c0_34, %c0_35, %c0_36, %c448] : memref<2x8x8x576xbf16, #tpu.memory_space<vmem>>, vector<2x7x8x64xbf16>
    tpu.vector_store %arg9[%c0_34, %c0_35, %c0_36, %c448], %26 {strides = array<i32>} : memref<2x8x8x576xbf16, #tpu.memory_space<vmem>>, vector<2x7x8x64xbf16>,
    %28 = vector.extract_strided_slice %10 {offsets = [0, 1, 1, 0], sizes = [2, 7, 7, 64], strides = [1, 1, 1, 1]} : vector<2x8x8x64xbf16> to vector<2x7x7x64xbf16>
    %c0_37 = arith.constant 0 : index
    %c0_38 = arith.constant 0 : index
    %c0_39 = arith.constant 0 : index
    %c512 = arith.constant 512 : index
    %29 = vector.load %arg9[%c0_37, %c0_38, %c0_39, %c512] : memref<2x8x8x576xbf16, #tpu.memory_space<vmem>>, vector<2x7x7x64xbf16>
    tpu.vector_store %arg9[%c0_37, %c0_38, %c0_39, %c512], %28 {strides = array<i32>} : memref<2x8x8x576xbf16, #tpu.memory_space<vmem>>, vector<2x7x7x64xbf16>,
    %c0_40 = arith.constant 0 : index
    %c0_41 = arith.constant 0 : index
    %c0_42 = arith.constant 0 : index
    %c0_43 = arith.constant 0 : index
    %30 = vector.load %arg9[%c0_40, %c0_41, %c0_42, %c0_43] : memref<2x8x8x576xbf16, #tpu.memory_space<vmem>>, vector<2x8x8x576xbf16>
    %31 = vector.shape_cast %30 : vector<2x8x8x576xbf16> to vector<128x576xbf16>
    %c0_44 = arith.constant 0 : index
    %c0_45 = arith.constant 0 : index
    %32 = vector.load %arg4[%c0_44, %c0_45] : memref<576x256xbf16, #tpu.memory_space<vmem>>, vector<576x256xbf16>
    %cst_46 = arith.constant dense<0.000000e+00> : vector<128x256xf32>
    %33 = tpu.matmul %31, %32, %cst_46 {dimension_numbers = #tpu.dot_dimension_numbers<[1], [0], [0], [1], [0, 0, 1, 1], [], []>} : vector<128x576xbf16>, vector<576x256xbf16>, vector<128x256xf32> -> vector<128x256xf32>
    %c0_47 = arith.constant 0 : index
    %c0_48 = arith.constant 0 : index
    %34 = vector.load %arg5[%c0_47, %c0_48] : memref<1x256xf32, #tpu.memory_space<vmem>>, vector<1x256xf32>
    %35 = vector.broadcast %34 : vector<1x256xf32> to vector<128x256xf32>
    %36 = arith.addf %33, %35 : vector<128x256xf32>
    %cst_49 = arith.constant 0.000000e+00 : f32
    %37 = vector.broadcast %cst_49 : f32 to vector<128x256xf32>
    %38 = arith.maximumf %36, %37 : vector<128x256xf32>
    %39 = arith.truncf %38 : vector<128x256xf32> to vector<128x256xbf16>
    %c0_50 = arith.constant 0 : index
    %c0_51 = arith.constant 0 : index
    %40 = vector.load %arg6[%c0_50, %c0_51] : memref<256x1024xbf16, #tpu.memory_space<vmem>>, vector<256x1024xbf16>
    %cst_52 = arith.constant dense<0.000000e+00> : vector<128x1024xf32>
    %41 = tpu.matmul %39, %40, %cst_52 {dimension_numbers = #tpu.dot_dimension_numbers<[1], [0], [0], [1], [0, 0, 1, 1], [], []>} : vector<128x256xbf16>, vector<256x1024xbf16>, vector<128x1024xf32> -> vector<128x1024xf32>
    %c0_53 = arith.constant 0 : index
    %c0_54 = arith.constant 0 : index
    %42 = vector.load %arg7[%c0_53, %c0_54] : memref<1x1024xf32, #tpu.memory_space<vmem>>, vector<1x1024xf32>
    %43 = vector.broadcast %42 : vector<1x1024xf32> to vector<128x1024xf32>
    %44 = arith.addf %41, %43 : vector<128x1024xf32>
    %45 = arith.extf %1 : vector<128x1024xbf16> to vector<128x1024xf32>
    %46 = arith.addf %44, %45 : vector<128x1024xf32>
    %cst_55 = arith.constant 0.000000e+00 : f32
    %47 = vector.broadcast %cst_55 : f32 to vector<128x1024xf32>
    %48 = arith.maximumf %46, %47 : vector<128x1024xf32>
    %49 = arith.truncf %48 : vector<128x1024xf32> to vector<128x1024xbf16>
    %50 = vector.shape_cast %49 : vector<128x1024xbf16> to vector<2x8x8x1024xbf16>
    %c0_56 = arith.constant 0 : index
    %c0_57 = arith.constant 0 : index
    %c0_58 = arith.constant 0 : index
    %c0_59 = arith.constant 0 : index
    %51 = vector.load %arg8[%c0_56, %c0_57, %c0_58, %c0_59] : memref<2x8x8x1024xbf16, #tpu.memory_space<vmem>>, vector<2x8x8x1024xbf16>
    tpu.vector_store %arg8[%c0_56, %c0_57, %c0_58, %c0_59], %50 {strides = array<i32>} : memref<2x8x8x1024xbf16, #tpu.memory_space<vmem>>, vector<2x8x8x1024xbf16>,
    return
  }
  func.func @transform_0(%arg0: i32) -> (i32, i32, i32, i32) {
    %c0_i32 = arith.constant 0 : i32
    %c0_i32_0 = arith.constant 0 : i32
    %c0_i32_1 = arith.constant 0 : i32
    %c0_i32_2 = arith.constant 0 : i32
    return %arg0, %c0_i32, %c0_i32_0, %c0_i32_1 : i32, i32, i32, i32
  }
  func.func @transform_1(%arg0: i32) -> (i32, i32) {
    %c0_i32 = arith.constant 0 : i32
    %c0_i32_0 = arith.constant 0 : i32
    %c0_i32_1 = arith.constant 0 : i32
    return %c0_i32, %c0_i32_0 : i32, i32
  }
  func.func @transform_2(%arg0: i32) -> (i32, i32) {
    %c0_i32 = arith.constant 0 : i32
    %c0_i32_0 = arith.constant 0 : i32
    %c0_i32_1 = arith.constant 0 : i32
    return %c0_i32, %c0_i32_0 : i32, i32
  }
  func.func @transform_3(%arg0: i32) -> (i32, i32) {
    %c0_i32 = arith.constant 0 : i32
    %c0_i32_0 = arith.constant 0 : i32
    %c0_i32_1 = arith.constant 0 : i32
    return %c0_i32, %c0_i32_0 : i32, i32
  }
  func.func @transform_4(%arg0: i32) -> (i32, i32) {
    %c0_i32 = arith.constant 0 : i32
    %c0_i32_0 = arith.constant 0 : i32
    %c0_i32_1 = arith.constant 0 : i32
    return %c0_i32, %c0_i32_0 : i32, i32
  }
  func.func @transform_5(%arg0: i32) -> (i32, i32) {
    %c0_i32 = arith.constant 0 : i32
    %c0_i32_0 = arith.constant 0 : i32
    %c0_i32_1 = arith.constant 0 : i32
    return %c0_i32, %c0_i32_0 : i32, i32
  }
  func.func @transform_6(%arg0: i32) -> (i32, i32) {
    %c0_i32 = arith.constant 0 : i32
    %c0_i32_0 = arith.constant 0 : i32
    %c0_i32_1 = arith.constant 0 : i32
    return %c0_i32, %c0_i32_0 : i32, i32
  }
  func.func @transform_7(%arg0: i32) -> (i32, i32, i32, i32) {
    %c0_i32 = arith.constant 0 : i32
    %c0_i32_0 = arith.constant 0 : i32
    %c0_i32_1 = arith.constant 0 : i32
    %c0_i32_2 = arith.constant 0 : i32
    return %arg0, %c0_i32, %c0_i32_0, %c0_i32_1 : i32, i32, i32, i32
  }
}

</mosaic_0001>

<llo_original>
// kernel: tpu_custom_call.1
$region0: #{tpu_custom_call.1}
  #allocation0 [shape = 'u32[]', space=smem, size = 0x4, offset = 0x4, fixed_abs, tag = 'smem constant byte address 0x4 - core index']
  #allocation1 [shape = 'u32[144,128]{1,0:T(1,128)}', space=vmem, size = 0x12000, scoped, tag = 'internal scratch']
  #allocation2 [shape = 'bf16[2,8,8,576]{3,2,1,0:T(8,128)(2,1)}', space=vmem, size = 0x28000, scoped, tag = 'scratch operand']
  %s0 = inlined_call_operand.hbm [shape: bf16[2,8,8,1024], index: 0, kind: input, shape index: {}]
  %s1 = inlined_call_operand.vmem [shape: bf16[1024,64], index: 1, kind: input, shape index: {}]
  %s2 = inlined_call_operand.vmem [shape: f32[1,64], index: 2, kind: input, shape index: {}]
  %s3 = inlined_call_operand.vmem [shape: bf16[576,256], index: 3, kind: input, shape index: {}]
  %s4 = inlined_call_operand.vmem [shape: f32[1,256], index: 4, kind: input, shape index: {}]
  %s5 = inlined_call_operand.hbm [shape: bf16[256,1024], index: 5, kind: input, shape index: {}]
  %s6 = inlined_call_operand.vmem [shape: f32[1,1024], index: 6, kind: input, shape index: {}]
  %s7 = inlined_call_operand.hbm [shape: bf16[2,8,8,1024], index: 7, kind: output, shape index: {}]
  %s8 = sld [smem:[#allocation0]]
  $region46: #{tpu_custom_call.1} parent=0
    _
  %s10 = ssub.s32 1, %s8
  %s11 = scalar_select 0, %s10, %s8
  $region1: #{tpu_custom_call.1} parent=0
    #allocation3 [shape = 'u8[262144]{0}', space=vmem, size = 0x40000, scoped, tag = 'input window, operand 0, single buffered']
    #allocation4 [shape = 's32[1]{0}', space=sflag, size = 0x4, scoped, tag = 'scoped memory for tpu_custom_call.1']
    #allocation5 [shape = 's32[1]{0}', space=sflag, size = 0x4, scoped, tag = 'scoped memory for tpu_custom_call.1']
    #allocation6 [shape = 'u8[524288]{0}', space=vmem, size = 0x80000, scoped, tag = 'input window, operand 5, single buffered']
    #allocation7 [shape = 's32[1]{0}', space=sflag, size = 0x4, scoped, tag = 'scoped memory for tpu_custom_call.1']
    #allocation8 [shape = 'u8[262144]{0}', space=vmem, size = 0x40000, scoped, tag = 'output window, operand 0, single buffered']
    %12 = vsyncpa [#allocation4], 0
    %13 = vsyncpa [#allocation7], 0
    %14 = vsyncpa [#allocation5], 0
    // Predicated region
    $region2: #{tpu_custom_call.1} parent=1 // pred_check
      _
    $region3: #{tpu_custom_call.1} parent=1 // pred_check_branch
      %16 = sbr.rel (0) target = $region5
    $region4: #{tpu_custom_call.1} parent=1 // pred_region
      %s18 = ssub.s32 8192, 8192
      %19 = vsyncadd [#allocation4], %s18
      %s20 = sshll.u32 [#allocation3], 4
      %s21 = int_to_ptr.vmem [resolvable:$true] %s20
      %26 = dma.hbm_to_vmem [thread:$0]  %s0, 8192, %s21, [#allocation4], 512, 512, 32
    $region5: #{tpu_custom_call.1} parent=1 // pred_fallthru
      _
    // Predicated region
    $region6: #{tpu_custom_call.1} parent=1 // pred_check
      _
    $region7: #{tpu_custom_call.1} parent=1 // pred_check_branch
      %28 = sbr.rel (0) target = $region9
    $region8: #{tpu_custom_call.1} parent=1 // pred_region
      _
    $region9: #{tpu_custom_call.1} parent=1 // pred_fallthru
      _
    // Predicated region
    $region10: #{tpu_custom_call.1} parent=1 // pred_check
      _
    $region11: #{tpu_custom_call.1} parent=1 // pred_check_branch
      %30 = sbr.rel (0) target = $region13
    $region12: #{tpu_custom_call.1} parent=1 // pred_region
      _
    $region13: #{tpu_custom_call.1} parent=1 // pred_fallthru
      _
    // Predicated region
    $region14: #{tpu_custom_call.1} parent=1 // pred_check
      _
    $region15: #{tpu_custom_call.1} parent=1 // pred_check_branch
      %32 = sbr.rel (0) target = $region17
    $region16: #{tpu_custom_call.1} parent=1 // pred_region
      _
    $region17: #{tpu_custom_call.1} parent=1 // pred_fallthru
      _
    // Predicated region
    $region18: #{tpu_custom_call.1} parent=1 // pred_check
      _
    $region19: #{tpu_custom_call.1} parent=1 // pred_check_branch
      %34 = sbr.rel (0) target = $region21
    $region20: #{tpu_custom_call.1} parent=1 // pred_region
      _
    $region21: #{tpu_custom_call.1} parent=1 // pred_fallthru
      _
    // Predicated region
    $region22: #{tpu_custom_call.1} parent=1 // pred_check
      _
    $region23: #{tpu_custom_call.1} parent=1 // pred_check_branch
      %36 = sbr.rel (0) target = $region25
    $region24: #{tpu_custom_call.1} parent=1 // pred_region
      %s38 = ssub.s32 16384, 16384
      %39 = vsyncadd [#allocation7], %s38
      %s40 = sshll.u32 [#allocation6], 4
      %s41 = int_to_ptr.vmem [resolvable:$true] %s40
      %46 = dma.hbm_to_vmem [thread:$0]  %s5, 16384, %s41, [#allocation7], 512, 512, 32
    $region25: #{tpu_custom_call.1} parent=1 // pred_fallthru
      _
    // Predicated region
    $region26: #{tpu_custom_call.1} parent=1 // pred_check
      _
    $region27: #{tpu_custom_call.1} parent=1 // pred_check_branch
      %48 = sbr.rel (0) target = $region29
    $region28: #{tpu_custom_call.1} parent=1 // pred_region
      _
    $region29: #{tpu_custom_call.1} parent=1 // pred_fallthru
      _
    // Predicated region
    $region30: #{tpu_custom_call.1} parent=1 // pred_check
      _
    $region31: #{tpu_custom_call.1} parent=1 // pred_check_branch
      %50 = sbr.rel (0) target = $region33
    $region32: #{tpu_custom_call.1} parent=1 // pred_region
      %51 = dma.done [#allocation4], 8192
    $region33: #{tpu_custom_call.1} parent=1 // pred_fallthru
      _
    // Predicated region
    $region34: #{tpu_custom_call.1} parent=1 // pred_check
      _
    $region35: #{tpu_custom_call.1} parent=1 // pred_check_branch
      %53 = sbr.rel (0) target = $region37
    $region36: #{tpu_custom_call.1} parent=1 // pred_region
      %54 = dma.done [#allocation7], 16384
    $region37: #{tpu_custom_call.1} parent=1 // pred_fallthru
      _
    %v56 = vld [vmem:[#allocation3] sm:$0xff]
    %v57 = vld [vmem:[#allocation3 + $0x8] sm:$0xff]
    %v58 = vld [vmem:[#allocation3 + $0x10] sm:$0xff]
    %v59 = vld [vmem:[#allocation3 + $0x18] sm:$0xff]
    %v60 = vld [vmem:[#allocation3 + $0x20] sm:$0xff]
    %v61 = vld [vmem:[#allocation3 + $0x28] sm:$0xff]
    %v62 = vld [vmem:[#allocation3 + $0x30] sm:$0xff]
    %v63 = vld [vmem:[#allocation3 + $0x38] sm:$0xff]
    %v64 = vld [vmem:[#allocation3 + $0x40] sm:$0xff]
    %v65 = vld [vmem:[#allocation3 + $0x48] sm:$0xff]
    %v66 = vld [vmem:[#allocation3 + $0x50] sm:$0xff]
    %v67 = vld [vmem:[#allocation3 + $0x58] sm:$0xff]
    %v68 = vld [vmem:[#allocation3 + $0x60] sm:$0xff]
    %v69 = vld [vmem:[#allocation3 + $0x68] sm:$0xff]
    %v70 = vld [vmem:[#allocation3 + $0x70] sm:$0xff]
    %v71 = vld [vmem:[#allocation3 + $0x78] sm:$0xff]
    %v72 = vld [vmem:[#allocation3 + $0x80] sm:$0xff]
    %v73 = vld [vmem:[#allocation3 + $0x88] sm:$0xff]
    %v74 = vld [vmem:[#allocation3 + $0x90] sm:$0xff]
    %v75 = vld [vmem:[#allocation3 + $0x98] sm:$0xff]
    %v76 = vld [vmem:[#allocation3 + $0xa0] sm:$0xff]
    %v77 = vld [vmem:[#allocation3 + $0xa8] sm:$0xff]
    %v78 = vld [vmem:[#allocation3 + $0xb0] sm:$0xff]
    %v79 = vld [vmem:[#allocation3 + $0xb8] sm:$0xff]
    %v80 = vld [vmem:[#allocation3 + $0xc0] sm:$0xff]
    %v81 = vld [vmem:[#allocation3 + $0xc8] sm:$0xff]
    %v82 = vld [vmem:[#allocation3 + $0xd0] sm:$0xff]
    %v83 = vld [vmem:[#allocation3 + $0xd8] sm:$0xff]
    %v84 = vld [vmem:[#allocation3 + $0xe0] sm:$0xff]
    %v85 = vld [vmem:[#allocation3 + $0xe8] sm:$0xff]
    %v86 = vld [vmem:[#allocation3 + $0xf0] sm:$0xff]
    %v87 = vld [vmem:[#allocation3 + $0xf8] sm:$0xff]
    %v88 = vld [vmem:[#allocation3 + $0x100] sm:$0xff]
    %v89 = vld [vmem:[#allocation3 + $0x108] sm:$0xff]
    %v90 = vld [vmem:[#allocation3 + $0x110] sm:$0xff]
    %v91 = vld [vmem:[#allocation3 + $0x118] sm:$0xff]
    %v92 = vld [vmem:[#allocation3 + $0x120] sm:$0xff]
    %v93 = vld [vmem:[#allocation3 + $0x128] sm:$0xff]
    %v94 = vld [vmem:[#allocation3 + $0x130] sm:$0xff]
    %v95 = vld [vmem:[#allocation3 + $0x138] sm:$0xff]
    %v96 = vld [vmem:[#allocation3 + $0x140] sm:$0xff]
    %v97 = vld [vmem:[#allocation3 + $0x148] sm:$0xff]
    %v98 = vld [vmem:[#allocation3 + $0x150] sm:$0xff]
    %v99 = vld [vmem:[#allocation3 + $0x158] sm:$0xff]
    %v100 = vld [vmem:[#allocation3 + $0x160] sm:$0xff]
    %v101 = vld [vmem:[#allocation3 + $0x168] sm:$0xff]
    %v102 = vld [vmem:[#allocation3 + $0x170] sm:$0xff]
    %v103 = vld [vmem:[#allocation3 + $0x178] sm:$0xff]
    %v104 = vld [vmem:[#allocation3 + $0x180] sm:$0xff]
    %v105 = vld [vmem:[#allocation3 + $0x188] sm:$0xff]
    %v106 = vld [vmem:[#allocation3 + $0x190] sm:$0xff]
    %v107 = vld [vmem:[#allocation3 + $0x198] sm:$0xff]
    %v108 = vld [vmem:[#allocation3 + $0x1a0] sm:$0xff]
    %v109 = vld [vmem:[#allocation3 + $0x1a8] sm:$0xff]
    %v110 = vld [vmem:[#allocation3 + $0x1b0] sm:$0xff]
    %v111 = vld [vmem:[#allocation3 + $0x1b8] sm:$0xff]
    %v112 = vld [vmem:[#allocation3 + $0x1c0] sm:$0xff]
    %v113 = vld [vmem:[#allocation3 + $0x1c8] sm:$0xff]
    %v114 = vld [vmem:[#allocation3 + $0x1d0] sm:$0xff]
    %v115 = vld [vmem:[#allocation3 + $0x1d8] sm:$0xff]
    %v116 = vld [vmem:[#allocation3 + $0x1e0] sm:$0xff]
    %v117 = vld [vmem:[#allocation3 + $0x1e8] sm:$0xff]
    %v118 = vld [vmem:[#allocation3 + $0x1f0] sm:$0xff]
    %v119 = vld [vmem:[#allocation3 + $0x1f8] sm:$0xff]
    %v120 = vld [vmem:[%s1] sm:$0xf]
    %v121 = vld [vmem:[%s1 + $0x4] sm:$0xf]
    %v122 = vld [vmem:[%s1 + $0x8] sm:$0xf]
    %v123 = vld [vmem:[%s1 + $0xc] sm:$0xf]
    %v124 = vld [vmem:[%s1 + $0x10] sm:$0xf]
    %v125 = vld [vmem:[%s1 + $0x14] sm:$0xf]
    %v126 = vld [vmem:[%s1 + $0x18] sm:$0xf]
    %v127 = vld [vmem:[%s1 + $0x1c] sm:$0xf]
    %v128 = vld [vmem:[%s1 + $0x20] sm:$0xf]
    %v129 = vld [vmem:[%s1 + $0x24] sm:$0xf]
    %v130 = vld [vmem:[%s1 + $0x28] sm:$0xf]
    %v131 = vld [vmem:[%s1 + $0x2c] sm:$0xf]
    %v132 = vld [vmem:[%s1 + $0x30] sm:$0xf]
    %v133 = vld [vmem:[%s1 + $0x34] sm:$0xf]
    %v134 = vld [vmem:[%s1 + $0x38] sm:$0xf]
    %v135 = vld [vmem:[%s1 + $0x3c] sm:$0xf]
    %v136 = vld [vmem:[%s1 + $0x40] sm:$0xf]
    %v137 = vld [vmem:[%s1 + $0x44] sm:$0xf]
    %v138 = vld [vmem:[%s1 + $0x48] sm:$0xf]
    %v139 = vld [vmem:[%s1 + $0x4c] sm:$0xf]
    %v140 = vld [vmem:[%s1 + $0x50] sm:$0xf]
    %v141 = vld [vmem:[%s1 + $0x54] sm:$0xf]
    %v142 = vld [vmem:[%s1 + $0x58] sm:$0xf]
    %v143 = vld [vmem:[%s1 + $0x5c] sm:$0xf]
    %v144 = vld [vmem:[%s1 + $0x60] sm:$0xf]
    %v145 = vld [vmem:[%s1 + $0x64] sm:$0xf]
    %v146 = vld [vmem:[%s1 + $0x68] sm:$0xf]
    %v147 = vld [vmem:[%s1 + $0x6c] sm:$0xf]
    %v148 = vld [vmem:[%s1 + $0x70] sm:$0xf]
    %v149 = vld [vmem:[%s1 + $0x74] sm:$0xf]
    %v150 = vld [vmem:[%s1 + $0x78] sm:$0xf]
    %v151 = vld [vmem:[%s1 + $0x7c] sm:$0xf]
    %v152 = vld [vmem:[%s1 + $0x80] sm:$0xf]
    %v153 = vld [vmem:[%s1 + $0x84] sm:$0xf]
    %v154 = vld [vmem:[%s1 + $0x88] sm:$0xf]
    %v155 = vld [vmem:[%s1 + $0x8c] sm:$0xf]
    %v156 = vld [vmem:[%s1 + $0x90] sm:$0xf]
    %v157 = vld [vmem:[%s1 + $0x94] sm:$0xf]
    %v158 = vld [vmem:[%s1 + $0x98] sm:$0xf]
    %v159 = vld [vmem:[%s1 + $0x9c] sm:$0xf]
    %v160 = vld [vmem:[%s1 + $0xa0] sm:$0xf]
    %v161 = vld [vmem:[%s1 + $0xa4] sm:$0xf]
    %v162 = vld [vmem:[%s1 + $0xa8] sm:$0xf]
    %v163 = vld [vmem:[%s1 + $0xac] sm:$0xf]
    %v164 = vld [vmem:[%s1 + $0xb0] sm:$0xf]
    %v165 = vld [vmem:[%s1 + $0xb4] sm:$0xf]
    %v166 = vld [vmem:[%s1 + $0xb8] sm:$0xf]
    %v167 = vld [vmem:[%s1 + $0xbc] sm:$0xf]
    %v168 = vld [vmem:[%s1 + $0xc0] sm:$0xf]
    %v169 = vld [vmem:[%s1 + $0xc4] sm:$0xf]
    %v170 = vld [vmem:[%s1 + $0xc8] sm:$0xf]
    %v171 = vld [vmem:[%s1 + $0xcc] sm:$0xf]
    %v172 = vld [vmem:[%s1 + $0xd0] sm:$0xf]
    %v173 = vld [vmem:[%s1 + $0xd4] sm:$0xf]
    %v174 = vld [vmem:[%s1 + $0xd8] sm:$0xf]
    %v175 = vld [vmem:[%s1 + $0xdc] sm:$0xf]
    %v176 = vld [vmem:[%s1 + $0xe0] sm:$0xf]
    %v177 = vld [vmem:[%s1 + $0xe4] sm:$0xf]
    %v178 = vld [vmem:[%s1 + $0xe8] sm:$0xf]
    %v179 = vld [vmem:[%s1 + $0xec] sm:$0xf]
    %v180 = vld [vmem:[%s1 + $0xf0] sm:$0xf]
    %v181 = vld [vmem:[%s1 + $0xf4] sm:$0xf]
    %v182 = vld [vmem:[%s1 + $0xf8] sm:$0xf]
    %v183 = vld [vmem:[%s1 + $0xfc] sm:$0xf]
    %v184 = vld [vmem:[%s1 + $0x100] sm:$0xf]
    %v185 = vld [vmem:[%s1 + $0x104] sm:$0xf]
    %v186 = vld [vmem:[%s1 + $0x108] sm:$0xf]
    %v187 = vld [vmem:[%s1 + $0x10c] sm:$0xf]
    %v188 = vld [vmem:[%s1 + $0x110] sm:$0xf]
    %v189 = vld [vmem:[%s1 + $0x114] sm:$0xf]
    %v190 = vld [vmem:[%s1 + $0x118] sm:$0xf]
    %v191 = vld [vmem:[%s1 + $0x11c] sm:$0xf]
    %v192 = vld [vmem:[%s1 + $0x120] sm:$0xf]
    %v193 = vld [vmem:[%s1 + $0x124] sm:$0xf]
    %v194 = vld [vmem:[%s1 + $0x128] sm:$0xf]
    %v195 = vld [vmem:[%s1 + $0x12c] sm:$0xf]
    %v196 = vld [vmem:[%s1 + $0x130] sm:$0xf]
    %v197 = vld [vmem:[%s1 + $0x134] sm:$0xf]
    %v198 = vld [vmem:[%s1 + $0x138] sm:$0xf]
    %v199 = vld [vmem:[%s1 + $0x13c] sm:$0xf]
    %v200 = vld [vmem:[%s1 + $0x140] sm:$0xf]
    %v201 = vld [vmem:[%s1 + $0x144] sm:$0xf]
    %v202 = vld [vmem:[%s1 + $0x148] sm:$0xf]
    %v203 = vld [vmem:[%s1 + $0x14c] sm:$0xf]
    %v204 = vld [vmem:[%s1 + $0x150] sm:$0xf]
    %v205 = vld [vmem:[%s1 + $0x154] sm:$0xf]
    %v206 = vld [vmem:[%s1 + $0x158] sm:$0xf]
    %v207 = vld [vmem:[%s1 + $0x15c] sm:$0xf]
    %v208 = vld [vmem:[%s1 + $0x160] sm:$0xf]
    %v209 = vld [vmem:[%s1 + $0x164] sm:$0xf]
    %v210 = vld [vmem:[%s1 + $0x168] sm:$0xf]
    %v211 = vld [vmem:[%s1 + $0x16c] sm:$0xf]
    %v212 = vld [vmem:[%s1 + $0x170] sm:$0xf]
    %v213 = vld [vmem:[%s1 + $0x174] sm:$0xf]
    %v214 = vld [vmem:[%s1 + $0x178] sm:$0xf]
    %v215 = vld [vmem:[%s1 + $0x17c] sm:$0xf]
    %v216 = vld [vmem:[%s1 + $0x180] sm:$0xf]
    %v217 = vld [vmem:[%s1 + $0x184] sm:$0xf]
    %v218 = vld [vmem:[%s1 + $0x188] sm:$0xf]
    %v219 = vld [vmem:[%s1 + $0x18c] sm:$0xf]
    %v220 = vld [vmem:[%s1 + $0x190] sm:$0xf]
    %v221 = vld [vmem:[%s1 + $0x194] sm:$0xf]
    %v222 = vld [vmem:[%s1 + $0x198] sm:$0xf]
    %v223 = vld [vmem:[%s1 + $0x19c] sm:$0xf]
    %v224 = vld [vmem:[%s1 + $0x1a0] sm:$0xf]
    %v225 = vld [vmem:[%s1 + $0x1a4] sm:$0xf]
    %v226 = vld [vmem:[%s1 + $0x1a8] sm:$0xf]
    %v227 = vld [vmem:[%s1 + $0x1ac] sm:$0xf]
    %v228 = vld [vmem:[%s1 + $0x1b0] sm:$0xf]
    %v229 = vld [vmem:[%s1 + $0x1b4] sm:$0xf]
    %v230 = vld [vmem:[%s1 + $0x1b8] sm:$0xf]
    %v231 = vld [vmem:[%s1 + $0x1bc] sm:$0xf]
    %v232 = vld [vmem:[%s1 + $0x1c0] sm:$0xf]
    %v233 = vld [vmem:[%s1 + $0x1c4] sm:$0xf]
    %v234 = vld [vmem:[%s1 + $0x1c8] sm:$0xf]
    %v235 = vld [vmem:[%s1 + $0x1cc] sm:$0xf]
    %v236 = vld [vmem:[%s1 + $0x1d0] sm:$0xf]
    %v237 = vld [vmem:[%s1 + $0x1d4] sm:$0xf]
    %v238 = vld [vmem:[%s1 + $0x1d8] sm:$0xf]
    %v239 = vld [vmem:[%s1 + $0x1dc] sm:$0xf]
    %v240 = vld [vmem:[%s1 + $0x1e0] sm:$0xf]
    %v241 = vld [vmem:[%s1 + $0x1e4] sm:$0xf]
    %v242 = vld [vmem:[%s1 + $0x1e8] sm:$0xf]
    %v243 = vld [vmem:[%s1 + $0x1ec] sm:$0xf]
    %v244 = vld [vmem:[%s1 + $0x1f0] sm:$0xf]
    %v245 = vld [vmem:[%s1 + $0x1f4] sm:$0xf]
    %v246 = vld [vmem:[%s1 + $0x1f8] sm:$0xf]
    %v247 = vld [vmem:[%s1 + $0x1fc] sm:$0xf]
    %v248 = vld [vmem:[%s2] sm:$0x1]
    %v250 = vlaneseq
    %v251 = vshrl.u32 %v250, 7
    %v252 = vsub.s32 0, %v251
    %v253 = vrot.slane %v248, %v252
    %v319 = vunpack.c.l.b16 %v56
    %v320 = vunpack.c.h.b16 %v56
    %v321 = vunpack.c.l.b16 %v57
    %v322 = vunpack.c.h.b16 %v57
    %v323 = vunpack.c.l.b16 %v58
    %v324 = vunpack.c.h.b16 %v58
    %v325 = vunpack.c.l.b16 %v59
    %v326 = vunpack.c.h.b16 %v59
    %v327 = vunpack.c.l.b16 %v60
    %v328 = vunpack.c.h.b16 %v60
    %v329 = vunpack.c.l.b16 %v61
    %v330 = vunpack.c.h.b16 %v61
    %v331 = vunpack.c.l.b16 %v62
    %v332 = vunpack.c.h.b16 %v62
    %v333 = vunpack.c.l.b16 %v63
    %v334 = vunpack.c.h.b16 %v63
    %v335 = vunpack.c.l.b16 %v64
    %v336 = vunpack.c.h.b16 %v64
    %v337 = vunpack.c.l.b16 %v65
    %v338 = vunpack.c.h.b16 %v65
    %v339 = vunpack.c.l.b16 %v66
    %v340 = vunpack.c.h.b16 %v66
    %v341 = vunpack.c.l.b16 %v67
    %v342 = vunpack.c.h.b16 %v67
    %v343 = vunpack.c.l.b16 %v68
    %v344 = vunpack.c.h.b16 %v68
    %v345 = vunpack.c.l.b16 %v69
    %v346 = vunpack.c.h.b16 %v69
    %v347 = vunpack.c.l.b16 %v70
    %v348 = vunpack.c.h.b16 %v70
    %v349 = vunpack.c.l.b16 %v71
    %v350 = vunpack.c.h.b16 %v71
    %v351 = vunpack.c.l.b16 %v72
    %v352 = vunpack.c.h.b16 %v72
    %v353 = vunpack.c.l.b16 %v73
    %v354 = vunpack.c.h.b16 %v73
    %v355 = vunpack.c.l.b16 %v74
    %v356 = vunpack.c.h.b16 %v74
    %v357 = vunpack.c.l.b16 %v75
    %v358 = vunpack.c.h.b16 %v75
    %v359 = vunpack.c.l.b16 %v76
    %v360 = vunpack.c.h.b16 %v76
    %v361 = vunpack.c.l.b16 %v77
    %v362 = vunpack.c.h.b16 %v77
    %v363 = vunpack.c.l.b16 %v78
    %v364 = vunpack.c.h.b16 %v78
    %v365 = vunpack.c.l.b16 %v79
    %v366 = vunpack.c.h.b16 %v79
    %v367 = vunpack.c.l.b16 %v80
    %v368 = vunpack.c.h.b16 %v80
    %v369 = vunpack.c.l.b16 %v81
    %v370 = vunpack.c.h.b16 %v81
    %v371 = vunpack.c.l.b16 %v82
    %v372 = vunpack.c.h.b16 %v82
    %v373 = vunpack.c.l.b16 %v83
    %v374 = vunpack.c.h.b16 %v83
    %v375 = vunpack.c.l.b16 %v84
    %v376 = vunpack.c.h.b16 %v84
    %v377 = vunpack.c.l.b16 %v85
    %v378 = vunpack.c.h.b16 %v85
    %v379 = vunpack.c.l.b16 %v86
    %v380 = vunpack.c.h.b16 %v86
    %v381 = vunpack.c.l.b16 %v87
    %v382 = vunpack.c.h.b16 %v87
    %v383 = vunpack.c.l.b16 %v88
    %v384 = vunpack.c.h.b16 %v88
    %v385 = vunpack.c.l.b16 %v89
    %v386 = vunpack.c.h.b16 %v89
    %v387 = vunpack.c.l.b16 %v90
    %v388 = vunpack.c.h.b16 %v90
    %v389 = vunpack.c.l.b16 %v91
    %v390 = vunpack.c.h.b16 %v91
    %v391 = vunpack.c.l.b16 %v92
    %v392 = vunpack.c.h.b16 %v92
    %v393 = vunpack.c.l.b16 %v93
    %v394 = vunpack.c.h.b16 %v93
    %v395 = vunpack.c.l.b16 %v94
    %v396 = vunpack.c.h.b16 %v94
    %v397 = vunpack.c.l.b16 %v95
    %v398 = vunpack.c.h.b16 %v95
    %v399 = vunpack.c.l.b16 %v96
    %v400 = vunpack.c.h.b16 %v96
    %v401 = vunpack.c.l.b16 %v97
    %v402 = vunpack.c.h.b16 %v97
    %v403 = vunpack.c.l.b16 %v98
    %v404 = vunpack.c.h.b16 %v98
    %v405 = vunpack.c.l.b16 %v99
    %v406 = vunpack.c.h.b16 %v99
    %v407 = vunpack.c.l.b16 %v100
    %v408 = vunpack.c.h.b16 %v100
    %v409 = vunpack.c.l.b16 %v101
    %v410 = vunpack.c.h.b16 %v101
    %v411 = vunpack.c.l.b16 %v102
    %v412 = vunpack.c.h.b16 %v102
    %v413 = vunpack.c.l.b16 %v103
    %v414 = vunpack.c.h.b16 %v103
    %v415 = vunpack.c.l.b16 %v104
    %v416 = vunpack.c.h.b16 %v104
    %v417 = vunpack.c.l.b16 %v105
    %v418 = vunpack.c.h.b16 %v105
    %v419 = vunpack.c.l.b16 %v106
    %v420 = vunpack.c.h.b16 %v106
    %v421 = vunpack.c.l.b16 %v107
    %v422 = vunpack.c.h.b16 %v107
    %v423 = vunpack.c.l.b16 %v108
    %v424 = vunpack.c.h.b16 %v108
    %v425 = vunpack.c.l.b16 %v109
    %v426 = vunpack.c.h.b16 %v109
    %v427 = vunpack.c.l.b16 %v110
    %v428 = vunpack.c.h.b16 %v110
    %v429 = vunpack.c.l.b16 %v111
    %v430 = vunpack.c.h.b16 %v111
    %v431 = vunpack.c.l.b16 %v112
    %v432 = vunpack.c.h.b16 %v112
    %v433 = vunpack.c.l.b16 %v113
    %v434 = vunpack.c.h.b16 %v113
    %v435 = vunpack.c.l.b16 %v114
    %v436 = vunpack.c.h.b16 %v114
    %v437 = vunpack.c.l.b16 %v115
    %v438 = vunpack.c.h.b16 %v115
    %v439 = vunpack.c.l.b16 %v116
    %v440 = vunpack.c.h.b16 %v116
    %v441 = vunpack.c.l.b16 %v117
    %v442 = vunpack.c.h.b16 %v117
    %v443 = vunpack.c.l.b16 %v118
    %v444 = vunpack.c.h.b16 %v118
    %v445 = vunpack.c.l.b16 %v119
    %v446 = vunpack.c.h.b16 %v119
    %v447 = vpack.c.b16 %v327, %v319
    %v448 = vpack.c.b16 %v328, %v320
    %v449 = vpack.c.b16 %v329, %v321
    %v450 = vpack.c.b16 %v330, %v322
    %v451 = vpack.c.b16 %v331, %v323
    %v452 = vpack.c.b16 %v332, %v324
    %v453 = vpack.c.b16 %v333, %v325
    %v454 = vpack.c.b16 %v334, %v326
    %v455 = vpack.c.b16 %v343, %v335
    %v456 = vpack.c.b16 %v344, %v336
    %v457 = vpack.c.b16 %v345, %v337
    %v458 = vpack.c.b16 %v346, %v338
    %v459 = vpack.c.b16 %v347, %v339
    %v460 = vpack.c.b16 %v348, %v340
    %v461 = vpack.c.b16 %v349, %v341
    %v462 = vpack.c.b16 %v350, %v342
    %v463 = vpack.c.b16 %v359, %v351
    %v464 = vpack.c.b16 %v360, %v352
    %v465 = vpack.c.b16 %v361, %v353
    %v466 = vpack.c.b16 %v362, %v354
    %v467 = vpack.c.b16 %v363, %v355
    %v468 = vpack.c.b16 %v364, %v356
    %v469 = vpack.c.b16 %v365, %v357
    %v470 = vpack.c.b16 %v366, %v358
    %v471 = vpack.c.b16 %v375, %v367
    %v472 = vpack.c.b16 %v376, %v368
    %v473 = vpack.c.b16 %v377, %v369
    %v474 = vpack.c.b16 %v378, %v370
    %v475 = vpack.c.b16 %v379, %v371
    %v476 = vpack.c.b16 %v380, %v372
    %v477 = vpack.c.b16 %v381, %v373
    %v478 = vpack.c.b16 %v382, %v374
    %v479 = vpack.c.b16 %v391, %v383
    %v480 = vpack.c.b16 %v392, %v384
    %v481 = vpack.c.b16 %v393, %v385
    %v482 = vpack.c.b16 %v394, %v386
    %v483 = vpack.c.b16 %v395, %v387
    %v484 = vpack.c.b16 %v396, %v388
    %v485 = vpack.c.b16 %v397, %v389
    %v486 = vpack.c.b16 %v398, %v390
    %v487 = vpack.c.b16 %v407, %v399
    %v488 = vpack.c.b16 %v408, %v400
    %v489 = vpack.c.b16 %v409, %v401
    %v490 = vpack.c.b16 %v410, %v402
    %v491 = vpack.c.b16 %v411, %v403
    %v492 = vpack.c.b16 %v412, %v404
    %v493 = vpack.c.b16 %v413, %v405
    %v494 = vpack.c.b16 %v414, %v406
    %v495 = vpack.c.b16 %v423, %v415
    %v496 = vpack.c.b16 %v424, %v416
    %v497 = vpack.c.b16 %v425, %v417
    %v498 = vpack.c.b16 %v426, %v418
    %v499 = vpack.c.b16 %v427, %v419
    %v500 = vpack.c.b16 %v428, %v420
    %v501 = vpack.c.b16 %v429, %v421
    %v502 = vpack.c.b16 %v430, %v422
    %v503 = vpack.c.b16 %v439, %v431
    %v504 = vpack.c.b16 %v440, %v432
    %v505 = vpack.c.b16 %v441, %v433
    %v506 = vpack.c.b16 %v442, %v434
    %v507 = vpack.c.b16 %v443, %v435
    %v508 = vpack.c.b16 %v444, %v436
    %v509 = vpack.c.b16 %v445, %v437
    %v510 = vpack.c.b16 %v446, %v438
    %v703 = vunpack.c.l.b16 %v120
    %v704 = vunpack.c.l.b16 %v121
    %v705 = vunpack.c.l.b16 %v122
    %v706 = vunpack.c.l.b16 %v123
    %v707 = vunpack.c.l.b16 %v124
    %v708 = vunpack.c.l.b16 %v125
    %v709 = vunpack.c.l.b16 %v126
    %v710 = vunpack.c.l.b16 %v127
    %v711 = vunpack.c.l.b16 %v128
    %v712 = vunpack.c.l.b16 %v129
    %v713 = vunpack.c.l.b16 %v130
    %v714 = vunpack.c.l.b16 %v131
    %v715 = vunpack.c.l.b16 %v132
    %v716 = vunpack.c.l.b16 %v133
    %v717 = vunpack.c.l.b16 %v134
    %v718 = vunpack.c.l.b16 %v135
    %v719 = vunpack.c.l.b16 %v136
    %v720 = vunpack.c.l.b16 %v137
    %v721 = vunpack.c.l.b16 %v138
    %v722 = vunpack.c.l.b16 %v139
    %v723 = vunpack.c.l.b16 %v140
    %v724 = vunpack.c.l.b16 %v141
    %v725 = vunpack.c.l.b16 %v142
    %v726 = vunpack.c.l.b16 %v143
    %v727 = vunpack.c.l.b16 %v144
    %v728 = vunpack.c.l.b16 %v145
    %v729 = vunpack.c.l.b16 %v146
    %v730 = vunpack.c.l.b16 %v147
    %v731 = vunpack.c.l.b16 %v148
    %v732 = vunpack.c.l.b16 %v149
    %v733 = vunpack.c.l.b16 %v150
    %v734 = vunpack.c.l.b16 %v151
    %v735 = vunpack.c.l.b16 %v152
    %v736 = vunpack.c.l.b16 %v153
    %v737 = vunpack.c.l.b16 %v154
    %v738 = vunpack.c.l.b16 %v155
    %v739 = vunpack.c.l.b16 %v156
    %v740 = vunpack.c.l.b16 %v157
    %v741 = vunpack.c.l.b16 %v158
    %v742 = vunpack.c.l.b16 %v159
    %v743 = vunpack.c.l.b16 %v160
    %v744 = vunpack.c.l.b16 %v161
    %v745 = vunpack.c.l.b16 %v162
    %v746 = vunpack.c.l.b16 %v163
    %v747 = vunpack.c.l.b16 %v164
    %v748 = vunpack.c.l.b16 %v165
    %v749 = vunpack.c.l.b16 %v166
    %v750 = vunpack.c.l.b16 %v167
    %v751 = vunpack.c.l.b16 %v168
    %v752 = vunpack.c.l.b16 %v169
    %v753 = vunpack.c.l.b16 %v170
    %v754 = vunpack.c.l.b16 %v171
    %v755 = vunpack.c.l.b16 %v172
    %v756 = vunpack.c.l.b16 %v173
    %v757 = vunpack.c.l.b16 %v174
    %v758 = vunpack.c.l.b16 %v175
    %v759 = vunpack.c.l.b16 %v176
    %v760 = vunpack.c.l.b16 %v177
    %v761 = vunpack.c.l.b16 %v178
    %v762 = vunpack.c.l.b16 %v179
    %v763 = vunpack.c.l.b16 %v180
    %v764 = vunpack.c.l.b16 %v181
    %v765 = vunpack.c.l.b16 %v182
    %v766 = vunpack.c.l.b16 %v183
    %v767 = vunpack.c.l.b16 %v184
    %v768 = vunpack.c.l.b16 %v185
    %v769 = vunpack.c.l.b16 %v186
    %v770 = vunpack.c.l.b16 %v187
    %v771 = vunpack.c.l.b16 %v188
    %v772 = vunpack.c.l.b16 %v189
    %v773 = vunpack.c.l.b16 %v190
    %v774 = vunpack.c.l.b16 %v191
    %v775 = vunpack.c.l.b16 %v192
    %v776 = vunpack.c.l.b16 %v193
    %v777 = vunpack.c.l.b16 %v194
    %v778 = vunpack.c.l.b16 %v195
    %v779 = vunpack.c.l.b16 %v196
    %v780 = vunpack.c.l.b16 %v197
    %v781 = vunpack.c.l.b16 %v198
    %v782 = vunpack.c.l.b16 %v199
    %v783 = vunpack.c.l.b16 %v200
    %v784 = vunpack.c.l.b16 %v201
    %v785 = vunpack.c.l.b16 %v202
    %v786 = vunpack.c.l.b16 %v203
    %v787 = vunpack.c.l.b16 %v204
    %v788 = vunpack.c.l.b16 %v205
    %v789 = vunpack.c.l.b16 %v206
    %v790 = vunpack.c.l.b16 %v207
    %v791 = vunpack.c.l.b16 %v208
    %v792 = vunpack.c.l.b16 %v209
    %v793 = vunpack.c.l.b16 %v210
    %v794 = vunpack.c.l.b16 %v211
    %v795 = vunpack.c.l.b16 %v212
    %v796 = vunpack.c.l.b16 %v213
    %v797 = vunpack.c.l.b16 %v214
    %v798 = vunpack.c.l.b16 %v215
    %v799 = vunpack.c.l.b16 %v216
    %v800 = vunpack.c.l.b16 %v217
    %v801 = vunpack.c.l.b16 %v218
    %v802 = vunpack.c.l.b16 %v219
    %v803 = vunpack.c.l.b16 %v220
    %v804 = vunpack.c.l.b16 %v221
    %v805 = vunpack.c.l.b16 %v222
    %v806 = vunpack.c.l.b16 %v223
    %v807 = vunpack.c.l.b16 %v224
    %v808 = vunpack.c.l.b16 %v225
    %v809 = vunpack.c.l.b16 %v226
    %v810 = vunpack.c.l.b16 %v227
    %v811 = vunpack.c.l.b16 %v228
    %v812 = vunpack.c.l.b16 %v229
    %v813 = vunpack.c.l.b16 %v230
    %v814 = vunpack.c.l.b16 %v231
    %v815 = vunpack.c.l.b16 %v232
    %v816 = vunpack.c.l.b16 %v233
    %v817 = vunpack.c.l.b16 %v234
    %v818 = vunpack.c.l.b16 %v235
    %v819 = vunpack.c.l.b16 %v236
    %v820 = vunpack.c.l.b16 %v237
    %v821 = vunpack.c.l.b16 %v238
    %v822 = vunpack.c.l.b16 %v239
    %v823 = vunpack.c.l.b16 %v240
    %v824 = vunpack.c.l.b16 %v241
    %v825 = vunpack.c.l.b16 %v242
    %v826 = vunpack.c.l.b16 %v243
    %v827 = vunpack.c.l.b16 %v244
    %v828 = vunpack.c.l.b16 %v245
    %v829 = vunpack.c.l.b16 %v246
    %v830 = vunpack.c.l.b16 %v247
    %v831 = vpack.c.b16 %v704, %v703
    %v832 = vpack.c.b16 %v706, %v705
    %v833 = vpack.c.b16 %v708, %v707
    %v834 = vpack.c.b16 %v710, %v709
    %v835 = vpack.c.b16 %v712, %v711
    %v836 = vpack.c.b16 %v714, %v713
    %v837 = vpack.c.b16 %v716, %v715
    %v838 = vpack.c.b16 %v718, %v717
    %v839 = vpack.c.b16 %v720, %v719
    %v840 = vpack.c.b16 %v722, %v721
    %v841 = vpack.c.b16 %v724, %v723
    %v842 = vpack.c.b16 %v726, %v725
    %v843 = vpack.c.b16 %v728, %v727
    %v844 = vpack.c.b16 %v730, %v729
    %v845 = vpack.c.b16 %v732, %v731
    %v846 = vpack.c.b16 %v734, %v733
    %v847 = vpack.c.b16 %v736, %v735
    %v848 = vpack.c.b16 %v738, %v737
    %v849 = vpack.c.b16 %v740, %v739
    %v850 = vpack.c.b16 %v742, %v741
    %v851 = vpack.c.b16 %v744, %v743
    %v852 = vpack.c.b16 %v746, %v745
    %v853 = vpack.c.b16 %v748, %v747
    %v854 = vpack.c.b16 %v750, %v749
    %v855 = vpack.c.b16 %v752, %v751
    %v856 = vpack.c.b16 %v754, %v753
    %v857 = vpack.c.b16 %v756, %v755
    %v858 = vpack.c.b16 %v758, %v757
    %v859 = vpack.c.b16 %v760, %v759
    %v860 = vpack.c.b16 %v762, %v761
    %v861 = vpack.c.b16 %v764, %v763
    %v862 = vpack.c.b16 %v766, %v765
    %v863 = vpack.c.b16 %v768, %v767
    %v864 = vpack.c.b16 %v770, %v769
    %v865 = vpack.c.b16 %v772, %v771
    %v866 = vpack.c.b16 %v774, %v773
    %v867 = vpack.c.b16 %v776, %v775
    %v868 = vpack.c.b16 %v778, %v777
    %v869 = vpack.c.b16 %v780, %v779
    %v870 = vpack.c.b16 %v782, %v781
    %v871 = vpack.c.b16 %v784, %v783
    %v872 = vpack.c.b16 %v786, %v785
    %v873 = vpack.c.b16 %v788, %v787
    %v874 = vpack.c.b16 %v790, %v789
    %v875 = vpack.c.b16 %v792, %v791
    %v876 = vpack.c.b16 %v794, %v793
    %v877 = vpack.c.b16 %v796, %v795
    %v878 = vpack.c.b16 %v798, %v797
    %v879 = vpack.c.b16 %v800, %v799
    %v880 = vpack.c.b16 %v802, %v801
    %v881 = vpack.c.b16 %v804, %v803
    %v882 = vpack.c.b16 %v806, %v805
    %v883 = vpack.c.b16 %v808, %v807
    %v884 = vpack.c.b16 %v810, %v809
    %v885 = vpack.c.b16 %v812, %v811
    %v886 = vpack.c.b16 %v814, %v813
    %v887 = vpack.c.b16 %v816, %v815
    %v888 = vpack.c.b16 %v818, %v817
    %v889 = vpack.c.b16 %v820, %v819
    %v890 = vpack.c.b16 %v822, %v821
    %v891 = vpack.c.b16 %v824, %v823
    %v892 = vpack.c.b16 %v826, %v825
    %v893 = vpack.c.b16 %v828, %v827
    %v894 = vpack.c.b16 %v830, %v829
    %959 = vmatprep.subr.bf16.mxu0 0
    %960 = vmatpush1.bf16.msra.mxu0 %v838
    %961 = vmatprep.subr.bf16.mxu0 0
    %962 = vmatpush1.bf16.msra.mxu0 %v837
    %963 = vmatprep.subr.bf16.mxu0 0
    %964 = vmatpush1.bf16.msra.mxu0 %v836
    %965 = vmatprep.subr.bf16.mxu0 0
    %966 = vmatpush1.bf16.msra.mxu0 %v835
    %967 = vmatprep.subr.bf16.mxu0 0
    %968 = vmatpush1.bf16.msra.mxu0 %v834
    %969 = vmatprep.subr.bf16.mxu0 0
    %970 = vmatpush1.bf16.msra.mxu0 %v833
    %971 = vmatprep.subr.bf16.mxu0 0
    %972 = vmatpush1.bf16.msra.mxu0 %v832
    %973 = vmatprep.subr.bf16.mxu0 0
    %974 = vmatpush1.bf16.msra.mxu0 %v831
    %975 = vmatprep.subr.bf16.mxu0 0
    %976 = vmatpush2.bf16.msra.mxu0 %v846
    %977 = vmatprep.subr.bf16.mxu0 0
    %978 = vmatpush2.bf16.msra.mxu0 %v845
    %979 = vmatprep.subr.bf16.mxu0 0
    %980 = vmatpush2.bf16.msra.mxu0 %v844
    %981 = vmatprep.subr.bf16.mxu0 0
    %982 = vmatpush2.bf16.msra.mxu0 %v843
    %983 = vmatprep.subr.bf16.mxu0 0
    %984 = vmatpush2.bf16.msra.mxu0 %v842
    %985 = vmatprep.subr.bf16.mxu0 0
    %986 = vmatpush2.bf16.msra.mxu0 %v841
    %987 = vmatprep.subr.bf16.mxu0 0
    %988 = vmatpush2.bf16.msra.mxu0 %v840
    %989 = vmatprep.subr.bf16.mxu0 0
    %990 = vmatpush2.bf16.msra.mxu0 %v839
    %991 = vmatprep.mubr.bf16.mxu0 %v448
    %992 = vmatmul.mubr.bf16.gmra.mxu0 %v447
    %v993 = vpop.f32.mrf.mxu0
    %v994 = vadd.f32 %v253, %v993
    %v995 = vpop.f32.mrf.mxu0
    %v996 = vpop.f32.mrf.mxu0
    %v997 = vadd.f32 %v253, %v996
    %v998 = vpop.f32.mrf.mxu0
    %999 = vmatprep.mubr.bf16.mxu0 %v456
    %1000 = vmatmul.mubr.bf16.gmra.mxu0 %v455
    %v1001 = vpop.f32.mrf.mxu0
    %v1002 = vadd.f32 %v253, %v1001
    %v1003 = vpop.f32.mrf.mxu0
    %v1004 = vpop.f32.mrf.mxu0
    %v1005 = vadd.f32 %v253, %v1004
    %v1006 = vpop.f32.mrf.mxu0
    %1007 = vmatprep.mubr.bf16.mxu0 %v464
    %1008 = vmatmul.mubr.bf16.gmra.mxu0 %v463
    %v1009 = vpop.f32.mrf.mxu0
    %v1010 = vadd.f32 %v253, %v1009
    %v1011 = vpop.f32.mrf.mxu0
    %v1012 = vpop.f32.mrf.mxu0
    %v1013 = vadd.f32 %v253, %v1012
    %v1014 = vpop.f32.mrf.mxu0
    %1015 = vmatprep.mubr.bf16.mxu0 %v472
    %1016 = vmatmul.mubr.bf16.gmra.mxu0 %v471
    %v1017 = vpop.f32.mrf.mxu0
    %v1018 = vadd.f32 %v253, %v1017
    %v1019 = vpop.f32.mrf.mxu0
    %v1020 = vpop.f32.mrf.mxu0
    %v1021 = vadd.f32 %v253, %v1020
    %v1022 = vpop.f32.mrf.mxu0
    %1023 = vmatprep.mubr.bf16.mxu0 %v480
    %1024 = vmatmul.mubr.bf16.gmra.mxu0 %v479
    %v1025 = vpop.f32.mrf.mxu0
    %v1026 = vadd.f32 %v253, %v1025
    %v1027 = vpop.f32.mrf.mxu0
    %v1028 = vpop.f32.mrf.mxu0
    %v1029 = vadd.f32 %v253, %v1028
    %v1030 = vpop.f32.mrf.mxu0
    %1031 = vmatprep.mubr.bf16.mxu0 %v488
    %1032 = vmatmul.mubr.bf16.gmra.mxu0 %v487
    %v1033 = vpop.f32.mrf.mxu0
    %v1034 = vadd.f32 %v253, %v1033
    %v1035 = vpop.f32.mrf.mxu0
    %v1036 = vpop.f32.mrf.mxu0
    %v1037 = vadd.f32 %v253, %v1036
    %v1038 = vpop.f32.mrf.mxu0
    %1039 = vmatprep.mubr.bf16.mxu0 %v496
    %1040 = vmatmul.mubr.bf16.gmra.mxu0 %v495
    %v1041 = vpop.f32.mrf.mxu0
    %v1042 = vadd.f32 %v253, %v1041
    %v1043 = vpop.f32.mrf.mxu0
    %v1044 = vpop.f32.mrf.mxu0
    %v1045 = vadd.f32 %v253, %v1044
    %v1046 = vpop.f32.mrf.mxu0
    %1047 = vmatprep.mubr.bf16.mxu0 %v504
    %1048 = vmatmul.mubr.bf16.gmra.mxu0 %v503
    %v1049 = vpop.f32.mrf.mxu0
    %v1050 = vadd.f32 %v253, %v1049
    %v1051 = vpop.f32.mrf.mxu0
    %v1052 = vpop.f32.mrf.mxu0
    %v1053 = vadd.f32 %v253, %v1052
    %v1054 = vpop.f32.mrf.mxu0
    %1055 = vdwg.mxu0
    %1056 = vmatprep.subr.bf16.mxu0 0
    %1057 = vmatpush1.bf16.msra.mxu0 %v854
    %1058 = vmatprep.subr.bf16.mxu0 0
    %1059 = vmatpush1.bf16.msra.mxu0 %v853
    %1060 = vmatprep.subr.bf16.mxu0 0
    %1061 = vmatpush1.bf16.msra.mxu0 %v852
    %1062 = vmatprep.subr.bf16.mxu0 0
    %1063 = vmatpush1.bf16.msra.mxu0 %v851
    %1064 = vmatprep.subr.bf16.mxu0 0
    %1065 = vmatpush1.bf16.msra.mxu0 %v850
    %1066 = vmatprep.subr.bf16.mxu0 0
    %1067 = vmatpush1.bf16.msra.mxu0 %v849
    %1068 = vmatprep.subr.bf16.mxu0 0
    %1069 = vmatpush1.bf16.msra.mxu0 %v848
    %1070 = vmatprep.subr.bf16.mxu0 0
    %1071 = vmatpush1.bf16.msra.mxu0 %v847
    %1072 = vmatprep.subr.bf16.mxu0 0
    %1073 = vmatpush2.bf16.msra.mxu0 %v862
    %1074 = vmatprep.subr.bf16.mxu0 0
    %1075 = vmatpush2.bf16.msra.mxu0 %v861
    %1076 = vmatprep.subr.bf16.mxu0 0
    %1077 = vmatpush2.bf16.msra.mxu0 %v860
    %1078 = vmatprep.subr.bf16.mxu0 0
    %1079 = vmatpush2.bf16.msra.mxu0 %v859
    %1080 = vmatprep.subr.bf16.mxu0 0
    %1081 = vmatpush2.bf16.msra.mxu0 %v858
    %1082 = vmatprep.subr.bf16.mxu0 0
    %1083 = vmatpush2.bf16.msra.mxu0 %v857
    %1084 = vmatprep.subr.bf16.mxu0 0
    %1085 = vmatpush2.bf16.msra.mxu0 %v856
    %1086 = vmatprep.subr.bf16.mxu0 0
    %1087 = vmatpush2.bf16.msra.mxu0 %v855
    %1088 = vmatprep.mubr.bf16.mxu0 %v450
    %1089 = vmatmul.mubr.bf16.gmra.mxu0 %v449
    %v1090 = vpop.f32.mrf.mxu0
    %v1091 = vadd.f32 %v994, %v1090
    %v1092 = vpop.f32.mrf.mxu0
    %v1093 = vpop.f32.mrf.mxu0
    %v1094 = vadd.f32 %v997, %v1093
    %v1095 = vpop.f32.mrf.mxu0
    %1096 = vmatprep.mubr.bf16.mxu0 %v458
    %1097 = vmatmul.mubr.bf16.gmra.mxu0 %v457
    %v1098 = vpop.f32.mrf.mxu0
    %v1099 = vadd.f32 %v1002, %v1098
    %v1100 = vpop.f32.mrf.mxu0
    %v1101 = vpop.f32.mrf.mxu0
    %v1102 = vadd.f32 %v1005, %v1101
    %v1103 = vpop.f32.mrf.mxu0
    %1104 = vmatprep.mubr.bf16.mxu0 %v466
    %1105 = vmatmul.mubr.bf16.gmra.mxu0 %v465
    %v1106 = vpop.f32.mrf.mxu0
    %v1107 = vadd.f32 %v1010, %v1106
    %v1108 = vpop.f32.mrf.mxu0
    %v1109 = vpop.f32.mrf.mxu0
    %v1110 = vadd.f32 %v1013, %v1109
    %v1111 = vpop.f32.mrf.mxu0
    %1112 = vmatprep.mubr.bf16.mxu0 %v474
    %1113 = vmatmul.mubr.bf16.gmra.mxu0 %v473
    %v1114 = vpop.f32.mrf.mxu0
    %v1115 = vadd.f32 %v1018, %v1114
    %v1116 = vpop.f32.mrf.mxu0
    %v1117 = vpop.f32.mrf.mxu0
    %v1118 = vadd.f32 %v1021, %v1117
    %v1119 = vpop.f32.mrf.mxu0
    %1120 = vmatprep.mubr.bf16.mxu0 %v482
    %1121 = vmatmul.mubr.bf16.gmra.mxu0 %v481
    %v1122 = vpop.f32.mrf.mxu0
    %v1123 = vadd.f32 %v1026, %v1122
    %v1124 = vpop.f32.mrf.mxu0
    %v1125 = vpop.f32.mrf.mxu0
    %v1126 = vadd.f32 %v1029, %v1125
    %v1127 = vpop.f32.mrf.mxu0
    %1128 = vmatprep.mubr.bf16.mxu0 %v490
    %1129 = vmatmul.mubr.bf16.gmra.mxu0 %v489
    %v1130 = vpop.f32.mrf.mxu0
    %v1131 = vadd.f32 %v1034, %v1130
    %v1132 = vpop.f32.mrf.mxu0
    %v1133 = vpop.f32.mrf.mxu0
    %v1134 = vadd.f32 %v1037, %v1133
    %v1135 = vpop.f32.mrf.mxu0
    %1136 = vmatprep.mubr.bf16.mxu0 %v498
    %1137 = vmatmul.mubr.bf16.gmra.mxu0 %v497
    %v1138 = vpop.f32.mrf.mxu0
    %v1139 = vadd.f32 %v1042, %v1138
    %v1140 = vpop.f32.mrf.mxu0
    %v1141 = vpop.f32.mrf.mxu0
    %v1142 = vadd.f32 %v1045, %v1141
    %v1143 = vpop.f32.mrf.mxu0
    %1144 = vmatprep.mubr.bf16.mxu0 %v506
    %1145 = vmatmul.mubr.bf16.gmra.mxu0 %v505
    %v1146 = vpop.f32.mrf.mxu0
    %v1147 = vadd.f32 %v1050, %v1146
    %v1148 = vpop.f32.mrf.mxu0
    %v1149 = vpop.f32.mrf.mxu0
    %v1150 = vadd.f32 %v1053, %v1149
    %v1151 = vpop.f32.mrf.mxu0
    %1152 = vdwg.mxu0
    %1153 = vmatprep.subr.bf16.mxu0 0
    %1154 = vmatpush1.bf16.msra.mxu0 %v870
    %1155 = vmatprep.subr.bf16.mxu0 0
    %1156 = vmatpush1.bf16.msra.mxu0 %v869
    %1157 = vmatprep.subr.bf16.mxu0 0
    %1158 = vmatpush1.bf16.msra.mxu0 %v868
    %1159 = vmatprep.subr.bf16.mxu0 0
    %1160 = vmatpush1.bf16.msra.mxu0 %v867
    %1161 = vmatprep.subr.bf16.mxu0 0
    %1162 = vmatpush1.bf16.msra.mxu0 %v866
    %1163 = vmatprep.subr.bf16.mxu0 0
    %1164 = vmatpush1.bf16.msra.mxu0 %v865
    %1165 = vmatprep.subr.bf16.mxu0 0
    %1166 = vmatpush1.bf16.msra.mxu0 %v864
    %1167 = vmatprep.subr.bf16.mxu0 0
    %1168 = vmatpush1.bf16.msra.mxu0 %v863
    %1169 = vmatprep.subr.bf16.mxu0 0
    %1170 = vmatpush2.bf16.msra.mxu0 %v878
    %1171 = vmatprep.subr.bf16.mxu0 0
    %1172 = vmatpush2.bf16.msra.mxu0 %v877
    %1173 = vmatprep.subr.bf16.mxu0 0
    %1174 = vmatpush2.bf16.msra.mxu0 %v876
    %1175 = vmatprep.subr.bf16.mxu0 0
    %1176 = vmatpush2.bf16.msra.mxu0 %v875
    %1177 = vmatprep.subr.bf16.mxu0 0
    %1178 = vmatpush2.bf16.msra.mxu0 %v874
    %1179 = vmatprep.subr.bf16.mxu0 0
    %1180 = vmatpush2.bf16.msra.mxu0 %v873
    %1181 = vmatprep.subr.bf16.mxu0 0
    %1182 = vmatpush2.bf16.msra.mxu0 %v872
    %1183 = vmatprep.subr.bf16.mxu0 0
    %1184 = vmatpush2.bf16.msra.mxu0 %v871
    %1185 = vmatprep.mubr.bf16.mxu0 %v452
    %1186 = vmatmul.mubr.bf16.gmra.mxu0 %v451
    %v1187 = vpop.f32.mrf.mxu0
    %v1188 = vadd.f32 %v1091, %v1187
    %v1189 = vpop.f32.mrf.mxu0
    %v1190 = vpop.f32.mrf.mxu0
    %v1191 = vadd.f32 %v1094, %v1190
    %v1192 = vpop.f32.mrf.mxu0
    %1193 = vmatprep.mubr.bf16.mxu0 %v460
    %1194 = vmatmul.mubr.bf16.gmra.mxu0 %v459
    %v1195 = vpop.f32.mrf.mxu0
    %v1196 = vadd.f32 %v1099, %v1195
    %v1197 = vpop.f32.mrf.mxu0
    %v1198 = vpop.f32.mrf.mxu0
    %v1199 = vadd.f32 %v1102, %v1198
    %v1200 = vpop.f32.mrf.mxu0
    %1201 = vmatprep.mubr.bf16.mxu0 %v468
    %1202 = vmatmul.mubr.bf16.gmra.mxu0 %v467
    %v1203 = vpop.f32.mrf.mxu0
    %v1204 = vadd.f32 %v1107, %v1203
    %v1205 = vpop.f32.mrf.mxu0
    %v1206 = vpop.f32.mrf.mxu0
    %v1207 = vadd.f32 %v1110, %v1206
    %v1208 = vpop.f32.mrf.mxu0
    %1209 = vmatprep.mubr.bf16.mxu0 %v476
    %1210 = vmatmul.mubr.bf16.gmra.mxu0 %v475
    %v1211 = vpop.f32.mrf.mxu0
    %v1212 = vadd.f32 %v1115, %v1211
    %v1213 = vpop.f32.mrf.mxu0
    %v1214 = vpop.f32.mrf.mxu0
    %v1215 = vadd.f32 %v1118, %v1214
    %v1216 = vpop.f32.mrf.mxu0
    %1217 = vmatprep.mubr.bf16.mxu0 %v484
    %1218 = vmatmul.mubr.bf16.gmra.mxu0 %v483
    %v1219 = vpop.f32.mrf.mxu0
    %v1220 = vadd.f32 %v1123, %v1219
    %v1221 = vpop.f32.mrf.mxu0
    %v1222 = vpop.f32.mrf.mxu0
    %v1223 = vadd.f32 %v1126, %v1222
    %v1224 = vpop.f32.mrf.mxu0
    %1225 = vmatprep.mubr.bf16.mxu0 %v492
    %1226 = vmatmul.mubr.bf16.gmra.mxu0 %v491
    %v1227 = vpop.f32.mrf.mxu0
    %v1228 = vadd.f32 %v1131, %v1227
    %v1229 = vpop.f32.mrf.mxu0
    %v1230 = vpop.f32.mrf.mxu0
    %v1231 = vadd.f32 %v1134, %v1230
    %v1232 = vpop.f32.mrf.mxu0
    %1233 = vmatprep.mubr.bf16.mxu0 %v500
    %1234 = vmatmul.mubr.bf16.gmra.mxu0 %v499
    %v1235 = vpop.f32.mrf.mxu0
    %v1236 = vadd.f32 %v1139, %v1235
    %v1237 = vpop.f32.mrf.mxu0
    %v1238 = vpop.f32.mrf.mxu0
    %v1239 = vadd.f32 %v1142, %v1238
    %v1240 = vpop.f32.mrf.mxu0
    %1241 = vmatprep.mubr.bf16.mxu0 %v508
    %1242 = vmatmul.mubr.bf16.gmra.mxu0 %v507
    %v1243 = vpop.f32.mrf.mxu0
    %v1244 = vadd.f32 %v1147, %v1243
    %v1245 = vpop.f32.mrf.mxu0
    %v1246 = vpop.f32.mrf.mxu0
    %v1247 = vadd.f32 %v1150, %v1246
    %v1248 = vpop.f32.mrf.mxu0
    %1249 = vdwg.mxu0
    %1250 = vmatprep.subr.bf16.mxu0 0
    %1251 = vmatpush1.bf16.msra.mxu0 %v886
    %1252 = vmatprep.subr.bf16.mxu0 0
    %1253 = vmatpush1.bf16.msra.mxu0 %v885
    %1254 = vmatprep.subr.bf16.mxu0 0
    %1255 = vmatpush1.bf16.msra.mxu0 %v884
    %1256 = vmatprep.subr.bf16.mxu0 0
    %1257 = vmatpush1.bf16.msra.mxu0 %v883
    %1258 = vmatprep.subr.bf16.mxu0 0
    %1259 = vmatpush1.bf16.msra.mxu0 %v882
    %1260 = vmatprep.subr.bf16.mxu0 0
    %1261 = vmatpush1.bf16.msra.mxu0 %v881
    %1262 = vmatprep.subr.bf16.mxu0 0
    %1263 = vmatpush1.bf16.msra.mxu0 %v880
    %1264 = vmatprep.subr.bf16.mxu0 0
    %1265 = vmatpush1.bf16.msra.mxu0 %v879
    %1266 = vmatprep.subr.bf16.mxu0 0
    %1267 = vmatpush2.bf16.msra.mxu0 %v894
    %1268 = vmatprep.subr.bf16.mxu0 0
    %1269 = vmatpush2.bf16.msra.mxu0 %v893
    %1270 = vmatprep.subr.bf16.mxu0 0
    %1271 = vmatpush2.bf16.msra.mxu0 %v892
    %1272 = vmatprep.subr.bf16.mxu0 0
    %1273 = vmatpush2.bf16.msra.mxu0 %v891
    %1274 = vmatprep.subr.bf16.mxu0 0
    %1275 = vmatpush2.bf16.msra.mxu0 %v890
    %1276 = vmatprep.subr.bf16.mxu0 0
    %1277 = vmatpush2.bf16.msra.mxu0 %v889
    %1278 = vmatprep.subr.bf16.mxu0 0
    %1279 = vmatpush2.bf16.msra.mxu0 %v888
    %1280 = vmatprep.subr.bf16.mxu0 0
    %1281 = vmatpush2.bf16.msra.mxu0 %v887
    %1282 = vmatprep.mubr.bf16.mxu0 %v454
    %1283 = vmatmul.mubr.bf16.gmra.mxu0 %v453
    %v1284 = vpop.f32.mrf.mxu0
    %v1285 = vadd.f32 %v1188, %v1284
    %v1286 = vpop.f32.mrf.mxu0
    %v1287 = vpop.f32.mrf.mxu0
    %v1288 = vadd.f32 %v1191, %v1287
    %v1289 = vpop.f32.mrf.mxu0
    %1290 = vmatprep.mubr.bf16.mxu0 %v462
    %1291 = vmatmul.mubr.bf16.gmra.mxu0 %v461
    %v1292 = vpop.f32.mrf.mxu0
    %v1293 = vadd.f32 %v1196, %v1292
    %v1294 = vpop.f32.mrf.mxu0
    %v1295 = vpop.f32.mrf.mxu0
    %v1296 = vadd.f32 %v1199, %v1295
    %v1297 = vpop.f32.mrf.mxu0
    %1298 = vmatprep.mubr.bf16.mxu0 %v470
    %1299 = vmatmul.mubr.bf16.gmra.mxu0 %v469
    %v1300 = vpop.f32.mrf.mxu0
    %v1301 = vadd.f32 %v1204, %v1300
    %v1302 = vpop.f32.mrf.mxu0
    %v1303 = vpop.f32.mrf.mxu0
    %v1304 = vadd.f32 %v1207, %v1303
    %v1305 = vpop.f32.mrf.mxu0
    %1306 = vmatprep.mubr.bf16.mxu0 %v478
    %1307 = vmatmul.mubr.bf16.gmra.mxu0 %v477
    %v1308 = vpop.f32.mrf.mxu0
    %v1309 = vadd.f32 %v1212, %v1308
    %v1310 = vpop.f32.mrf.mxu0
    %v1311 = vpop.f32.mrf.mxu0
    %v1312 = vadd.f32 %v1215, %v1311
    %v1313 = vpop.f32.mrf.mxu0
    %1314 = vmatprep.mubr.bf16.mxu0 %v486
    %1315 = vmatmul.mubr.bf16.gmra.mxu0 %v485
    %v1316 = vpop.f32.mrf.mxu0
    %v1317 = vadd.f32 %v1220, %v1316
    %v1318 = vpop.f32.mrf.mxu0
    %v1319 = vpop.f32.mrf.mxu0
    %v1320 = vadd.f32 %v1223, %v1319
    %v1321 = vpop.f32.mrf.mxu0
    %1322 = vmatprep.mubr.bf16.mxu0 %v494
    %1323 = vmatmul.mubr.bf16.gmra.mxu0 %v493
    %v1324 = vpop.f32.mrf.mxu0
    %v1325 = vadd.f32 %v1228, %v1324
    %v1326 = vpop.f32.mrf.mxu0
    %v1327 = vpop.f32.mrf.mxu0
    %v1328 = vadd.f32 %v1231, %v1327
    %v1329 = vpop.f32.mrf.mxu0
    %1330 = vmatprep.mubr.bf16.mxu0 %v502
    %1331 = vmatmul.mubr.bf16.gmra.mxu0 %v501
    %v1332 = vpop.f32.mrf.mxu0
    %v1333 = vadd.f32 %v1236, %v1332
    %v1334 = vpop.f32.mrf.mxu0
    %v1335 = vpop.f32.mrf.mxu0
    %v1336 = vadd.f32 %v1239, %v1335
    %v1337 = vpop.f32.mrf.mxu0
    %1338 = vmatprep.mubr.bf16.mxu0 %v510
    %1339 = vmatmul.mubr.bf16.gmra.mxu0 %v509
    %v1340 = vpop.f32.mrf.mxu0
    %v1341 = vadd.f32 %v1244, %v1340
    %v1342 = vpop.f32.mrf.mxu0
    %v1343 = vpop.f32.mrf.mxu0
    %v1344 = vadd.f32 %v1247, %v1343
    %v1345 = vpop.f32.mrf.mxu0
    %1346 = vdwg.mxu0
    %v1347 = vmax.f32 %v1285, 0.0
    %v1348 = vmax.f32 %v1288, 0.0
    %v1349 = vmax.f32 %v1293, 0.0
    %v1350 = vmax.f32 %v1296, 0.0
    %v1351 = vmax.f32 %v1301, 0.0
    %v1352 = vmax.f32 %v1304, 0.0
    %v1353 = vmax.f32 %v1309, 0.0
    %v1354 = vmax.f32 %v1312, 0.0
    %v1355 = vmax.f32 %v1317, 0.0
    %v1356 = vmax.f32 %v1320, 0.0
    %v1357 = vmax.f32 %v1325, 0.0
    %v1358 = vmax.f32 %v1328, 0.0
    %v1359 = vmax.f32 %v1333, 0.0
    %v1360 = vmax.f32 %v1336, 0.0
    %v1361 = vmax.f32 %v1341, 0.0
    %v1362 = vmax.f32 %v1344, 0.0
    %v1363 = vpack.c.bf16 %v1348, %v1347
    %v1364 = vpack.c.bf16 %v1350, %v1349
    %v1365 = vpack.c.bf16 %v1352, %v1351
    %v1366 = vpack.c.bf16 %v1354, %v1353
    %v1367 = vpack.c.bf16 %v1356, %v1355
    %v1368 = vpack.c.bf16 %v1358, %v1357
    %v1369 = vpack.c.bf16 %v1360, %v1359
    %v1370 = vpack.c.bf16 %v1362, %v1361
    %v1379 = vunpack.c.l.b16 %v1363
    %v1380 = vunpack.c.h.b16 %v1363
    %v1381 = vunpack.c.l.b16 %v1364
    %v1382 = vunpack.c.h.b16 %v1364
    %v1383 = vunpack.c.l.b16 %v1365
    %v1384 = vunpack.c.h.b16 %v1365
    %v1385 = vunpack.c.l.b16 %v1366
    %v1386 = vunpack.c.h.b16 %v1366
    %v1387 = vunpack.c.l.b16 %v1367
    %v1388 = vunpack.c.h.b16 %v1367
    %v1389 = vunpack.c.l.b16 %v1368
    %v1390 = vunpack.c.h.b16 %v1368
    %v1391 = vunpack.c.l.b16 %v1369
    %v1392 = vunpack.c.h.b16 %v1369
    %v1393 = vunpack.c.l.b16 %v1370
    %v1394 = vunpack.c.h.b16 %v1370
    %v1395 = vpack.c.b16 %v1379, %v1379
    %v1396 = vpack.c.b16 %v1380, %v1380
    %v1397 = vpack.c.b16 %v1381, %v1381
    %v1398 = vpack.c.b16 %v1382, %v1382
    %v1399 = vpack.c.b16 %v1383, %v1383
    %v1400 = vpack.c.b16 %v1384, %v1384
    %v1401 = vpack.c.b16 %v1385, %v1385
    %v1402 = vpack.c.b16 %v1386, %v1386
    %v1403 = vpack.c.b16 %v1387, %v1387
    %v1404 = vpack.c.b16 %v1388, %v1388
    %v1405 = vpack.c.b16 %v1389, %v1389
    %v1406 = vpack.c.b16 %v1390, %v1390
    %v1407 = vpack.c.b16 %v1391, %v1391
    %v1408 = vpack.c.b16 %v1392, %v1392
    %v1409 = vpack.c.b16 %v1393, %v1393
    %v1410 = vpack.c.b16 %v1394, %v1394
    %1427 = vst [vmem:[#allocation2] sm:$0xff] 0
    %1428 = vst [vmem:[#allocation2 + $0x8] sm:$0xff] 0
    %vm1429 = vcmask 519168
    %1430 = vst.msk [vmem:[#allocation2 + $0x10] sm:$0xf] %vm1429, 0
    %1431 = vst [vmem:[#allocation2 + $0x14] sm:$0xff] 0
    %1432 = vst [vmem:[#allocation2 + $0x1c] sm:$0xff] 0
    %1433 = vst.msk [vmem:[#allocation2 + $0x24] sm:$0xf] %vm1429, 0
    %1434 = vst [vmem:[#allocation2 + $0x28] sm:$0xff] 0
    %1435 = vst [vmem:[#allocation2 + $0x30] sm:$0xff] 0
    %1436 = vst.msk [vmem:[#allocation2 + $0x38] sm:$0xf] %vm1429, 0
    %1437 = vst [vmem:[#allocation2 + $0x3c] sm:$0xff] 0
    %1438 = vst [vmem:[#allocation2 + $0x44] sm:$0xff] 0
    %1439 = vst.msk [vmem:[#allocation2 + $0x4c] sm:$0xf] %vm1429, 0
    %1440 = vst [vmem:[#allocation2 + $0x50] sm:$0xff] 0
    %1441 = vst [vmem:[#allocation2 + $0x58] sm:$0xff] 0
    %1442 = vst.msk [vmem:[#allocation2 + $0x60] sm:$0xf] %vm1429, 0
    %1443 = vst [vmem:[#allocation2 + $0x64] sm:$0xff] 0
    %1444 = vst [vmem:[#allocation2 + $0x6c] sm:$0xff] 0
    %1445 = vst.msk [vmem:[#allocation2 + $0x74] sm:$0xf] %vm1429, 0
    %1446 = vst [vmem:[#allocation2 + $0x78] sm:$0xff] 0
    %1447 = vst [vmem:[#allocation2 + $0x80] sm:$0xff] 0
    %1448 = vst.msk [vmem:[#allocation2 + $0x88] sm:$0xf] %vm1429, 0
    %1449 = vst [vmem:[#allocation2 + $0x8c] sm:$0xff] 0
    %1450 = vst [vmem:[#allocation2 + $0x94] sm:$0xff] 0
    %1451 = vst.msk [vmem:[#allocation2 + $0x9c] sm:$0xf] %vm1429, 0
    %1452 = vst [vmem:[#allocation2 + $0xa0] sm:$0xff] 0
    %1453 = vst [vmem:[#allocation2 + $0xa8] sm:$0xff] 0
    %1454 = vst.msk [vmem:[#allocation2 + $0xb0] sm:$0xf] %vm1429, 0
    %1455 = vst [vmem:[#allocation2 + $0xb4] sm:$0xff] 0
    %1456 = vst [vmem:[#allocation2 + $0xbc] sm:$0xff] 0
    %1457 = vst.msk [vmem:[#allocation2 + $0xc4] sm:$0xf] %vm1429, 0
    %1458 = vst [vmem:[#allocation2 + $0xc8] sm:$0xff] 0
    %1459 = vst [vmem:[#allocation2 + $0xd0] sm:$0xff] 0
    %1460 = vst.msk [vmem:[#allocation2 + $0xd8] sm:$0xf] %vm1429, 0
    %1461 = vst [vmem:[#allocation2 + $0xdc] sm:$0xff] 0
    %1462 = vst [vmem:[#allocation2 + $0xe4] sm:$0xff] 0
    %1463 = vst.msk [vmem:[#allocation2 + $0xec] sm:$0xf] %vm1429, 0
    %1464 = vst [vmem:[#allocation2 + $0xf0] sm:$0xff] 0
    %1465 = vst [vmem:[#allocation2 + $0xf8] sm:$0xff] 0
    %1466 = vst.msk [vmem:[#allocation2 + $0x100] sm:$0xf] %vm1429, 0
    %1467 = vst [vmem:[#allocation2 + $0x104] sm:$0xff] 0
    %1468 = vst [vmem:[#allocation2 + $0x10c] sm:$0xff] 0
    %1469 = vst.msk [vmem:[#allocation2 + $0x114] sm:$0xf] %vm1429, 0
    %1470 = vst [vmem:[#allocation2 + $0x118] sm:$0xff] 0
    %1471 = vst [vmem:[#allocation2 + $0x120] sm:$0xff] 0
    %1472 = vst.msk [vmem:[#allocation2 + $0x128] sm:$0xf] %vm1429, 0
    %1473 = vst [vmem:[#allocation2 + $0x12c] sm:$0xff] 0
    %1474 = vst [vmem:[#allocation2 + $0x134] sm:$0xff] 0
    %1475 = vst.msk [vmem:[#allocation2 + $0x13c] sm:$0xf] %vm1429, 0
    %v1477 = vshrl.u32 %v1395, 16
    %v1479 = vrot.slane %v1477, 7
    %v1480 = vshll.u32 %v1395, 16
    %v1482 = vor.u32 %v1479, %v1480
    %v1484 = vshrl.u32 %v1396, 16
    %v1486 = vrot.slane %v1484, 7
    %v1487 = vshll.u32 %v1396, 16
    %v1489 = vor.u32 %v1486, %v1487
    %v1491 = vshrl.u32 %v1397, 16
    %v1493 = vrot.slane %v1491, 7
    %v1494 = vshll.u32 %v1397, 16
    %v1496 = vor.u32 %v1493, %v1494
    %v1498 = vshrl.u32 %v1398, 16
    %v1500 = vrot.slane %v1498, 7
    %v1501 = vshll.u32 %v1398, 16
    %v1503 = vor.u32 %v1500, %v1501
    %v1505 = vshrl.u32 %v1399, 16
    %v1507 = vrot.slane %v1505, 7
    %v1508 = vshll.u32 %v1399, 16
    %v1510 = vor.u32 %v1507, %v1508
    %v1512 = vshrl.u32 %v1400, 16
    %v1514 = vrot.slane %v1512, 7
    %v1515 = vshll.u32 %v1400, 16
    %v1517 = vor.u32 %v1514, %v1515
    %v1519 = vshrl.u32 %v1401, 16
    %v1521 = vrot.slane %v1519, 7
    %v1522 = vshll.u32 %v1401, 16
    %v1524 = vor.u32 %v1521, %v1522
    %v1526 = vshrl.u32 %v1403, 16
    %v1528 = vrot.slane %v1526, 7
    %v1529 = vshll.u32 %v1403, 16
    %v1531 = vor.u32 %v1528, %v1529
    %v1533 = vshrl.u32 %v1404, 16
    %v1535 = vrot.slane %v1533, 7
    %v1536 = vshll.u32 %v1404, 16
    %v1538 = vor.u32 %v1535, %v1536
    %v1540 = vshrl.u32 %v1405, 16
    %v1542 = vrot.slane %v1540, 7
    %v1543 = vshll.u32 %v1405, 16
    %v1545 = vor.u32 %v1542, %v1543
    %v1547 = vshrl.u32 %v1406, 16
    %v1549 = vrot.slane %v1547, 7
    %v1550 = vshll.u32 %v1406, 16
    %v1552 = vor.u32 %v1549, %v1550
    %v1554 = vshrl.u32 %v1407, 16
    %v1556 = vrot.slane %v1554, 7
    %v1557 = vshll.u32 %v1407, 16
    %v1559 = vor.u32 %v1556, %v1557
    %v1561 = vshrl.u32 %v1408, 16
    %v1563 = vrot.slane %v1561, 7
    %v1564 = vshll.u32 %v1408, 16
    %v1566 = vor.u32 %v1563, %v1564
    %v1568 = vshrl.u32 %v1409, 16
    %v1570 = vrot.slane %v1568, 7
    %v1571 = vshll.u32 %v1409, 16
    %v1573 = vor.u32 %v1570, %v1571
    %s1588 = scalar_lea.vmem [#allocation2], 20
    %vm1589 = vcmask 519168
    %vm1590 = vsmask.f32 7938
    %vm1591 = vmand %vm1589, %vm1590
    %v1592 = vld [vmem:[%s1588] sm:$0xf]
    %v1593 = vsel %vm1591, %v1482, %v1592
    %1594 = vst [vmem:[%s1588] sm:$0xf] %v1593
    %v1595 = vld [vmem:[%s1588 + $0x14] sm:$0xf]
    %v1596 = vsel %vm1591, %v1489, %v1595
    %1597 = vst [vmem:[%s1588 + $0x14] sm:$0xf] %v1596
    %v1598 = vld [vmem:[%s1588 + $0x28] sm:$0xf]
    %v1599 = vsel %vm1591, %v1496, %v1598
    %1600 = vst [vmem:[%s1588 + $0x28] sm:$0xf] %v1599
    %v1601 = vld [vmem:[%s1588 + $0x3c] sm:$0xf]
    %v1602 = vsel %vm1591, %v1503, %v1601
    %1603 = vst [vmem:[%s1588 + $0x3c] sm:$0xf] %v1602
    %v1604 = vld [vmem:[%s1588 + $0x50] sm:$0xf]
    %v1605 = vsel %vm1591, %v1510, %v1604
    %1606 = vst [vmem:[%s1588 + $0x50] sm:$0xf] %v1605
    %v1607 = vld [vmem:[%s1588 + $0x64] sm:$0xf]
    %v1608 = vsel %vm1591, %v1517, %v1607
    %1609 = vst [vmem:[%s1588 + $0x64] sm:$0xf] %v1608
    %v1610 = vld [vmem:[%s1588 + $0x78] sm:$0xf]
    %v1611 = vsel %vm1591, %v1524, %v1610
    %1612 = vst [vmem:[%s1588 + $0x78] sm:$0xf] %v1611
    %v1613 = vld [vmem:[%s1588 + $0xa0] sm:$0xf]
    %v1614 = vsel %vm1591, %v1531, %v1613
    %1615 = vst [vmem:[%s1588 + $0xa0] sm:$0xf] %v1614
    %v1616 = vld [vmem:[%s1588 + $0xb4] sm:$0xf]
    %v1617 = vsel %vm1591, %v1538, %v1616
    %1618 = vst [vmem:[%s1588 + $0xb4] sm:$0xf] %v1617
    %v1619 = vld [vmem:[%s1588 + $0xc8] sm:$0xf]
    %v1620 = vsel %vm1591, %v1545, %v1619
    %1621 = vst [vmem:[%s1588 + $0xc8] sm:$0xf] %v1620
    %v1622 = vld [vmem:[%s1588 + $0xdc] sm:$0xf]
    %v1623 = vsel %vm1591, %v1552, %v1622
    %1624 = vst [vmem:[%s1588 + $0xdc] sm:$0xf] %v1623
    %v1625 = vld [vmem:[%s1588 + $0xf0] sm:$0xf]
    %v1626 = vsel %vm1591, %v1559, %v1625
    %1627 = vst [vmem:[%s1588 + $0xf0] sm:$0xf] %v1626
    %v1628 = vld [vmem:[%s1588 + $0x104] sm:$0xf]
    %v1629 = vsel %vm1591, %v1566, %v1628
    %1630 = vst [vmem:[%s1588 + $0x104] sm:$0xf] %v1629
    %v1631 = vld [vmem:[%s1588 + $0x118] sm:$0xf]
    %v1632 = vsel %vm1591, %v1573, %v1631
    %1633 = vst [vmem:[%s1588 + $0x118] sm:$0xf] %v1632
    %1634 = vrot.lane.b32.xlu0 %v1395, 64
    %v1635 = vpop.permute.xlu0 %1634
    %1636 = vrot.lane.b32.xlu0 %v1396, 64
    %v1637 = vpop.permute.xlu0 %1636
    %1638 = vrot.lane.b32.xlu0 %v1397, 64
    %v1639 = vpop.permute.xlu0 %1638
    %1640 = vrot.lane.b32.xlu0 %v1398, 64
    %v1641 = vpop.permute.xlu0 %1640
    %1642 = vrot.lane.b32.xlu0 %v1399, 64
    %v1643 = vpop.permute.xlu0 %1642
    %1644 = vrot.lane.b32.xlu0 %v1400, 64
    %v1645 = vpop.permute.xlu0 %1644
    %1646 = vrot.lane.b32.xlu0 %v1401, 64
    %v1647 = vpop.permute.xlu0 %1646
    %1648 = vrot.lane.b32.xlu0 %v1403, 64
    %v1649 = vpop.permute.xlu0 %1648
    %1650 = vrot.lane.b32.xlu0 %v1404, 64
    %v1651 = vpop.permute.xlu0 %1650
    %1652 = vrot.lane.b32.xlu0 %v1405, 64
    %v1653 = vpop.permute.xlu0 %1652
    %1654 = vrot.lane.b32.xlu0 %v1406, 64
    %v1655 = vpop.permute.xlu0 %1654
    %1656 = vrot.lane.b32.xlu0 %v1407, 64
    %v1657 = vpop.permute.xlu0 %1656
    %1658 = vrot.lane.b32.xlu0 %v1408, 64
    %v1659 = vpop.permute.xlu0 %1658
    %1660 = vrot.lane.b32.xlu0 %v1409, 64
    %v1661 = vpop.permute.xlu0 %1660
    %vm1676 = vcmask 1043968
    %1677 = vst.msk [vmem:[%s1588] sm:$0xf] %vm1676, %v1635
    %1678 = vst.msk [vmem:[%s1588 + $0x14] sm:$0xf] %vm1676, %v1637
    %1679 = vst.msk [vmem:[%s1588 + $0x28] sm:$0xf] %vm1676, %v1639
    %1680 = vst.msk [vmem:[%s1588 + $0x3c] sm:$0xf] %vm1676, %v1641
    %1681 = vst.msk [vmem:[%s1588 + $0x50] sm:$0xf] %vm1676, %v1643
    %1682 = vst.msk [vmem:[%s1588 + $0x64] sm:$0xf] %vm1676, %v1645
    %1683 = vst.msk [vmem:[%s1588 + $0x78] sm:$0xf] %vm1676, %v1647
    %1684 = vst.msk [vmem:[%s1588 + $0xa0] sm:$0xf] %vm1676, %v1649
    %1685 = vst.msk [vmem:[%s1588 + $0xb4] sm:$0xf] %vm1676, %v1651
    %1686 = vst.msk [vmem:[%s1588 + $0xc8] sm:$0xf] %vm1676, %v1653
    %1687 = vst.msk [vmem:[%s1588 + $0xdc] sm:$0xf] %vm1676, %v1655
    %1688 = vst.msk [vmem:[%s1588 + $0xf0] sm:$0xf] %vm1676, %v1657
    %1689 = vst.msk [vmem:[%s1588 + $0x104] sm:$0xf] %vm1676, %v1659
    %1690 = vst.msk [vmem:[%s1588 + $0x118] sm:$0xf] %vm1676, %v1661
    %v1691 = vrot.slane %v1477, 4
    %v1692 = vrot.slane %v1480, 5
    %v1693 = vor.u32 %v1691, %v1692
    %v1694 = vrot.slane %v1693, 4
    %v1695 = vrot.slane %v1484, 4
    %v1696 = vrot.slane %v1487, 5
    %v1697 = vor.u32 %v1695, %v1696
    %v1698 = vrot.slane %v1697, 4
    %v1699 = vrot.slane %v1491, 4
    %v1700 = vrot.slane %v1494, 5
    %v1701 = vor.u32 %v1699, %v1700
    %v1702 = vrot.slane %v1701, 4
    %v1703 = vrot.slane %v1498, 4
    %v1704 = vrot.slane %v1501, 5
    %v1705 = vor.u32 %v1703, %v1704
    %v1706 = vrot.slane %v1705, 4
    %v1707 = vrot.slane %v1505, 4
    %v1708 = vrot.slane %v1508, 5
    %v1709 = vor.u32 %v1707, %v1708
    %v1710 = vrot.slane %v1709, 4
    %v1711 = vrot.slane %v1512, 4
    %v1712 = vrot.slane %v1515, 5
    %v1713 = vor.u32 %v1711, %v1712
    %v1714 = vrot.slane %v1713, 4
    %v1715 = vrot.slane %v1519, 4
    %v1716 = vrot.slane %v1522, 5
    %v1717 = vor.u32 %v1715, %v1716
    %v1718 = vrot.slane %v1717, 4
    %v1719 = vrot.slane %v1526, 4
    %v1720 = vrot.slane %v1529, 5
    %v1721 = vor.u32 %v1719, %v1720
    %v1722 = vrot.slane %v1721, 4
    %v1723 = vrot.slane %v1533, 4
    %v1724 = vrot.slane %v1536, 5
    %v1725 = vor.u32 %v1723, %v1724
    %v1726 = vrot.slane %v1725, 4
    %v1727 = vrot.slane %v1540, 4
    %v1728 = vrot.slane %v1543, 5
    %v1729 = vor.u32 %v1727, %v1728
    %v1730 = vrot.slane %v1729, 4
    %v1731 = vrot.slane %v1547, 4
    %v1732 = vrot.slane %v1550, 5
    %v1733 = vor.u32 %v1731, %v1732
    %v1734 = vrot.slane %v1733, 4
    %v1735 = vrot.slane %v1554, 4
    %v1736 = vrot.slane %v1557, 5
    %v1737 = vor.u32 %v1735, %v1736
    %v1738 = vrot.slane %v1737, 4
    %v1739 = vrot.slane %v1561, 4
    %v1740 = vrot.slane %v1564, 5
    %v1741 = vor.u32 %v1739, %v1740
    %v1742 = vrot.slane %v1741, 4
    %v1743 = vrot.slane %v1568, 4
    %v1744 = vrot.slane %v1571, 5
    %v1745 = vor.u32 %v1743, %v1744
    %v1746 = vrot.slane %v1745, 4
    %vm1761 = vsmask.f32 3328
    %vm1762 = vmand %vm1589, %vm1761
    %v1763 = vld [vmem:[%s1588 + $0x4] sm:$0xf]
    %v1764 = vsel %vm1762, %v1694, %v1763
    %1765 = vst [vmem:[%s1588 + $0x4] sm:$0xf] %v1764
    %v1766 = vld [vmem:[%s1588 + $0x18] sm:$0xf]
    %v1767 = vsel %vm1762, %v1698, %v1766
    %1768 = vst [vmem:[%s1588 + $0x18] sm:$0xf] %v1767
    %v1769 = vld [vmem:[%s1588 + $0x2c] sm:$0xf]
    %v1770 = vsel %vm1762, %v1702, %v1769
    %1771 = vst [vmem:[%s1588 + $0x2c] sm:$0xf] %v1770
    %v1772 = vld [vmem:[%s1588 + $0x40] sm:$0xf]
    %v1773 = vsel %vm1762, %v1706, %v1772
    %1774 = vst [vmem:[%s1588 + $0x40] sm:$0xf] %v1773
    %v1775 = vld [vmem:[%s1588 + $0x54] sm:$0xf]
    %v1776 = vsel %vm1762, %v1710, %v1775
    %1777 = vst [vmem:[%s1588 + $0x54] sm:$0xf] %v1776
    %v1778 = vld [vmem:[%s1588 + $0x68] sm:$0xf]
    %v1779 = vsel %vm1762, %v1714, %v1778
    %1780 = vst [vmem:[%s1588 + $0x68] sm:$0xf] %v1779
    %v1781 = vld [vmem:[%s1588 + $0x7c] sm:$0xf]
    %v1782 = vsel %vm1762, %v1718, %v1781
    %1783 = vst [vmem:[%s1588 + $0x7c] sm:$0xf] %v1782
    %v1784 = vld [vmem:[%s1588 + $0xa4] sm:$0xf]
    %v1785 = vsel %vm1762, %v1722, %v1784
    %1786 = vst [vmem:[%s1588 + $0xa4] sm:$0xf] %v1785
    %v1787 = vld [vmem:[%s1588 + $0xb8] sm:$0xf]
    %v1788 = vsel %vm1762, %v1726, %v1787
    %1789 = vst [vmem:[%s1588 + $0xb8] sm:$0xf] %v1788
    %v1790 = vld [vmem:[%s1588 + $0xcc] sm:$0xf]
    %v1791 = vsel %vm1762, %v1730, %v1790
    %1792 = vst [vmem:[%s1588 + $0xcc] sm:$0xf] %v1791
    %v1793 = vld [vmem:[%s1588 + $0xe0] sm:$0xf]
    %v1794 = vsel %vm1762, %v1734, %v1793
    %1795 = vst [vmem:[%s1588 + $0xe0] sm:$0xf] %v1794
    %v1796 = vld [vmem:[%s1588 + $0xf4] sm:$0xf]
    %v1797 = vsel %vm1762, %v1738, %v1796
    %1798 = vst [vmem:[%s1588 + $0xf4] sm:$0xf] %v1797
    %v1799 = vld [vmem:[%s1588 + $0x108] sm:$0xf]
    %v1800 = vsel %vm1762, %v1742, %v1799
    %1801 = vst [vmem:[%s1588 + $0x108] sm:$0xf] %v1800
    %v1802 = vld [vmem:[%s1588 + $0x11c] sm:$0xf]
    %v1803 = vsel %vm1762, %v1746, %v1802
    %1804 = vst [vmem:[%s1588 + $0x11c] sm:$0xf] %v1803
    %v1806 = vshrl.u32 %v1402, 16
    %v1808 = vrot.slane %v1806, 7
    %v1809 = vshll.u32 %v1402, 16
    %v1811 = vor.u32 %v1808, %v1809
    %v1813 = vshrl.u32 %v1410, 16
    %v1815 = vrot.slane %v1813, 7
    %v1816 = vshll.u32 %v1410, 16
    %v1818 = vor.u32 %v1815, %v1816
    %1819 = vrot.lane.b32.xlu0 %v1482, 64
    %v1820 = vpop.permute.xlu0 %1819
    %1821 = vrot.lane.b32.xlu0 %v1489, 64
    %v1822 = vpop.permute.xlu0 %1821
    %1823 = vrot.lane.b32.xlu0 %v1496, 64
    %v1824 = vpop.permute.xlu0 %1823
    %1825 = vrot.lane.b32.xlu0 %v1503, 64
    %v1826 = vpop.permute.xlu0 %1825
    %1827 = vrot.lane.b32.xlu0 %v1510, 64
    %v1828 = vpop.permute.xlu0 %1827
    %1829 = vrot.lane.b32.xlu0 %v1517, 64
    %v1830 = vpop.permute.xlu0 %1829
    %1831 = vrot.lane.b32.xlu0 %v1524, 64
    %v1832 = vpop.permute.xlu0 %1831
    %1833 = vrot.lane.b32.xlu0 %v1811, 64
    %v1834 = vpop.permute.xlu0 %1833
    %1835 = vrot.lane.b32.xlu0 %v1531, 64
    %v1836 = vpop.permute.xlu0 %1835
    %1837 = vrot.lane.b32.xlu0 %v1538, 64
    %v1838 = vpop.permute.xlu0 %1837
    %1839 = vrot.lane.b32.xlu0 %v1545, 64
    %v1840 = vpop.permute.xlu0 %1839
    %1841 = vrot.lane.b32.xlu0 %v1552, 64
    %v1842 = vpop.permute.xlu0 %1841
    %1843 = vrot.lane.b32.xlu0 %v1559, 64
    %v1844 = vpop.permute.xlu0 %1843
    %1845 = vrot.lane.b32.xlu0 %v1566, 64
    %v1846 = vpop.permute.xlu0 %1845
    %1847 = vrot.lane.b32.xlu0 %v1573, 64
    %v1848 = vpop.permute.xlu0 %1847
    %1849 = vrot.lane.b32.xlu0 %v1818, 64
    %v1850 = vpop.permute.xlu0 %1849
    %vm1867 = vcmask 1043968
    %vm1868 = vmand %vm1867, %vm1590
    %v1869 = vld [vmem:[#allocation2 + $0x4] sm:$0xf]
    %v1870 = vsel %vm1868, %v1820, %v1869
    %1871 = vst [vmem:[#allocation2 + $0x4] sm:$0xf] %v1870
    %v1872 = vld [vmem:[#allocation2 + $0x18] sm:$0xf]
    %v1873 = vsel %vm1868, %v1822, %v1872
    %1874 = vst [vmem:[#allocation2 + $0x18] sm:$0xf] %v1873
    %v1875 = vld [vmem:[#allocation2 + $0x2c] sm:$0xf]
    %v1876 = vsel %vm1868, %v1824, %v1875
    %1877 = vst [vmem:[#allocation2 + $0x2c] sm:$0xf] %v1876
    %v1878 = vld [vmem:[#allocation2 + $0x40] sm:$0xf]
    %v1879 = vsel %vm1868, %v1826, %v1878
    %1880 = vst [vmem:[#allocation2 + $0x40] sm:$0xf] %v1879
    %v1881 = vld [vmem:[#allocation2 + $0x54] sm:$0xf]
    %v1882 = vsel %vm1868, %v1828, %v1881
    %1883 = vst [vmem:[#allocation2 + $0x54] sm:$0xf] %v1882
    %v1884 = vld [vmem:[#allocation2 + $0x68] sm:$0xf]
    %v1885 = vsel %vm1868, %v1830, %v1884
    %1886 = vst [vmem:[#allocation2 + $0x68] sm:$0xf] %v1885
    %v1887 = vld [vmem:[#allocation2 + $0x7c] sm:$0xf]
    %v1888 = vsel %vm1868, %v1832, %v1887
    %1889 = vst [vmem:[#allocation2 + $0x7c] sm:$0xf] %v1888
    %v1890 = vld [vmem:[#allocation2 + $0x90] sm:$0xf]
    %v1891 = vsel %vm1868, %v1834, %v1890
    %1892 = vst [vmem:[#allocation2 + $0x90] sm:$0xf] %v1891
    %v1893 = vld [vmem:[#allocation2 + $0xa4] sm:$0xf]
    %v1894 = vsel %vm1868, %v1836, %v1893
    %1895 = vst [vmem:[#allocation2 + $0xa4] sm:$0xf] %v1894
    %v1896 = vld [vmem:[#allocation2 + $0xb8] sm:$0xf]
    %v1897 = vsel %vm1868, %v1838, %v1896
    %1898 = vst [vmem:[#allocation2 + $0xb8] sm:$0xf] %v1897
    %v1899 = vld [vmem:[#allocation2 + $0xcc] sm:$0xf]
    %v1900 = vsel %vm1868, %v1840, %v1899
    %1901 = vst [vmem:[#allocation2 + $0xcc] sm:$0xf] %v1900
    %v1902 = vld [vmem:[#allocation2 + $0xe0] sm:$0xf]
    %v1903 = vsel %vm1868, %v1842, %v1902
    %1904 = vst [vmem:[#allocation2 + $0xe0] sm:$0xf] %v1903
    %v1905 = vld [vmem:[#allocation2 + $0xf4] sm:$0xf]
    %v1906 = vsel %vm1868, %v1844, %v1905
    %1907 = vst [vmem:[#allocation2 + $0xf4] sm:$0xf] %v1906
    %v1908 = vld [vmem:[#allocation2 + $0x108] sm:$0xf]
    %v1909 = vsel %vm1868, %v1846, %v1908
    %1910 = vst [vmem:[#allocation2 + $0x108] sm:$0xf] %v1909
    %v1911 = vld [vmem:[#allocation2 + $0x11c] sm:$0xf]
    %v1912 = vsel %vm1868, %v1848, %v1911
    %1913 = vst [vmem:[#allocation2 + $0x11c] sm:$0xf] %v1912
    %v1914 = vld [vmem:[#allocation2 + $0x130] sm:$0xf]
    %v1915 = vsel %vm1868, %v1850, %v1914
    %1916 = vst [vmem:[#allocation2 + $0x130] sm:$0xf] %v1915
    %1917 = vst.msk [vmem:[#allocation2 + $0x8] sm:$0xf] %vm1429, %v1395
    %1918 = vst.msk [vmem:[#allocation2 + $0x1c] sm:$0xf] %vm1429, %v1396
    %1919 = vst.msk [vmem:[#allocation2 + $0x30] sm:$0xf] %vm1429, %v1397
    %1920 = vst.msk [vmem:[#allocation2 + $0x44] sm:$0xf] %vm1429, %v1398
    %1921 = vst.msk [vmem:[#allocation2 + $0x58] sm:$0xf] %vm1429, %v1399
    %1922 = vst.msk [vmem:[#allocation2 + $0x6c] sm:$0xf] %vm1429, %v1400
    %1923 = vst.msk [vmem:[#allocation2 + $0x80] sm:$0xf] %vm1429, %v1401
    %1924 = vst.msk [vmem:[#allocation2 + $0x94] sm:$0xf] %vm1429, %v1402
    %1925 = vst.msk [vmem:[#allocation2 + $0xa8] sm:$0xf] %vm1429, %v1403
    %1926 = vst.msk [vmem:[#allocation2 + $0xbc] sm:$0xf] %vm1429, %v1404
    %1927 = vst.msk [vmem:[#allocation2 + $0xd0] sm:$0xf] %vm1429, %v1405
    %1928 = vst.msk [vmem:[#allocation2 + $0xe4] sm:$0xf] %vm1429, %v1406
    %1929 = vst.msk [vmem:[#allocation2 + $0xf8] sm:$0xf] %vm1429, %v1407
    %1930 = vst.msk [vmem:[#allocation2 + $0x10c] sm:$0xf] %vm1429, %v1408
    %1931 = vst.msk [vmem:[#allocation2 + $0x120] sm:$0xf] %vm1429, %v1409
    %1932 = vst.msk [vmem:[#allocation2 + $0x134] sm:$0xf] %vm1429, %v1410
    %v1933 = vrot.slane %v1806, 4
    %v1934 = vrot.slane %v1809, 5
    %v1935 = vor.u32 %v1933, %v1934
    %v1936 = vrot.slane %v1935, 4
    %v1937 = vrot.slane %v1813, 4
    %v1938 = vrot.slane %v1816, 5
    %v1939 = vor.u32 %v1937, %v1938
    %v1940 = vrot.slane %v1939, 4
    %1941 = vrot.lane.b32.xlu0 %v1694, 64
    %v1942 = vpop.permute.xlu0 %1941
    %1943 = vrot.lane.b32.xlu0 %v1698, 64
    %v1944 = vpop.permute.xlu0 %1943
    %1945 = vrot.lane.b32.xlu0 %v1702, 64
    %v1946 = vpop.permute.xlu0 %1945
    %1947 = vrot.lane.b32.xlu0 %v1706, 64
    %v1948 = vpop.permute.xlu0 %1947
    %1949 = vrot.lane.b32.xlu0 %v1710, 64
    %v1950 = vpop.permute.xlu0 %1949
    %1951 = vrot.lane.b32.xlu0 %v1714, 64
    %v1952 = vpop.permute.xlu0 %1951
    %1953 = vrot.lane.b32.xlu0 %v1718, 64
    %v1954 = vpop.permute.xlu0 %1953
    %1955 = vrot.lane.b32.xlu0 %v1936, 64
    %v1956 = vpop.permute.xlu0 %1955
    %1957 = vrot.lane.b32.xlu0 %v1722, 64
    %v1958 = vpop.permute.xlu0 %1957
    %1959 = vrot.lane.b32.xlu0 %v1726, 64
    %v1960 = vpop.permute.xlu0 %1959
    %1961 = vrot.lane.b32.xlu0 %v1730, 64
    %v1962 = vpop.permute.xlu0 %1961
    %1963 = vrot.lane.b32.xlu0 %v1734, 64
    %v1964 = vpop.permute.xlu0 %1963
    %1965 = vrot.lane.b32.xlu0 %v1738, 64
    %v1966 = vpop.permute.xlu0 %1965
    %1967 = vrot.lane.b32.xlu0 %v1742, 64
    %v1968 = vpop.permute.xlu0 %1967
    %1969 = vrot.lane.b32.xlu0 %v1746, 64
    %v1970 = vpop.permute.xlu0 %1969
    %1971 = vrot.lane.b32.xlu0 %v1940, 64
    %v1972 = vpop.permute.xlu0 %1971
    %vm1989 = vmand %vm1867, %vm1761
    %v1990 = vld [vmem:[#allocation2 + $0x8] sm:$0xf]
    %v1991 = vsel %vm1989, %v1942, %v1990
    %1992 = vst [vmem:[#allocation2 + $0x8] sm:$0xf] %v1991
    %v1993 = vld [vmem:[#allocation2 + $0x1c] sm:$0xf]
    %v1994 = vsel %vm1989, %v1944, %v1993
    %1995 = vst [vmem:[#allocation2 + $0x1c] sm:$0xf] %v1994
    %v1996 = vld [vmem:[#allocation2 + $0x30] sm:$0xf]
    %v1997 = vsel %vm1989, %v1946, %v1996
    %1998 = vst [vmem:[#allocation2 + $0x30] sm:$0xf] %v1997
    %v1999 = vld [vmem:[#allocation2 + $0x44] sm:$0xf]
    %v2000 = vsel %vm1989, %v1948, %v1999
    %2001 = vst [vmem:[#allocation2 + $0x44] sm:$0xf] %v2000
    %v2002 = vld [vmem:[#allocation2 + $0x58] sm:$0xf]
    %v2003 = vsel %vm1989, %v1950, %v2002
    %2004 = vst [vmem:[#allocation2 + $0x58] sm:$0xf] %v2003
    %v2005 = vld [vmem:[#allocation2 + $0x6c] sm:$0xf]
    %v2006 = vsel %vm1989, %v1952, %v2005
    %2007 = vst [vmem:[#allocation2 + $0x6c] sm:$0xf] %v2006
    %v2008 = vld [vmem:[#allocation2 + $0x80] sm:$0xf]
    %v2009 = vsel %vm1989, %v1954, %v2008
    %2010 = vst [vmem:[#allocation2 + $0x80] sm:$0xf] %v2009
    %v2011 = vld [vmem:[#allocation2 + $0x94] sm:$0xf]
    %v2012 = vsel %vm1989, %v1956, %v2011
    %2013 = vst [vmem:[#allocation2 + $0x94] sm:$0xf] %v2012
    %v2014 = vld [vmem:[#allocation2 + $0xa8] sm:$0xf]
    %v2015 = vsel %vm1989, %v1958, %v2014
    %2016 = vst [vmem:[#allocation2 + $0xa8] sm:$0xf] %v2015
    %v2017 = vld [vmem:[#allocation2 + $0xbc] sm:$0xf]
    %v2018 = vsel %vm1989, %v1960, %v2017
    %2019 = vst [vmem:[#allocation2 + $0xbc] sm:$0xf] %v2018
    %v2020 = vld [vmem:[#allocation2 + $0xd0] sm:$0xf]
    %v2021 = vsel %vm1989, %v1962, %v2020
    %2022 = vst [vmem:[#allocation2 + $0xd0] sm:$0xf] %v2021
    %v2023 = vld [vmem:[#allocation2 + $0xe4] sm:$0xf]
    %v2024 = vsel %vm1989, %v1964, %v2023
    %2025 = vst [vmem:[#allocation2 + $0xe4] sm:$0xf] %v2024
    %v2026 = vld [vmem:[#allocation2 + $0xf8] sm:$0xf]
    %v2027 = vsel %vm1989, %v1966, %v2026
    %2028 = vst [vmem:[#allocation2 + $0xf8] sm:$0xf] %v2027
    %v2029 = vld [vmem:[#allocation2 + $0x10c] sm:$0xf]
    %v2030 = vsel %vm1989, %v1968, %v2029
    %2031 = vst [vmem:[#allocation2 + $0x10c] sm:$0xf] %v2030
    %v2032 = vld [vmem:[#allocation2 + $0x120] sm:$0xf]
    %v2033 = vsel %vm1989, %v1970, %v2032
    %2034 = vst [vmem:[#allocation2 + $0x120] sm:$0xf] %v2033
    %v2035 = vld [vmem:[#allocation2 + $0x134] sm:$0xf]
    %v2036 = vsel %vm1989, %v1972, %v2035
    %2037 = vst [vmem:[#allocation2 + $0x134] sm:$0xf] %v2036
    %v2040 = vld [vmem:[#allocation2 + $0xc] sm:$0xf]
    %v2041 = vsel %vm1591, %v1489, %v2040
    %2042 = vst [vmem:[#allocation2 + $0xc] sm:$0xf] %v2041
    %v2043 = vld [vmem:[#allocation2 + $0x20] sm:$0xf]
    %v2044 = vsel %vm1591, %v1496, %v2043
    %2045 = vst [vmem:[#allocation2 + $0x20] sm:$0xf] %v2044
    %v2046 = vld [vmem:[#allocation2 + $0x34] sm:$0xf]
    %v2047 = vsel %vm1591, %v1503, %v2046
    %2048 = vst [vmem:[#allocation2 + $0x34] sm:$0xf] %v2047
    %v2049 = vld [vmem:[#allocation2 + $0x48] sm:$0xf]
    %v2050 = vsel %vm1591, %v1510, %v2049
    %2051 = vst [vmem:[#allocation2 + $0x48] sm:$0xf] %v2050
    %v2052 = vld [vmem:[#allocation2 + $0x5c] sm:$0xf]
    %v2053 = vsel %vm1591, %v1517, %v2052
    %2054 = vst [vmem:[#allocation2 + $0x5c] sm:$0xf] %v2053
    %v2055 = vld [vmem:[#allocation2 + $0x70] sm:$0xf]
    %v2056 = vsel %vm1591, %v1524, %v2055
    %2057 = vst [vmem:[#allocation2 + $0x70] sm:$0xf] %v2056
    %v2058 = vld [vmem:[#allocation2 + $0x84] sm:$0xf]
    %v2059 = vsel %vm1591, %v1811, %v2058
    %2060 = vst [vmem:[#allocation2 + $0x84] sm:$0xf] %v2059
    %v2061 = vld [vmem:[#allocation2 + $0xac] sm:$0xf]
    %v2062 = vsel %vm1591, %v1538, %v2061
    %2063 = vst [vmem:[#allocation2 + $0xac] sm:$0xf] %v2062
    %v2064 = vld [vmem:[#allocation2 + $0xc0] sm:$0xf]
    %v2065 = vsel %vm1591, %v1545, %v2064
    %2066 = vst [vmem:[#allocation2 + $0xc0] sm:$0xf] %v2065
    %v2067 = vld [vmem:[#allocation2 + $0xd4] sm:$0xf]
    %v2068 = vsel %vm1591, %v1552, %v2067
    %2069 = vst [vmem:[#allocation2 + $0xd4] sm:$0xf] %v2068
    %v2070 = vld [vmem:[#allocation2 + $0xe8] sm:$0xf]
    %v2071 = vsel %vm1591, %v1559, %v2070
    %2072 = vst [vmem:[#allocation2 + $0xe8] sm:$0xf] %v2071
    %v2073 = vld [vmem:[#allocation2 + $0xfc] sm:$0xf]
    %v2074 = vsel %vm1591, %v1566, %v2073
    %2075 = vst [vmem:[#allocation2 + $0xfc] sm:$0xf] %v2074
    %v2076 = vld [vmem:[#allocation2 + $0x110] sm:$0xf]
    %v2077 = vsel %vm1591, %v1573, %v2076
    %2078 = vst [vmem:[#allocation2 + $0x110] sm:$0xf] %v2077
    %v2079 = vld [vmem:[#allocation2 + $0x124] sm:$0xf]
    %v2080 = vsel %vm1591, %v1818, %v2079
    %2081 = vst [vmem:[#allocation2 + $0x124] sm:$0xf] %v2080
    %2082 = vrot.lane.b32.xlu0 %v1402, 64
    %v2083 = vpop.permute.xlu0 %2082
    %2084 = vrot.lane.b32.xlu0 %v1410, 64
    %v2085 = vpop.permute.xlu0 %2084
    %2088 = vst.msk [vmem:[#allocation2 + $0xc] sm:$0xf] %vm1676, %v1637
    %2089 = vst.msk [vmem:[#allocation2 + $0x20] sm:$0xf] %vm1676, %v1639
    %2090 = vst.msk [vmem:[#allocation2 + $0x34] sm:$0xf] %vm1676, %v1641
    %2091 = vst.msk [vmem:[#allocation2 + $0x48] sm:$0xf] %vm1676, %v1643
    %2092 = vst.msk [vmem:[#allocation2 + $0x5c] sm:$0xf] %vm1676, %v1645
    %2093 = vst.msk [vmem:[#allocation2 + $0x70] sm:$0xf] %vm1676, %v1647
    %2094 = vst.msk [vmem:[#allocation2 + $0x84] sm:$0xf] %vm1676, %v2083
    %2095 = vst.msk [vmem:[#allocation2 + $0xac] sm:$0xf] %vm1676, %v1651
    %2096 = vst.msk [vmem:[#allocation2 + $0xc0] sm:$0xf] %vm1676, %v1653
    %2097 = vst.msk [vmem:[#allocation2 + $0xd4] sm:$0xf] %vm1676, %v1655
    %2098 = vst.msk [vmem:[#allocation2 + $0xe8] sm:$0xf] %vm1676, %v1657
    %2099 = vst.msk [vmem:[#allocation2 + $0xfc] sm:$0xf] %vm1676, %v1659
    %2100 = vst.msk [vmem:[#allocation2 + $0x110] sm:$0xf] %vm1676, %v1661
    %2101 = vst.msk [vmem:[#allocation2 + $0x124] sm:$0xf] %vm1676, %v2085
    %v2104 = vld [vmem:[#allocation2 + $0x10] sm:$0xf]
    %v2105 = vsel %vm1762, %v1698, %v2104
    %2106 = vst [vmem:[#allocation2 + $0x10] sm:$0xf] %v2105
    %v2107 = vld [vmem:[#allocation2 + $0x24] sm:$0xf]
    %v2108 = vsel %vm1762, %v1702, %v2107
    %2109 = vst [vmem:[#allocation2 + $0x24] sm:$0xf] %v2108
    %v2110 = vld [vmem:[#allocation2 + $0x38] sm:$0xf]
    %v2111 = vsel %vm1762, %v1706, %v2110
    %2112 = vst [vmem:[#allocation2 + $0x38] sm:$0xf] %v2111
    %v2113 = vld [vmem:[#allocation2 + $0x4c] sm:$0xf]
    %v2114 = vsel %vm1762, %v1710, %v2113
    %2115 = vst [vmem:[#allocation2 + $0x4c] sm:$0xf] %v2114
    %v2116 = vld [vmem:[#allocation2 + $0x60] sm:$0xf]
    %v2117 = vsel %vm1762, %v1714, %v2116
    %2118 = vst [vmem:[#allocation2 + $0x60] sm:$0xf] %v2117
    %v2119 = vld [vmem:[#allocation2 + $0x74] sm:$0xf]
    %v2120 = vsel %vm1762, %v1718, %v2119
    %2121 = vst [vmem:[#allocation2 + $0x74] sm:$0xf] %v2120
    %v2122 = vld [vmem:[#allocation2 + $0x88] sm:$0xf]
    %v2123 = vsel %vm1762, %v1936, %v2122
    %2124 = vst [vmem:[#allocation2 + $0x88] sm:$0xf] %v2123
    %v2125 = vld [vmem:[#allocation2 + $0xb0] sm:$0xf]
    %v2126 = vsel %vm1762, %v1726, %v2125
    %2127 = vst [vmem:[#allocation2 + $0xb0] sm:$0xf] %v2126
    %v2128 = vld [vmem:[#allocation2 + $0xc4] sm:$0xf]
    %v2129 = vsel %vm1762, %v1730, %v2128
    %2130 = vst [vmem:[#allocation2 + $0xc4] sm:$0xf] %v2129
    %v2131 = vld [vmem:[#allocation2 + $0xd8] sm:$0xf]
    %v2132 = vsel %vm1762, %v1734, %v2131
    %2133 = vst [vmem:[#allocation2 + $0xd8] sm:$0xf] %v2132
    %v2134 = vld [vmem:[#allocation2 + $0xec] sm:$0xf]
    %v2135 = vsel %vm1762, %v1738, %v2134
    %2136 = vst [vmem:[#allocation2 + $0xec] sm:$0xf] %v2135
    %v2137 = vld [vmem:[#allocation2 + $0x100] sm:$0xf]
    %v2138 = vsel %vm1762, %v1742, %v2137
    %2139 = vst [vmem:[#allocation2 + $0x100] sm:$0xf] %v2138
    %v2140 = vld [vmem:[#allocation2 + $0x114] sm:$0xf]
    %v2141 = vsel %vm1762, %v1746, %v2140
    %2142 = vst [vmem:[#allocation2 + $0x114] sm:$0xf] %v2141
    %v2143 = vld [vmem:[#allocation2 + $0x128] sm:$0xf]
    %v2144 = vsel %vm1762, %v1940, %v2143
    %2145 = vst [vmem:[#allocation2 + $0x128] sm:$0xf] %v2144
    %v2146 = vld [vmem:[#allocation2] sm:$0xff]
    %v2147 = vld [vmem:[#allocation2 + $0x8] sm:$0xff]
    %v2148 = vld [vmem:[#allocation2 + $0x10] sm:$0xf]
    %v2149 = vld [vmem:[#allocation2 + $0x14] sm:$0xff]
    %v2150 = vld [vmem:[#allocation2 + $0x1c] sm:$0xff]
    %v2151 = vld [vmem:[#allocation2 + $0x24] sm:$0xf]
    %v2152 = vld [vmem:[#allocation2 + $0x28] sm:$0xff]
    %v2153 = vld [vmem:[#allocation2 + $0x30] sm:$0xff]
    %v2154 = vld [vmem:[#allocation2 + $0x38] sm:$0xf]
    %v2155 = vld [vmem:[#allocation2 + $0x3c] sm:$0xff]
    %v2156 = vld [vmem:[#allocation2 + $0x44] sm:$0xff]
    %v2157 = vld [vmem:[#allocation2 + $0x4c] sm:$0xf]
    %v2158 = vld [vmem:[#allocation2 + $0x50] sm:$0xff]
    %v2159 = vld [vmem:[#allocation2 + $0x58] sm:$0xff]
    %v2160 = vld [vmem:[#allocation2 + $0x60] sm:$0xf]
    %v2161 = vld [vmem:[#allocation2 + $0x64] sm:$0xff]
    %v2162 = vld [vmem:[#allocation2 + $0x6c] sm:$0xff]
    %v2163 = vld [vmem:[#allocation2 + $0x74] sm:$0xf]
    %v2164 = vld [vmem:[#allocation2 + $0x78] sm:$0xff]
    %v2165 = vld [vmem:[#allocation2 + $0x80] sm:$0xff]
    %v2166 = vld [vmem:[#allocation2 + $0x88] sm:$0xf]
    %v2167 = vld [vmem:[#allocation2 + $0x8c] sm:$0xff]
    %v2168 = vld [vmem:[#allocation2 + $0x94] sm:$0xff]
    %v2169 = vld [vmem:[#allocation2 + $0x9c] sm:$0xf]
    %v2170 = vld [vmem:[#allocation2 + $0xa0] sm:$0xff]
    %v2171 = vld [vmem:[#allocation2 + $0xa8] sm:$0xff]
    %v2172 = vld [vmem:[#allocation2 + $0xb0] sm:$0xf]
    %v2173 = vld [vmem:[#allocation2 + $0xb4] sm:$0xff]
    %v2174 = vld [vmem:[#allocation2 + $0xbc] sm:$0xff]
    %v2175 = vld [vmem:[#allocation2 + $0xc4] sm:$0xf]
    %v2176 = vld [vmem:[#allocation2 + $0xc8] sm:$0xff]
    %v2177 = vld [vmem:[#allocation2 + $0xd0] sm:$0xff]
    %v2178 = vld [vmem:[#allocation2 + $0xd8] sm:$0xf]
    %v2179 = vld [vmem:[#allocation2 + $0xdc] sm:$0xff]
    %v2180 = vld [vmem:[#allocation2 + $0xe4] sm:$0xff]
    %v2181 = vld [vmem:[#allocation2 + $0xec] sm:$0xf]
    %v2182 = vld [vmem:[#allocation2 + $0xf0] sm:$0xff]
    %v2183 = vld [vmem:[#allocation2 + $0xf8] sm:$0xff]
    %v2184 = vld [vmem:[#allocation2 + $0x100] sm:$0xf]
    %v2185 = vld [vmem:[#allocation2 + $0x104] sm:$0xff]
    %v2186 = vld [vmem:[#allocation2 + $0x10c] sm:$0xff]
    %v2187 = vld [vmem:[#allocation2 + $0x114] sm:$0xf]
    %v2188 = vld [vmem:[#allocation2 + $0x118] sm:$0xff]
    %v2189 = vld [vmem:[#allocation2 + $0x120] sm:$0xff]
    %v2190 = vld [vmem:[#allocation2 + $0x128] sm:$0xf]
    %v2191 = vld [vmem:[#allocation2 + $0x12c] sm:$0xff]
    %v2192 = vld [vmem:[#allocation2 + $0x134] sm:$0xff]
    %v2193 = vld [vmem:[#allocation2 + $0x13c] sm:$0xf]
    %v2194 = vld [vmem:[%s3] sm:$0xff]
    %v2195 = vld [vmem:[%s3 + $0x8] sm:$0xff]
    %v2196 = vld [vmem:[%s3 + $0x10] sm:$0xff]
    %v2197 = vld [vmem:[%s3 + $0x18] sm:$0xff]
    %v2198 = vld [vmem:[%s3 + $0x20] sm:$0xff]
    %v2199 = vld [vmem:[%s3 + $0x28] sm:$0xff]
    %v2200 = vld [vmem:[%s3 + $0x30] sm:$0xff]
    %v2201 = vld [vmem:[%s3 + $0x38] sm:$0xff]
    %v2202 = vld [vmem:[%s3 + $0x40] sm:$0xff]
    %v2203 = vld [vmem:[%s3 + $0x48] sm:$0xff]
    %v2204 = vld [vmem:[%s3 + $0x50] sm:$0xff]
    %v2205 = vld [vmem:[%s3 + $0x58] sm:$0xff]
    %v2206 = vld [vmem:[%s3 + $0x60] sm:$0xff]
    %v2207 = vld [vmem:[%s3 + $0x68] sm:$0xff]
    %v2208 = vld [vmem:[%s3 + $0x70] sm:$0xff]
    %v2209 = vld [vmem:[%s3 + $0x78] sm:$0xff]
    %v2210 = vld [vmem:[%s3 + $0x80] sm:$0xff]
    %v2211 = vld [vmem:[%s3 + $0x88] sm:$0xff]
    %v2212 = vld [vmem:[%s3 + $0x90] sm:$0xff]
    %v2213 = vld [vmem:[%s3 + $0x98] sm:$0xff]
    %v2214 = vld [vmem:[%s3 + $0xa0] sm:$0xff]
    %v2215 = vld [vmem:[%s3 + $0xa8] sm:$0xff]
    %v2216 = vld [vmem:[%s3 + $0xb0] sm:$0xff]
    %v2217 = vld [vmem:[%s3 + $0xb8] sm:$0xff]
    %v2218 = vld [vmem:[%s3 + $0xc0] sm:$0xff]
    %v2219 = vld [vmem:[%s3 + $0xc8] sm:$0xff]
    %v2220 = vld [vmem:[%s3 + $0xd0] sm:$0xff]
    %v2221 = vld [vmem:[%s3 + $0xd8] sm:$0xff]
    %v2222 = vld [vmem:[%s3 + $0xe0] sm:$0xff]
    %v2223 = vld [vmem:[%s3 + $0xe8] sm:$0xff]
    %v2224 = vld [vmem:[%s3 + $0xf0] sm:$0xff]
    %v2225 = vld [vmem:[%s3 + $0xf8] sm:$0xff]
    %v2226 = vld [vmem:[%s3 + $0x100] sm:$0xff]
    %v2227 = vld [vmem:[%s3 + $0x108] sm:$0xff]
    %v2228 = vld [vmem:[%s3 + $0x110] sm:$0xff]
    %v2229 = vld [vmem:[%s3 + $0x118] sm:$0xff]
    %v2230 = vld [vmem:[%s3 + $0x120] sm:$0xff]
    %v2231 = vld [vmem:[%s3 + $0x128] sm:$0xff]
    %v2232 = vld [vmem:[%s3 + $0x130] sm:$0xff]
    %v2233 = vld [vmem:[%s3 + $0x138] sm:$0xff]
    %v2234 = vld [vmem:[%s3 + $0x140] sm:$0xff]
    %v2235 = vld [vmem:[%s3 + $0x148] sm:$0xff]
    %v2236 = vld [vmem:[%s3 + $0x150] sm:$0xff]
    %v2237 = vld [vmem:[%s3 + $0x158] sm:$0xff]
    %v2238 = vld [vmem:[%s3 + $0x160] sm:$0xff]
    %v2239 = vld [vmem:[%s3 + $0x168] sm:$0xff]
    %v2240 = vld [vmem:[%s3 + $0x170] sm:$0xff]
    %v2241 = vld [vmem:[%s3 + $0x178] sm:$0xff]
    %v2242 = vld [vmem:[%s3 + $0x180] sm:$0xff]
    %v2243 = vld [vmem:[%s3 + $0x188] sm:$0xff]
    %v2244 = vld [vmem:[%s3 + $0x190] sm:$0xff]
    %v2245 = vld [vmem:[%s3 + $0x198] sm:$0xff]
    %v2246 = vld [vmem:[%s3 + $0x1a0] sm:$0xff]
    %v2247 = vld [vmem:[%s3 + $0x1a8] sm:$0xff]
    %v2248 = vld [vmem:[%s3 + $0x1b0] sm:$0xff]
    %v2249 = vld [vmem:[%s3 + $0x1b8] sm:$0xff]
    %v2250 = vld [vmem:[%s3 + $0x1c0] sm:$0xff]
    %v2251 = vld [vmem:[%s3 + $0x1c8] sm:$0xff]
    %v2252 = vld [vmem:[%s3 + $0x1d0] sm:$0xff]
    %v2253 = vld [vmem:[%s3 + $0x1d8] sm:$0xff]
    %v2254 = vld [vmem:[%s3 + $0x1e0] sm:$0xff]
    %v2255 = vld [vmem:[%s3 + $0x1e8] sm:$0xff]
    %v2256 = vld [vmem:[%s3 + $0x1f0] sm:$0xff]
    %v2257 = vld [vmem:[%s3 + $0x1f8] sm:$0xff]
    %v2258 = vld [vmem:[%s3 + $0x200] sm:$0xff]
    %v2259 = vld [vmem:[%s3 + $0x208] sm:$0xff]
    %v2260 = vld [vmem:[%s3 + $0x210] sm:$0xff]
    %v2261 = vld [vmem:[%s3 + $0x218] sm:$0xff]
    %v2262 = vld [vmem:[%s3 + $0x220] sm:$0xff]
    %v2263 = vld [vmem:[%s3 + $0x228] sm:$0xff]
    %v2264 = vld [vmem:[%s3 + $0x230] sm:$0xff]
    %v2265 = vld [vmem:[%s3 + $0x238] sm:$0xff]
    %v2266 = vld [vmem:[%s4] sm:$0x3]
    %v2268 = vlaneseq
    %v2269 = vshrl.u32 %v2268, 7
    %v2270 = vsub.s32 0, %v2269
    %v2271 = vrot.slane %v2266, %v2270
    %v2272 = vlaneseq
    %v2273 = vshrl.u32 %v2272, 7
    %v2274 = vsub.s32 1, %v2273
    %v2275 = vrot.slane %v2266, %v2274
    %v2326 = vunpack.c.l.b16 %v2146
    %v2327 = vunpack.c.h.b16 %v2146
    %v2328 = vunpack.c.l.b16 %v2147
    %v2329 = vunpack.c.h.b16 %v2147
    %v2330 = vunpack.c.l.b16 %v2148
    %v2331 = vunpack.c.l.b16 %v2149
    %v2332 = vunpack.c.h.b16 %v2149
    %v2333 = vunpack.c.l.b16 %v2150
    %v2334 = vunpack.c.h.b16 %v2150
    %v2335 = vunpack.c.l.b16 %v2151
    %v2336 = vunpack.c.l.b16 %v2152
    %v2337 = vunpack.c.h.b16 %v2152
    %v2338 = vunpack.c.l.b16 %v2153
    %v2339 = vunpack.c.h.b16 %v2153
    %v2340 = vunpack.c.l.b16 %v2154
    %v2341 = vunpack.c.l.b16 %v2155
    %v2342 = vunpack.c.h.b16 %v2155
    %v2343 = vunpack.c.l.b16 %v2156
    %v2344 = vunpack.c.h.b16 %v2156
    %v2345 = vunpack.c.l.b16 %v2157
    %v2346 = vunpack.c.l.b16 %v2158
    %v2347 = vunpack.c.h.b16 %v2158
    %v2348 = vunpack.c.l.b16 %v2159
    %v2349 = vunpack.c.h.b16 %v2159
    %v2350 = vunpack.c.l.b16 %v2160
    %v2351 = vunpack.c.l.b16 %v2161
    %v2352 = vunpack.c.h.b16 %v2161
    %v2353 = vunpack.c.l.b16 %v2162
    %v2354 = vunpack.c.h.b16 %v2162
    %v2355 = vunpack.c.l.b16 %v2163
    %v2356 = vunpack.c.l.b16 %v2164
    %v2357 = vunpack.c.h.b16 %v2164
    %v2358 = vunpack.c.l.b16 %v2165
    %v2359 = vunpack.c.h.b16 %v2165
    %v2360 = vunpack.c.l.b16 %v2166
    %v2361 = vunpack.c.l.b16 %v2167
    %v2362 = vunpack.c.h.b16 %v2167
    %v2363 = vunpack.c.l.b16 %v2168
    %v2364 = vunpack.c.h.b16 %v2168
    %v2365 = vunpack.c.l.b16 %v2169
    %v2366 = vunpack.c.l.b16 %v2170
    %v2367 = vunpack.c.h.b16 %v2170
    %v2368 = vunpack.c.l.b16 %v2171
    %v2369 = vunpack.c.h.b16 %v2171
    %v2370 = vunpack.c.l.b16 %v2172
    %v2371 = vunpack.c.l.b16 %v2173
    %v2372 = vunpack.c.h.b16 %v2173
    %v2373 = vunpack.c.l.b16 %v2174
    %v2374 = vunpack.c.h.b16 %v2174
    %v2375 = vunpack.c.l.b16 %v2175
    %v2376 = vunpack.c.l.b16 %v2176
    %v2377 = vunpack.c.h.b16 %v2176
    %v2378 = vunpack.c.l.b16 %v2177
    %v2379 = vunpack.c.h.b16 %v2177
    %v2380 = vunpack.c.l.b16 %v2178
    %v2381 = vunpack.c.l.b16 %v2179
    %v2382 = vunpack.c.h.b16 %v2179
    %v2383 = vunpack.c.l.b16 %v2180
    %v2384 = vunpack.c.h.b16 %v2180
    %v2385 = vunpack.c.l.b16 %v2181
    %v2386 = vunpack.c.l.b16 %v2182
    %v2387 = vunpack.c.h.b16 %v2182
    %v2388 = vunpack.c.l.b16 %v2183
    %v2389 = vunpack.c.h.b16 %v2183
    %v2390 = vunpack.c.l.b16 %v2184
    %v2391 = vunpack.c.l.b16 %v2185
    %v2392 = vunpack.c.h.b16 %v2185
    %v2393 = vunpack.c.l.b16 %v2186
    %v2394 = vunpack.c.h.b16 %v2186
    %v2395 = vunpack.c.l.b16 %v2187
    %v2396 = vunpack.c.l.b16 %v2188
    %v2397 = vunpack.c.h.b16 %v2188
    %v2398 = vunpack.c.l.b16 %v2189
    %v2399 = vunpack.c.h.b16 %v2189
    %v2400 = vunpack.c.l.b16 %v2190
    %v2401 = vunpack.c.l.b16 %v2191
    %v2402 = vunpack.c.h.b16 %v2191
    %v2403 = vunpack.c.l.b16 %v2192
    %v2404 = vunpack.c.h.b16 %v2192
    %v2405 = vunpack.c.l.b16 %v2193
    %v2406 = vpack.c.b16 %v2331, %v2326
    %v2407 = vpack.c.b16 %v2332, %v2327
    %v2408 = vpack.c.b16 %v2333, %v2328
    %v2409 = vpack.c.b16 %v2334, %v2329
    %v2410 = vpack.c.b16 %v2335, %v2330
    %v2411 = vpack.c.b16 %v2341, %v2336
    %v2412 = vpack.c.b16 %v2342, %v2337
    %v2413 = vpack.c.b16 %v2343, %v2338
    %v2414 = vpack.c.b16 %v2344, %v2339
    %v2415 = vpack.c.b16 %v2345, %v2340
    %v2416 = vpack.c.b16 %v2351, %v2346
    %v2417 = vpack.c.b16 %v2352, %v2347
    %v2418 = vpack.c.b16 %v2353, %v2348
    %v2419 = vpack.c.b16 %v2354, %v2349
    %v2420 = vpack.c.b16 %v2355, %v2350
    %v2421 = vpack.c.b16 %v2361, %v2356
    %v2422 = vpack.c.b16 %v2362, %v2357
    %v2423 = vpack.c.b16 %v2363, %v2358
    %v2424 = vpack.c.b16 %v2364, %v2359
    %v2425 = vpack.c.b16 %v2365, %v2360
    %v2426 = vpack.c.b16 %v2371, %v2366
    %v2427 = vpack.c.b16 %v2372, %v2367
    %v2428 = vpack.c.b16 %v2373, %v2368
    %v2429 = vpack.c.b16 %v2374, %v2369
    %v2430 = vpack.c.b16 %v2375, %v2370
    %v2431 = vpack.c.b16 %v2381, %v2376
    %v2432 = vpack.c.b16 %v2382, %v2377
    %v2433 = vpack.c.b16 %v2383, %v2378
    %v2434 = vpack.c.b16 %v2384, %v2379
    %v2435 = vpack.c.b16 %v2385, %v2380
    %v2436 = vpack.c.b16 %v2391, %v2386
    %v2437 = vpack.c.b16 %v2392, %v2387
    %v2438 = vpack.c.b16 %v2393, %v2388
    %v2439 = vpack.c.b16 %v2394, %v2389
    %v2440 = vpack.c.b16 %v2395, %v2390
    %v2441 = vpack.c.b16 %v2401, %v2396
    %v2442 = vpack.c.b16 %v2402, %v2397
    %v2443 = vpack.c.b16 %v2403, %v2398
    %v2444 = vpack.c.b16 %v2404, %v2399
    %v2445 = vpack.c.b16 %v2405, %v2400
    %v2550 = vunpack.c.l.b16 %v2194
    %v2551 = vunpack.c.h.b16 %v2194
    %v2552 = vunpack.c.l.b16 %v2195
    %v2553 = vunpack.c.h.b16 %v2195
    %v2554 = vunpack.c.l.b16 %v2196
    %v2555 = vunpack.c.h.b16 %v2196
    %v2556 = vunpack.c.l.b16 %v2197
    %v2557 = vunpack.c.h.b16 %v2197
    %v2558 = vunpack.c.l.b16 %v2198
    %v2559 = vunpack.c.h.b16 %v2198
    %v2560 = vunpack.c.l.b16 %v2199
    %v2561 = vunpack.c.h.b16 %v2199
    %v2562 = vunpack.c.l.b16 %v2200
    %v2563 = vunpack.c.h.b16 %v2200
    %v2564 = vunpack.c.l.b16 %v2201
    %v2565 = vunpack.c.h.b16 %v2201
    %v2566 = vunpack.c.l.b16 %v2202
    %v2567 = vunpack.c.h.b16 %v2202
    %v2568 = vunpack.c.l.b16 %v2203
    %v2569 = vunpack.c.h.b16 %v2203
    %v2570 = vunpack.c.l.b16 %v2204
    %v2571 = vunpack.c.h.b16 %v2204
    %v2572 = vunpack.c.l.b16 %v2205
    %v2573 = vunpack.c.h.b16 %v2205
    %v2574 = vunpack.c.l.b16 %v2206
    %v2575 = vunpack.c.h.b16 %v2206
    %v2576 = vunpack.c.l.b16 %v2207
    %v2577 = vunpack.c.h.b16 %v2207
    %v2578 = vunpack.c.l.b16 %v2208
    %v2579 = vunpack.c.h.b16 %v2208
    %v2580 = vunpack.c.l.b16 %v2209
    %v2581 = vunpack.c.h.b16 %v2209
    %v2582 = vunpack.c.l.b16 %v2210
    %v2583 = vunpack.c.h.b16 %v2210
    %v2584 = vunpack.c.l.b16 %v2211
    %v2585 = vunpack.c.h.b16 %v2211
    %v2586 = vunpack.c.l.b16 %v2212
    %v2587 = vunpack.c.h.b16 %v2212
    %v2588 = vunpack.c.l.b16 %v2213
    %v2589 = vunpack.c.h.b16 %v2213
    %v2590 = vunpack.c.l.b16 %v2214
    %v2591 = vunpack.c.h.b16 %v2214
    %v2592 = vunpack.c.l.b16 %v2215
    %v2593 = vunpack.c.h.b16 %v2215
    %v2594 = vunpack.c.l.b16 %v2216
    %v2595 = vunpack.c.h.b16 %v2216
    %v2596 = vunpack.c.l.b16 %v2217
    %v2597 = vunpack.c.h.b16 %v2217
    %v2598 = vunpack.c.l.b16 %v2218
    %v2599 = vunpack.c.h.b16 %v2218
    %v2600 = vunpack.c.l.b16 %v2219
    %v2601 = vunpack.c.h.b16 %v2219
    %v2602 = vunpack.c.l.b16 %v2220
    %v2603 = vunpack.c.h.b16 %v2220
    %v2604 = vunpack.c.l.b16 %v2221
    %v2605 = vunpack.c.h.b16 %v2221
    %v2606 = vunpack.c.l.b16 %v2222
    %v2607 = vunpack.c.h.b16 %v2222
    %v2608 = vunpack.c.l.b16 %v2223
    %v2609 = vunpack.c.h.b16 %v2223
    %v2610 = vunpack.c.l.b16 %v2224
    %v2611 = vunpack.c.h.b16 %v2224
    %v2612 = vunpack.c.l.b16 %v2225
    %v2613 = vunpack.c.h.b16 %v2225
    %v2614 = vunpack.c.l.b16 %v2226
    %v2615 = vunpack.c.h.b16 %v2226
    %v2616 = vunpack.c.l.b16 %v2227
    %v2617 = vunpack.c.h.b16 %v2227
    %v2618 = vunpack.c.l.b16 %v2228
    %v2619 = vunpack.c.h.b16 %v2228
    %v2620 = vunpack.c.l.b16 %v2229
    %v2621 = vunpack.c.h.b16 %v2229
    %v2622 = vunpack.c.l.b16 %v2230
    %v2623 = vunpack.c.h.b16 %v2230
    %v2624 = vunpack.c.l.b16 %v2231
    %v2625 = vunpack.c.h.b16 %v2231
    %v2626 = vunpack.c.l.b16 %v2232
    %v2627 = vunpack.c.h.b16 %v2232
    %v2628 = vunpack.c.l.b16 %v2233
    %v2629 = vunpack.c.h.b16 %v2233
    %v2630 = vunpack.c.l.b16 %v2234
    %v2631 = vunpack.c.h.b16 %v2234
    %v2632 = vunpack.c.l.b16 %v2235
    %v2633 = vunpack.c.h.b16 %v2235
    %v2634 = vunpack.c.l.b16 %v2236
    %v2635 = vunpack.c.h.b16 %v2236
    %v2636 = vunpack.c.l.b16 %v2237
    %v2637 = vunpack.c.h.b16 %v2237
    %v2638 = vunpack.c.l.b16 %v2238
    %v2639 = vunpack.c.h.b16 %v2238
    %v2640 = vunpack.c.l.b16 %v2239
    %v2641 = vunpack.c.h.b16 %v2239
    %v2642 = vunpack.c.l.b16 %v2240
    %v2643 = vunpack.c.h.b16 %v2240
    %v2644 = vunpack.c.l.b16 %v2241
    %v2645 = vunpack.c.h.b16 %v2241
    %v2646 = vunpack.c.l.b16 %v2242
    %v2647 = vunpack.c.h.b16 %v2242
    %v2648 = vunpack.c.l.b16 %v2243
    %v2649 = vunpack.c.h.b16 %v2243
    %v2650 = vunpack.c.l.b16 %v2244
    %v2651 = vunpack.c.h.b16 %v2244
    %v2652 = vunpack.c.l.b16 %v2245
    %v2653 = vunpack.c.h.b16 %v2245
    %v2654 = vunpack.c.l.b16 %v2246
    %v2655 = vunpack.c.h.b16 %v2246
    %v2656 = vunpack.c.l.b16 %v2247
    %v2657 = vunpack.c.h.b16 %v2247
    %v2658 = vunpack.c.l.b16 %v2248
    %v2659 = vunpack.c.h.b16 %v2248
    %v2660 = vunpack.c.l.b16 %v2249
    %v2661 = vunpack.c.h.b16 %v2249
    %v2662 = vunpack.c.l.b16 %v2250
    %v2663 = vunpack.c.h.b16 %v2250
    %v2664 = vunpack.c.l.b16 %v2251
    %v2665 = vunpack.c.h.b16 %v2251
    %v2666 = vunpack.c.l.b16 %v2252
    %v2667 = vunpack.c.h.b16 %v2252
    %v2668 = vunpack.c.l.b16 %v2253
    %v2669 = vunpack.c.h.b16 %v2253
    %v2670 = vunpack.c.l.b16 %v2254
    %v2671 = vunpack.c.h.b16 %v2254
    %v2672 = vunpack.c.l.b16 %v2255
    %v2673 = vunpack.c.h.b16 %v2255
    %v2674 = vunpack.c.l.b16 %v2256
    %v2675 = vunpack.c.h.b16 %v2256
    %v2676 = vunpack.c.l.b16 %v2257
    %v2677 = vunpack.c.h.b16 %v2257
    %v2678 = vunpack.c.l.b16 %v2258
    %v2679 = vunpack.c.h.b16 %v2258
    %v2680 = vunpack.c.l.b16 %v2259
    %v2681 = vunpack.c.h.b16 %v2259
    %v2682 = vunpack.c.l.b16 %v2260
    %v2683 = vunpack.c.h.b16 %v2260
    %v2684 = vunpack.c.l.b16 %v2261
    %v2685 = vunpack.c.h.b16 %v2261
    %v2686 = vunpack.c.l.b16 %v2262
    %v2687 = vunpack.c.h.b16 %v2262
    %v2688 = vunpack.c.l.b16 %v2263
    %v2689 = vunpack.c.h.b16 %v2263
    %v2690 = vunpack.c.l.b16 %v2264
    %v2691 = vunpack.c.h.b16 %v2264
    %v2692 = vunpack.c.l.b16 %v2265
    %v2693 = vunpack.c.h.b16 %v2265
    %v2694 = vpack.c.b16 %v2552, %v2550
    %v2695 = vpack.c.b16 %v2553, %v2551
    %v2696 = vpack.c.b16 %v2556, %v2554
    %v2697 = vpack.c.b16 %v2557, %v2555
    %v2698 = vpack.c.b16 %v2560, %v2558
    %v2699 = vpack.c.b16 %v2561, %v2559
    %v2700 = vpack.c.b16 %v2564, %v2562
    %v2701 = vpack.c.b16 %v2565, %v2563
    %v2702 = vpack.c.b16 %v2568, %v2566
    %v2703 = vpack.c.b16 %v2569, %v2567
    %v2704 = vpack.c.b16 %v2572, %v2570
    %v2705 = vpack.c.b16 %v2573, %v2571
    %v2706 = vpack.c.b16 %v2576, %v2574
    %v2707 = vpack.c.b16 %v2577, %v2575
    %v2708 = vpack.c.b16 %v2580, %v2578
    %v2709 = vpack.c.b16 %v2581, %v2579
    %v2710 = vpack.c.b16 %v2584, %v2582
    %v2711 = vpack.c.b16 %v2585, %v2583
    %v2712 = vpack.c.b16 %v2588, %v2586
    %v2713 = vpack.c.b16 %v2589, %v2587
    %v2714 = vpack.c.b16 %v2592, %v2590
    %v2715 = vpack.c.b16 %v2593, %v2591
    %v2716 = vpack.c.b16 %v2596, %v2594
    %v2717 = vpack.c.b16 %v2597, %v2595
    %v2718 = vpack.c.b16 %v2600, %v2598
    %v2719 = vpack.c.b16 %v2601, %v2599
    %v2720 = vpack.c.b16 %v2604, %v2602
    %v2721 = vpack.c.b16 %v2605, %v2603
    %v2722 = vpack.c.b16 %v2608, %v2606
    %v2723 = vpack.c.b16 %v2609, %v2607
    %v2724 = vpack.c.b16 %v2612, %v2610
    %v2725 = vpack.c.b16 %v2613, %v2611
    %v2726 = vpack.c.b16 %v2616, %v2614
    %v2727 = vpack.c.b16 %v2617, %v2615
    %v2728 = vpack.c.b16 %v2620, %v2618
    %v2729 = vpack.c.b16 %v2621, %v2619
    %v2730 = vpack.c.b16 %v2624, %v2622
    %v2731 = vpack.c.b16 %v2625, %v2623
    %v2732 = vpack.c.b16 %v2628, %v2626
    %v2733 = vpack.c.b16 %v2629, %v2627
    %v2734 = vpack.c.b16 %v2632, %v2630
    %v2735 = vpack.c.b16 %v2633, %v2631
    %v2736 = vpack.c.b16 %v2636, %v2634
    %v2737 = vpack.c.b16 %v2637, %v2635
    %v2738 = vpack.c.b16 %v2640, %v2638
    %v2739 = vpack.c.b16 %v2641, %v2639
    %v2740 = vpack.c.b16 %v2644, %v2642
    %v2741 = vpack.c.b16 %v2645, %v2643
    %v2742 = vpack.c.b16 %v2648, %v2646
    %v2743 = vpack.c.b16 %v2649, %v2647
    %v2744 = vpack.c.b16 %v2652, %v2650
    %v2745 = vpack.c.b16 %v2653, %v2651
    %v2746 = vpack.c.b16 %v2656, %v2654
    %v2747 = vpack.c.b16 %v2657, %v2655
    %v2748 = vpack.c.b16 %v2660, %v2658
    %v2749 = vpack.c.b16 %v2661, %v2659
    %v2750 = vpack.c.b16 %v2664, %v2662
    %v2751 = vpack.c.b16 %v2665, %v2663
    %v2752 = vpack.c.b16 %v2668, %v2666
    %v2753 = vpack.c.b16 %v2669, %v2667
    %v2754 = vpack.c.b16 %v2672, %v2670
    %v2755 = vpack.c.b16 %v2673, %v2671
    %v2756 = vpack.c.b16 %v2676, %v2674
    %v2757 = vpack.c.b16 %v2677, %v2675
    %v2758 = vpack.c.b16 %v2680, %v2678
    %v2759 = vpack.c.b16 %v2681, %v2679
    %v2760 = vpack.c.b16 %v2684, %v2682
    %v2761 = vpack.c.b16 %v2685, %v2683
    %v2762 = vpack.c.b16 %v2688, %v2686
    %v2763 = vpack.c.b16 %v2689, %v2687
    %v2764 = vpack.c.b16 %v2692, %v2690
    %v2765 = vpack.c.b16 %v2693, %v2691
    %vm2838 = vcmask 523264
    %v2840 = vsel %vm2838, %v2410, 0
    %v2843 = vsel %vm2838, %v2415, 0
    %v2846 = vsel %vm2838, %v2420, 0
    %v2849 = vsel %vm2838, %v2425, 0
    %v2852 = vsel %vm2838, %v2430, 0
    %v2855 = vsel %vm2838, %v2435, 0
    %v2858 = vsel %vm2838, %v2440, 0
    %v2861 = vsel %vm2838, %v2445, 0
    %2863 = vmatprep.subr.bf16.mxu0 %v2709
    %2864 = vmatpush1.bf16.msra.mxu0 %v2708
    %2865 = vmatprep.subr.bf16.mxu0 %v2707
    %2866 = vmatpush1.bf16.msra.mxu0 %v2706
    %2867 = vmatprep.subr.bf16.mxu0 %v2705
    %2868 = vmatpush1.bf16.msra.mxu0 %v2704
    %2869 = vmatprep.subr.bf16.mxu0 %v2703
    %2870 = vmatpush1.bf16.msra.mxu0 %v2702
    %2871 = vmatprep.subr.bf16.mxu0 %v2701
    %2872 = vmatpush1.bf16.msra.mxu0 %v2700
    %2873 = vmatprep.subr.bf16.mxu0 %v2699
    %2874 = vmatpush1.bf16.msra.mxu0 %v2698
    %2875 = vmatprep.subr.bf16.mxu0 %v2697
    %2876 = vmatpush1.bf16.msra.mxu0 %v2696
    %2877 = vmatprep.subr.bf16.mxu0 %v2695
    %2878 = vmatpush1.bf16.msra.mxu0 %v2694
    %2879 = vmatprep.subr.bf16.mxu0 %v2725
    %2880 = vmatpush2.bf16.msra.mxu0 %v2724
    %2881 = vmatprep.subr.bf16.mxu0 %v2723
    %2882 = vmatpush2.bf16.msra.mxu0 %v2722
    %2883 = vmatprep.subr.bf16.mxu0 %v2721
    %2884 = vmatpush2.bf16.msra.mxu0 %v2720
    %2885 = vmatprep.subr.bf16.mxu0 %v2719
    %2886 = vmatpush2.bf16.msra.mxu0 %v2718
    %2887 = vmatprep.subr.bf16.mxu0 %v2717
    %2888 = vmatpush2.bf16.msra.mxu0 %v2716
    %2889 = vmatprep.subr.bf16.mxu0 %v2715
    %2890 = vmatpush2.bf16.msra.mxu0 %v2714
    %2891 = vmatprep.subr.bf16.mxu0 %v2713
    %2892 = vmatpush2.bf16.msra.mxu0 %v2712
    %2893 = vmatprep.subr.bf16.mxu0 %v2711
    %2894 = vmatpush2.bf16.msra.mxu0 %v2710
    %2895 = vmatprep.mubr.bf16.mxu0 %v2407
    %2896 = vmatmul.mubr.bf16.gmra.mxu0 %v2406
    %v2897 = vpop.f32.mrf.mxu0
    %v2898 = vadd.f32 %v2271, %v2897
    %v2899 = vpop.f32.mrf.mxu0
    %v2900 = vadd.f32 %v2275, %v2899
    %v2901 = vpop.f32.mrf.mxu0
    %v2902 = vadd.f32 %v2271, %v2901
    %v2903 = vpop.f32.mrf.mxu0
    %v2904 = vadd.f32 %v2275, %v2903
    %2905 = vmatprep.mubr.bf16.mxu0 %v2412
    %2906 = vmatmul.mubr.bf16.gmra.mxu0 %v2411
    %v2907 = vpop.f32.mrf.mxu0
    %v2908 = vadd.f32 %v2271, %v2907
    %v2909 = vpop.f32.mrf.mxu0
    %v2910 = vadd.f32 %v2275, %v2909
    %v2911 = vpop.f32.mrf.mxu0
    %v2912 = vadd.f32 %v2271, %v2911
    %v2913 = vpop.f32.mrf.mxu0
    %v2914 = vadd.f32 %v2275, %v2913
    %2915 = vmatprep.mubr.bf16.mxu0 %v2417
    %2916 = vmatmul.mubr.bf16.gmra.mxu0 %v2416
    %v2917 = vpop.f32.mrf.mxu0
    %v2918 = vadd.f32 %v2271, %v2917
    %v2919 = vpop.f32.mrf.mxu0
    %v2920 = vadd.f32 %v2275, %v2919
    %v2921 = vpop.f32.mrf.mxu0
    %v2922 = vadd.f32 %v2271, %v2921
    %v2923 = vpop.f32.mrf.mxu0
    %v2924 = vadd.f32 %v2275, %v2923
    %2925 = vmatprep.mubr.bf16.mxu0 %v2422
    %2926 = vmatmul.mubr.bf16.gmra.mxu0 %v2421
    %v2927 = vpop.f32.mrf.mxu0
    %v2928 = vadd.f32 %v2271, %v2927
    %v2929 = vpop.f32.mrf.mxu0
    %v2930 = vadd.f32 %v2275, %v2929
    %v2931 = vpop.f32.mrf.mxu0
    %v2932 = vadd.f32 %v2271, %v2931
    %v2933 = vpop.f32.mrf.mxu0
    %v2934 = vadd.f32 %v2275, %v2933
    %2935 = vmatprep.mubr.bf16.mxu0 %v2427
    %2936 = vmatmul.mubr.bf16.gmra.mxu0 %v2426
    %v2937 = vpop.f32.mrf.mxu0
    %v2938 = vadd.f32 %v2271, %v2937
    %v2939 = vpop.f32.mrf.mxu0
    %v2940 = vadd.f32 %v2275, %v2939
    %v2941 = vpop.f32.mrf.mxu0
    %v2942 = vadd.f32 %v2271, %v2941
    %v2943 = vpop.f32.mrf.mxu0
    %v2944 = vadd.f32 %v2275, %v2943
    %2945 = vmatprep.mubr.bf16.mxu0 %v2432
    %2946 = vmatmul.mubr.bf16.gmra.mxu0 %v2431
    %v2947 = vpop.f32.mrf.mxu0
    %v2948 = vadd.f32 %v2271, %v2947
    %v2949 = vpop.f32.mrf.mxu0
    %v2950 = vadd.f32 %v2275, %v2949
    %v2951 = vpop.f32.mrf.mxu0
    %v2952 = vadd.f32 %v2271, %v2951
    %v2953 = vpop.f32.mrf.mxu0
    %v2954 = vadd.f32 %v2275, %v2953
    %2955 = vmatprep.mubr.bf16.mxu0 %v2437
    %2956 = vmatmul.mubr.bf16.gmra.mxu0 %v2436
    %v2957 = vpop.f32.mrf.mxu0
    %v2958 = vadd.f32 %v2271, %v2957
    %v2959 = vpop.f32.mrf.mxu0
    %v2960 = vadd.f32 %v2275, %v2959
    %v2961 = vpop.f32.mrf.mxu0
    %v2962 = vadd.f32 %v2271, %v2961
    %v2963 = vpop.f32.mrf.mxu0
    %v2964 = vadd.f32 %v2275, %v2963
    %2965 = vmatprep.mubr.bf16.mxu0 %v2442
    %2966 = vmatmul.mubr.bf16.gmra.mxu0 %v2441
    %v2967 = vpop.f32.mrf.mxu0
    %v2968 = vadd.f32 %v2271, %v2967
    %v2969 = vpop.f32.mrf.mxu0
    %v2970 = vadd.f32 %v2275, %v2969
    %v2971 = vpop.f32.mrf.mxu0
    %v2972 = vadd.f32 %v2271, %v2971
    %v2973 = vpop.f32.mrf.mxu0
    %v2974 = vadd.f32 %v2275, %v2973
    %2975 = vdwg.mxu0
    %2976 = vmatprep.subr.bf16.mxu0 %v2741
    %2977 = vmatpush1.bf16.msra.mxu0 %v2740
    %2978 = vmatprep.subr.bf16.mxu0 %v2739
    %2979 = vmatpush1.bf16.msra.mxu0 %v2738
    %2980 = vmatprep.subr.bf16.mxu0 %v2737
    %2981 = vmatpush1.bf16.msra.mxu0 %v2736
    %2982 = vmatprep.subr.bf16.mxu0 %v2735
    %2983 = vmatpush1.bf16.msra.mxu0 %v2734
    %2984 = vmatprep.subr.bf16.mxu0 %v2733
    %2985 = vmatpush1.bf16.msra.mxu0 %v2732
    %2986 = vmatprep.subr.bf16.mxu0 %v2731
    %2987 = vmatpush1.bf16.msra.mxu0 %v2730
    %2988 = vmatprep.subr.bf16.mxu0 %v2729
    %2989 = vmatpush1.bf16.msra.mxu0 %v2728
    %2990 = vmatprep.subr.bf16.mxu0 %v2727
    %2991 = vmatpush1.bf16.msra.mxu0 %v2726
    %2992 = vmatprep.subr.bf16.mxu0 %v2757
    %2993 = vmatpush2.bf16.msra.mxu0 %v2756
    %2994 = vmatprep.subr.bf16.mxu0 %v2755
    %2995 = vmatpush2.bf16.msra.mxu0 %v2754
    %2996 = vmatprep.subr.bf16.mxu0 %v2753
    %2997 = vmatpush2.bf16.msra.mxu0 %v2752
    %2998 = vmatprep.subr.bf16.mxu0 %v2751
    %2999 = vmatpush2.bf16.msra.mxu0 %v2750
    %3000 = vmatprep.subr.bf16.mxu0 %v2749
    %3001 = vmatpush2.bf16.msra.mxu0 %v2748
    %3002 = vmatprep.subr.bf16.mxu0 %v2747
    %3003 = vmatpush2.bf16.msra.mxu0 %v2746
    %3004 = vmatprep.subr.bf16.mxu0 %v2745
    %3005 = vmatpush2.bf16.msra.mxu0 %v2744
    %3006 = vmatprep.subr.bf16.mxu0 %v2743
    %3007 = vmatpush2.bf16.msra.mxu0 %v2742
    %3008 = vmatprep.mubr.bf16.mxu0 %v2409
    %3009 = vmatmul.mubr.bf16.gmra.mxu0 %v2408
    %v3010 = vpop.f32.mrf.mxu0
    %v3011 = vadd.f32 %v2898, %v3010
    %v3012 = vpop.f32.mrf.mxu0
    %v3013 = vadd.f32 %v2900, %v3012
    %v3014 = vpop.f32.mrf.mxu0
    %v3015 = vadd.f32 %v2902, %v3014
    %v3016 = vpop.f32.mrf.mxu0
    %v3017 = vadd.f32 %v2904, %v3016
    %3018 = vmatprep.mubr.bf16.mxu0 %v2414
    %3019 = vmatmul.mubr.bf16.gmra.mxu0 %v2413
    %v3020 = vpop.f32.mrf.mxu0
    %v3021 = vadd.f32 %v2908, %v3020
    %v3022 = vpop.f32.mrf.mxu0
    %v3023 = vadd.f32 %v2910, %v3022
    %v3024 = vpop.f32.mrf.mxu0
    %v3025 = vadd.f32 %v2912, %v3024
    %v3026 = vpop.f32.mrf.mxu0
    %v3027 = vadd.f32 %v2914, %v3026
    %3028 = vmatprep.mubr.bf16.mxu0 %v2419
    %3029 = vmatmul.mubr.bf16.gmra.mxu0 %v2418
    %v3030 = vpop.f32.mrf.mxu0
    %v3031 = vadd.f32 %v2918, %v3030
    %v3032 = vpop.f32.mrf.mxu0
    %v3033 = vadd.f32 %v2920, %v3032
    %v3034 = vpop.f32.mrf.mxu0
    %v3035 = vadd.f32 %v2922, %v3034
    %v3036 = vpop.f32.mrf.mxu0
    %v3037 = vadd.f32 %v2924, %v3036
    %3038 = vmatprep.mubr.bf16.mxu0 %v2424
    %3039 = vmatmul.mubr.bf16.gmra.mxu0 %v2423
    %v3040 = vpop.f32.mrf.mxu0
    %v3041 = vadd.f32 %v2928, %v3040
    %v3042 = vpop.f32.mrf.mxu0
    %v3043 = vadd.f32 %v2930, %v3042
    %v3044 = vpop.f32.mrf.mxu0
    %v3045 = vadd.f32 %v2932, %v3044
    %v3046 = vpop.f32.mrf.mxu0
    %v3047 = vadd.f32 %v2934, %v3046
    %3048 = vmatprep.mubr.bf16.mxu0 %v2429
    %3049 = vmatmul.mubr.bf16.gmra.mxu0 %v2428
    %v3050 = vpop.f32.mrf.mxu0
    %v3051 = vadd.f32 %v2938, %v3050
    %v3052 = vpop.f32.mrf.mxu0
    %v3053 = vadd.f32 %v2940, %v3052
    %v3054 = vpop.f32.mrf.mxu0
    %v3055 = vadd.f32 %v2942, %v3054
    %v3056 = vpop.f32.mrf.mxu0
    %v3057 = vadd.f32 %v2944, %v3056
    %3058 = vmatprep.mubr.bf16.mxu0 %v2434
    %3059 = vmatmul.mubr.bf16.gmra.mxu0 %v2433
    %v3060 = vpop.f32.mrf.mxu0
    %v3061 = vadd.f32 %v2948, %v3060
    %v3062 = vpop.f32.mrf.mxu0
    %v3063 = vadd.f32 %v2950, %v3062
    %v3064 = vpop.f32.mrf.mxu0
    %v3065 = vadd.f32 %v2952, %v3064
    %v3066 = vpop.f32.mrf.mxu0
    %v3067 = vadd.f32 %v2954, %v3066
    %3068 = vmatprep.mubr.bf16.mxu0 %v2439
    %3069 = vmatmul.mubr.bf16.gmra.mxu0 %v2438
    %v3070 = vpop.f32.mrf.mxu0
    %v3071 = vadd.f32 %v2958, %v3070
    %v3072 = vpop.f32.mrf.mxu0
    %v3073 = vadd.f32 %v2960, %v3072
    %v3074 = vpop.f32.mrf.mxu0
    %v3075 = vadd.f32 %v2962, %v3074
    %v3076 = vpop.f32.mrf.mxu0
    %v3077 = vadd.f32 %v2964, %v3076
    %3078 = vmatprep.mubr.bf16.mxu0 %v2444
    %3079 = vmatmul.mubr.bf16.gmra.mxu0 %v2443
    %v3080 = vpop.f32.mrf.mxu0
    %v3081 = vadd.f32 %v2968, %v3080
    %v3082 = vpop.f32.mrf.mxu0
    %v3083 = vadd.f32 %v2970, %v3082
    %v3084 = vpop.f32.mrf.mxu0
    %v3085 = vadd.f32 %v2972, %v3084
    %v3086 = vpop.f32.mrf.mxu0
    %v3087 = vadd.f32 %v2974, %v3086
    %3088 = vdwg.mxu0
    %3089 = vmatprep.subr.bf16.mxu0 0
    %3090 = vmatpush1.bf16.msra.mxu0 0
    %3091 = vmatprep.subr.bf16.mxu0 0
    %3092 = vmatpush1.bf16.msra.mxu0 0
    %3093 = vmatprep.subr.bf16.mxu0 0
    %3094 = vmatpush1.bf16.msra.mxu0 0
    %3095 = vmatprep.subr.bf16.mxu0 0
    %3096 = vmatpush1.bf16.msra.mxu0 0
    %3097 = vmatprep.subr.bf16.mxu0 %v2765
    %3098 = vmatpush1.bf16.msra.mxu0 %v2764
    %3099 = vmatprep.subr.bf16.mxu0 %v2763
    %3100 = vmatpush1.bf16.msra.mxu0 %v2762
    %3101 = vmatprep.subr.bf16.mxu0 %v2761
    %3102 = vmatpush1.bf16.msra.mxu0 %v2760
    %3103 = vmatprep.subr.bf16.mxu0 %v2759
    %3104 = vmatpush1.bf16.msra.mxu0 %v2758
    %3105 = vmatprep.subr.bf16.mxu0 0
    %3106 = vmatpush2.bf16.msra.mxu0 0
    %3107 = vmatprep.subr.bf16.mxu0 0
    %3108 = vmatpush2.bf16.msra.mxu0 0
    %3109 = vmatprep.subr.bf16.mxu0 0
    %3110 = vmatpush2.bf16.msra.mxu0 0
    %3111 = vmatprep.subr.bf16.mxu0 0
    %3112 = vmatpush2.bf16.msra.mxu0 0
    %3113 = vmatprep.subr.bf16.mxu0 0
    %3114 = vmatpush2.bf16.msra.mxu0 0
    %3115 = vmatprep.subr.bf16.mxu0 0
    %3116 = vmatpush2.bf16.msra.mxu0 0
    %3117 = vmatprep.subr.bf16.mxu0 0
    %3118 = vmatpush2.bf16.msra.mxu0 0
    %3119 = vmatprep.subr.bf16.mxu0 0
    %3120 = vmatpush2.bf16.msra.mxu0 0
    %3121 = vmatprep.mubr.bf16.mxu0 0
    %3122 = vmatmul.mubr.bf16.gmra.mxu0 %v2840
    %v3123 = vpop.f32.mrf.mxu0
    %v3124 = vadd.f32 %v3011, %v3123
    %v3125 = vpop.f32.mrf.mxu0
    %v3126 = vadd.f32 %v3013, %v3125
    %v3127 = vpop.f32.mrf.mxu0
    %v3128 = vadd.f32 %v3015, %v3127
    %v3129 = vpop.f32.mrf.mxu0
    %v3130 = vadd.f32 %v3017, %v3129
    %3131 = vmatprep.mubr.bf16.mxu0 0
    %3132 = vmatmul.mubr.bf16.gmra.mxu0 %v2843
    %v3133 = vpop.f32.mrf.mxu0
    %v3134 = vadd.f32 %v3021, %v3133
    %v3135 = vpop.f32.mrf.mxu0
    %v3136 = vadd.f32 %v3023, %v3135
    %v3137 = vpop.f32.mrf.mxu0
    %v3138 = vadd.f32 %v3025, %v3137
    %v3139 = vpop.f32.mrf.mxu0
    %v3140 = vadd.f32 %v3027, %v3139
    %3141 = vmatprep.mubr.bf16.mxu0 0
    %3142 = vmatmul.mubr.bf16.gmra.mxu0 %v2846
    %v3143 = vpop.f32.mrf.mxu0
    %v3144 = vadd.f32 %v3031, %v3143
    %v3145 = vpop.f32.mrf.mxu0
    %v3146 = vadd.f32 %v3033, %v3145
    %v3147 = vpop.f32.mrf.mxu0
    %v3148 = vadd.f32 %v3035, %v3147
    %v3149 = vpop.f32.mrf.mxu0
    %v3150 = vadd.f32 %v3037, %v3149
    %3151 = vmatprep.mubr.bf16.mxu0 0
    %3152 = vmatmul.mubr.bf16.gmra.mxu0 %v2849
    %v3153 = vpop.f32.mrf.mxu0
    %v3154 = vadd.f32 %v3041, %v3153
    %v3155 = vpop.f32.mrf.mxu0
    %v3156 = vadd.f32 %v3043, %v3155
    %v3157 = vpop.f32.mrf.mxu0
    %v3158 = vadd.f32 %v3045, %v3157
    %v3159 = vpop.f32.mrf.mxu0
    %v3160 = vadd.f32 %v3047, %v3159
    %3161 = vmatprep.mubr.bf16.mxu0 0
    %3162 = vmatmul.mubr.bf16.gmra.mxu0 %v2852
    %v3163 = vpop.f32.mrf.mxu0
    %v3164 = vadd.f32 %v3051, %v3163
    %v3165 = vpop.f32.mrf.mxu0
    %v3166 = vadd.f32 %v3053, %v3165
    %v3167 = vpop.f32.mrf.mxu0
    %v3168 = vadd.f32 %v3055, %v3167
    %v3169 = vpop.f32.mrf.mxu0
    %v3170 = vadd.f32 %v3057, %v3169
    %3171 = vmatprep.mubr.bf16.mxu0 0
    %3172 = vmatmul.mubr.bf16.gmra.mxu0 %v2855
    %v3173 = vpop.f32.mrf.mxu0
    %v3174 = vadd.f32 %v3061, %v3173
    %v3175 = vpop.f32.mrf.mxu0
    %v3176 = vadd.f32 %v3063, %v3175
    %v3177 = vpop.f32.mrf.mxu0
    %v3178 = vadd.f32 %v3065, %v3177
    %v3179 = vpop.f32.mrf.mxu0
    %v3180 = vadd.f32 %v3067, %v3179
    %3181 = vmatprep.mubr.bf16.mxu0 0
    %3182 = vmatmul.mubr.bf16.gmra.mxu0 %v2858
    %v3183 = vpop.f32.mrf.mxu0
    %v3184 = vadd.f32 %v3071, %v3183
    %v3185 = vpop.f32.mrf.mxu0
    %v3186 = vadd.f32 %v3073, %v3185
    %v3187 = vpop.f32.mrf.mxu0
    %v3188 = vadd.f32 %v3075, %v3187
    %v3189 = vpop.f32.mrf.mxu0
    %v3190 = vadd.f32 %v3077, %v3189
    %3191 = vmatprep.mubr.bf16.mxu0 0
    %3192 = vmatmul.mubr.bf16.gmra.mxu0 %v2861
    %v3193 = vpop.f32.mrf.mxu0
    %v3194 = vadd.f32 %v3081, %v3193
    %v3195 = vpop.f32.mrf.mxu0
    %v3196 = vadd.f32 %v3083, %v3195
    %v3197 = vpop.f32.mrf.mxu0
    %v3198 = vadd.f32 %v3085, %v3197
    %v3199 = vpop.f32.mrf.mxu0
    %v3200 = vadd.f32 %v3087, %v3199
    %3201 = vdwg.mxu0
    %v3202 = vmax.f32 %v3124, 0.0
    %v3203 = vmax.f32 %v3126, 0.0
    %v3204 = vmax.f32 %v3128, 0.0
    %v3205 = vmax.f32 %v3130, 0.0
    %v3206 = vmax.f32 %v3134, 0.0
    %v3207 = vmax.f32 %v3136, 0.0
    %v3208 = vmax.f32 %v3138, 0.0
    %v3209 = vmax.f32 %v3140, 0.0
    %v3210 = vmax.f32 %v3144, 0.0
    %v3211 = vmax.f32 %v3146, 0.0
    %v3212 = vmax.f32 %v3148, 0.0
    %v3213 = vmax.f32 %v3150, 0.0
    %v3214 = vmax.f32 %v3154, 0.0
    %v3215 = vmax.f32 %v3156, 0.0
    %v3216 = vmax.f32 %v3158, 0.0
    %v3217 = vmax.f32 %v3160, 0.0
    %v3218 = vmax.f32 %v3164, 0.0
    %v3219 = vmax.f32 %v3166, 0.0
    %v3220 = vmax.f32 %v3168, 0.0
    %v3221 = vmax.f32 %v3170, 0.0
    %v3222 = vmax.f32 %v3174, 0.0
    %v3223 = vmax.f32 %v3176, 0.0
    %v3224 = vmax.f32 %v3178, 0.0
    %v3225 = vmax.f32 %v3180, 0.0
    %v3226 = vmax.f32 %v3184, 0.0
    %v3227 = vmax.f32 %v3186, 0.0
    %v3228 = vmax.f32 %v3188, 0.0
    %v3229 = vmax.f32 %v3190, 0.0
    %v3230 = vmax.f32 %v3194, 0.0
    %v3231 = vmax.f32 %v3196, 0.0
    %v3232 = vmax.f32 %v3198, 0.0
    %v3233 = vmax.f32 %v3200, 0.0
    %v3234 = vpack.c.bf16 %v3204, %v3202
    %v3235 = vpack.c.bf16 %v3205, %v3203
    %v3236 = vpack.c.bf16 %v3208, %v3206
    %v3237 = vpack.c.bf16 %v3209, %v3207
    %v3238 = vpack.c.bf16 %v3212, %v3210
    %v3239 = vpack.c.bf16 %v3213, %v3211
    %v3240 = vpack.c.bf16 %v3216, %v3214
    %v3241 = vpack.c.bf16 %v3217, %v3215
    %v3242 = vpack.c.bf16 %v3220, %v3218
    %v3243 = vpack.c.bf16 %v3221, %v3219
    %v3244 = vpack.c.bf16 %v3224, %v3222
    %v3245 = vpack.c.bf16 %v3225, %v3223
    %v3246 = vpack.c.bf16 %v3228, %v3226
    %v3247 = vpack.c.bf16 %v3229, %v3227
    %v3248 = vpack.c.bf16 %v3232, %v3230
    %v3249 = vpack.c.bf16 %v3233, %v3231
    %v3250 = vld [vmem:[#allocation6] sm:$0xff]
    %v3251 = vld [vmem:[#allocation6 + $0x8] sm:$0xff]
    %v3252 = vld [vmem:[#allocation6 + $0x10] sm:$0xff]
    %v3253 = vld [vmem:[#allocation6 + $0x18] sm:$0xff]
    %v3254 = vld [vmem:[#allocation6 + $0x20] sm:$0xff]
    %v3255 = vld [vmem:[#allocation6 + $0x28] sm:$0xff]
    %v3256 = vld [vmem:[#allocation6 + $0x30] sm:$0xff]
    %v3257 = vld [vmem:[#allocation6 + $0x38] sm:$0xff]
    %v3258 = vld [vmem:[#allocation6 + $0x40] sm:$0xff]
    %v3259 = vld [vmem:[#allocation6 + $0x48] sm:$0xff]
    %v3260 = vld [vmem:[#allocation6 + $0x50] sm:$0xff]
    %v3261 = vld [vmem:[#allocation6 + $0x58] sm:$0xff]
    %v3262 = vld [vmem:[#allocation6 + $0x60] sm:$0xff]
    %v3263 = vld [vmem:[#allocation6 + $0x68] sm:$0xff]
    %v3264 = vld [vmem:[#allocation6 + $0x70] sm:$0xff]
    %v3265 = vld [vmem:[#allocation6 + $0x78] sm:$0xff]
    %v3266 = vld [vmem:[#allocation6 + $0x80] sm:$0xff]
    %v3267 = vld [vmem:[#allocation6 + $0x88] sm:$0xff]
    %v3268 = vld [vmem:[#allocation6 + $0x90] sm:$0xff]
    %v3269 = vld [vmem:[#allocation6 + $0x98] sm:$0xff]
    %v3270 = vld [vmem:[#allocation6 + $0xa0] sm:$0xff]
    %v3271 = vld [vmem:[#allocation6 + $0xa8] sm:$0xff]
    %v3272 = vld [vmem:[#allocation6 + $0xb0] sm:$0xff]
    %v3273 = vld [vmem:[#allocation6 + $0xb8] sm:$0xff]
    %v3274 = vld [vmem:[#allocation6 + $0xc0] sm:$0xff]
    %v3275 = vld [vmem:[#allocation6 + $0xc8] sm:$0xff]
    %v3276 = vld [vmem:[#allocation6 + $0xd0] sm:$0xff]
    %v3277 = vld [vmem:[#allocation6 + $0xd8] sm:$0xff]
    %v3278 = vld [vmem:[#allocation6 + $0xe0] sm:$0xff]
    %v3279 = vld [vmem:[#allocation6 + $0xe8] sm:$0xff]
    %v3280 = vld [vmem:[#allocation6 + $0xf0] sm:$0xff]
    %v3281 = vld [vmem:[#allocation6 + $0xf8] sm:$0xff]
    %v3282 = vld [vmem:[#allocation6 + $0x100] sm:$0xff]
    %v3283 = vld [vmem:[#allocation6 + $0x108] sm:$0xff]
    %v3284 = vld [vmem:[#allocation6 + $0x110] sm:$0xff]
    %v3285 = vld [vmem:[#allocation6 + $0x118] sm:$0xff]
    %v3286 = vld [vmem:[#allocation6 + $0x120] sm:$0xff]
    %v3287 = vld [vmem:[#allocation6 + $0x128] sm:$0xff]
    %v3288 = vld [vmem:[#allocation6 + $0x130] sm:$0xff]
    %v3289 = vld [vmem:[#allocation6 + $0x138] sm:$0xff]
    %v3290 = vld [vmem:[#allocation6 + $0x140] sm:$0xff]
    %v3291 = vld [vmem:[#allocation6 + $0x148] sm:$0xff]
    %v3292 = vld [vmem:[#allocation6 + $0x150] sm:$0xff]
    %v3293 = vld [vmem:[#allocation6 + $0x158] sm:$0xff]
    %v3294 = vld [vmem:[#allocation6 + $0x160] sm:$0xff]
    %v3295 = vld [vmem:[#allocation6 + $0x168] sm:$0xff]
    %v3296 = vld [vmem:[#allocation6 + $0x170] sm:$0xff]
    %v3297 = vld [vmem:[#allocation6 + $0x178] sm:$0xff]
    %v3298 = vld [vmem:[#allocation6 + $0x180] sm:$0xff]
    %v3299 = vld [vmem:[#allocation6 + $0x188] sm:$0xff]
    %v3300 = vld [vmem:[#allocation6 + $0x190] sm:$0xff]
    %v3301 = vld [vmem:[#allocation6 + $0x198] sm:$0xff]
    %v3302 = vld [vmem:[#allocation6 + $0x1a0] sm:$0xff]
    %v3303 = vld [vmem:[#allocation6 + $0x1a8] sm:$0xff]
    %v3304 = vld [vmem:[#allocation6 + $0x1b0] sm:$0xff]
    %v3305 = vld [vmem:[#allocation6 + $0x1b8] sm:$0xff]
    %v3306 = vld [vmem:[#allocation6 + $0x1c0] sm:$0xff]
    %v3307 = vld [vmem:[#allocation6 + $0x1c8] sm:$0xff]
    %v3308 = vld [vmem:[#allocation6 + $0x1d0] sm:$0xff]
    %v3309 = vld [vmem:[#allocation6 + $0x1d8] sm:$0xff]
    %v3310 = vld [vmem:[#allocation6 + $0x1e0] sm:$0xff]
    %v3311 = vld [vmem:[#allocation6 + $0x1e8] sm:$0xff]
    %v3312 = vld [vmem:[#allocation6 + $0x1f0] sm:$0xff]
    %v3313 = vld [vmem:[#allocation6 + $0x1f8] sm:$0xff]
    %v3314 = vld [vmem:[#allocation6 + $0x200] sm:$0xff]
    %v3315 = vld [vmem:[#allocation6 + $0x208] sm:$0xff]
    %v3316 = vld [vmem:[#allocation6 + $0x210] sm:$0xff]
    %v3317 = vld [vmem:[#allocation6 + $0x218] sm:$0xff]
    %v3318 = vld [vmem:[#allocation6 + $0x220] sm:$0xff]
    %v3319 = vld [vmem:[#allocation6 + $0x228] sm:$0xff]
    %v3320 = vld [vmem:[#allocation6 + $0x230] sm:$0xff]
    %v3321 = vld [vmem:[#allocation6 + $0x238] sm:$0xff]
    %v3322 = vld [vmem:[#allocation6 + $0x240] sm:$0xff]
    %v3323 = vld [vmem:[#allocation6 + $0x248] sm:$0xff]
    %v3324 = vld [vmem:[#allocation6 + $0x250] sm:$0xff]
    %v3325 = vld [vmem:[#allocation6 + $0x258] sm:$0xff]
    %v3326 = vld [vmem:[#allocation6 + $0x260] sm:$0xff]
    %v3327 = vld [vmem:[#allocation6 + $0x268] sm:$0xff]
    %v3328 = vld [vmem:[#allocation6 + $0x270] sm:$0xff]
    %v3329 = vld [vmem:[#allocation6 + $0x278] sm:$0xff]
    %v3330 = vld [vmem:[#allocation6 + $0x280] sm:$0xff]
    %v3331 = vld [vmem:[#allocation6 + $0x288] sm:$0xff]
    %v3332 = vld [vmem:[#allocation6 + $0x290] sm:$0xff]
    %v3333 = vld [vmem:[#allocation6 + $0x298] sm:$0xff]
    %v3334 = vld [vmem:[#allocation6 + $0x2a0] sm:$0xff]
    %v3335 = vld [vmem:[#allocation6 + $0x2a8] sm:$0xff]
    %v3336 = vld [vmem:[#allocation6 + $0x2b0] sm:$0xff]
    %v3337 = vld [vmem:[#allocation6 + $0x2b8] sm:$0xff]
    %v3338 = vld [vmem:[#allocation6 + $0x2c0] sm:$0xff]
    %v3339 = vld [vmem:[#allocation6 + $0x2c8] sm:$0xff]
    %v3340 = vld [vmem:[#allocation6 + $0x2d0] sm:$0xff]
    %v3341 = vld [vmem:[#allocation6 + $0x2d8] sm:$0xff]
    %v3342 = vld [vmem:[#allocation6 + $0x2e0] sm:$0xff]
    %v3343 = vld [vmem:[#allocation6 + $0x2e8] sm:$0xff]
    %v3344 = vld [vmem:[#allocation6 + $0x2f0] sm:$0xff]
    %v3345 = vld [vmem:[#allocation6 + $0x2f8] sm:$0xff]
    %v3346 = vld [vmem:[#allocation6 + $0x300] sm:$0xff]
    %v3347 = vld [vmem:[#allocation6 + $0x308] sm:$0xff]
    %v3348 = vld [vmem:[#allocation6 + $0x310] sm:$0xff]
    %v3349 = vld [vmem:[#allocation6 + $0x318] sm:$0xff]
    %v3350 = vld [vmem:[#allocation6 + $0x320] sm:$0xff]
    %v3351 = vld [vmem:[#allocation6 + $0x328] sm:$0xff]
    %v3352 = vld [vmem:[#allocation6 + $0x330] sm:$0xff]
    %v3353 = vld [vmem:[#allocation6 + $0x338] sm:$0xff]
    %v3354 = vld [vmem:[#allocation6 + $0x340] sm:$0xff]
    %v3355 = vld [vmem:[#allocation6 + $0x348] sm:$0xff]
    %v3356 = vld [vmem:[#allocation6 + $0x350] sm:$0xff]
    %v3357 = vld [vmem:[#allocation6 + $0x358] sm:$0xff]
    %v3358 = vld [vmem:[#allocation6 + $0x360] sm:$0xff]
    %v3359 = vld [vmem:[#allocation6 + $0x368] sm:$0xff]
    %v3360 = vld [vmem:[#allocation6 + $0x370] sm:$0xff]
    %v3361 = vld [vmem:[#allocation6 + $0x378] sm:$0xff]
    %v3362 = vld [vmem:[#allocation6 + $0x380] sm:$0xff]
    %v3363 = vld [vmem:[#allocation6 + $0x388] sm:$0xff]
    %v3364 = vld [vmem:[#allocation6 + $0x390] sm:$0xff]
    %v3365 = vld [vmem:[#allocation6 + $0x398] sm:$0xff]
    %v3366 = vld [vmem:[#allocation6 + $0x3a0] sm:$0xff]
    %v3367 = vld [vmem:[#allocation6 + $0x3a8] sm:$0xff]
    %v3368 = vld [vmem:[#allocation6 + $0x3b0] sm:$0xff]
    %v3369 = vld [vmem:[#allocation6 + $0x3b8] sm:$0xff]
    %v3370 = vld [vmem:[#allocation6 + $0x3c0] sm:$0xff]
    %v3371 = vld [vmem:[#allocation6 + $0x3c8] sm:$0xff]
    %v3372 = vld [vmem:[#allocation6 + $0x3d0] sm:$0xff]
    %v3373 = vld [vmem:[#allocation6 + $0x3d8] sm:$0xff]
    %v3374 = vld [vmem:[#allocation6 + $0x3e0] sm:$0xff]
    %v3375 = vld [vmem:[#allocation6 + $0x3e8] sm:$0xff]
    %v3376 = vld [vmem:[#allocation6 + $0x3f0] sm:$0xff]
    %v3377 = vld [vmem:[#allocation6 + $0x3f8] sm:$0xff]
    %v3378 = vld [vmem:[%s6] sm:$0xff]
    %v3380 = vlaneseq
    %v3381 = vshrl.u32 %v3380, 7
    %v3382 = vsub.s32 0, %v3381
    %v3383 = vrot.slane %v3378, %v3382
    %v3384 = vlaneseq
    %v3385 = vshrl.u32 %v3384, 7
    %v3386 = vsub.s32 1, %v3385
    %v3387 = vrot.slane %v3378, %v3386
    %v3388 = vlaneseq
    %v3389 = vshrl.u32 %v3388, 7
    %v3390 = vsub.s32 2, %v3389
    %v3391 = vrot.slane %v3378, %v3390
    %v3392 = vlaneseq
    %v3393 = vshrl.u32 %v3392, 7
    %v3394 = vsub.s32 3, %v3393
    %v3395 = vrot.slane %v3378, %v3394
    %v3396 = vlaneseq
    %v3397 = vshrl.u32 %v3396, 7
    %v3398 = vsub.s32 4, %v3397
    %v3399 = vrot.slane %v3378, %v3398
    %v3400 = vlaneseq
    %v3401 = vshrl.u32 %v3400, 7
    %v3402 = vsub.s32 5, %v3401
    %v3403 = vrot.slane %v3378, %v3402
    %v3404 = vlaneseq
    %v3405 = vshrl.u32 %v3404, 7
    %v3406 = vsub.s32 6, %v3405
    %v3407 = vrot.slane %v3378, %v3406
    %v3408 = vlaneseq
    %v3409 = vshrl.u32 %v3408, 7
    %v3410 = vsub.s32 7, %v3409
    %v3411 = vrot.slane %v3378, %v3410
    %v3548 = vunpack.c.l.b16 %v3250
    %v3549 = vunpack.c.h.b16 %v3250
    %v3550 = vunpack.c.l.b16 %v3251
    %v3551 = vunpack.c.h.b16 %v3251
    %v3552 = vunpack.c.l.b16 %v3252
    %v3553 = vunpack.c.h.b16 %v3252
    %v3554 = vunpack.c.l.b16 %v3253
    %v3555 = vunpack.c.h.b16 %v3253
    %v3556 = vunpack.c.l.b16 %v3254
    %v3557 = vunpack.c.h.b16 %v3254
    %v3558 = vunpack.c.l.b16 %v3255
    %v3559 = vunpack.c.h.b16 %v3255
    %v3560 = vunpack.c.l.b16 %v3256
    %v3561 = vunpack.c.h.b16 %v3256
    %v3562 = vunpack.c.l.b16 %v3257
    %v3563 = vunpack.c.h.b16 %v3257
    %v3564 = vunpack.c.l.b16 %v3258
    %v3565 = vunpack.c.h.b16 %v3258
    %v3566 = vunpack.c.l.b16 %v3259
    %v3567 = vunpack.c.h.b16 %v3259
    %v3568 = vunpack.c.l.b16 %v3260
    %v3569 = vunpack.c.h.b16 %v3260
    %v3570 = vunpack.c.l.b16 %v3261
    %v3571 = vunpack.c.h.b16 %v3261
    %v3572 = vunpack.c.l.b16 %v3262
    %v3573 = vunpack.c.h.b16 %v3262
    %v3574 = vunpack.c.l.b16 %v3263
    %v3575 = vunpack.c.h.b16 %v3263
    %v3576 = vunpack.c.l.b16 %v3264
    %v3577 = vunpack.c.h.b16 %v3264
    %v3578 = vunpack.c.l.b16 %v3265
    %v3579 = vunpack.c.h.b16 %v3265
    %v3580 = vunpack.c.l.b16 %v3266
    %v3581 = vunpack.c.h.b16 %v3266
    %v3582 = vunpack.c.l.b16 %v3267
    %v3583 = vunpack.c.h.b16 %v3267
    %v3584 = vunpack.c.l.b16 %v3268
    %v3585 = vunpack.c.h.b16 %v3268
    %v3586 = vunpack.c.l.b16 %v3269
    %v3587 = vunpack.c.h.b16 %v3269
    %v3588 = vunpack.c.l.b16 %v3270
    %v3589 = vunpack.c.h.b16 %v3270
    %v3590 = vunpack.c.l.b16 %v3271
    %v3591 = vunpack.c.h.b16 %v3271
    %v3592 = vunpack.c.l.b16 %v3272
    %v3593 = vunpack.c.h.b16 %v3272
    %v3594 = vunpack.c.l.b16 %v3273
    %v3595 = vunpack.c.h.b16 %v3273
    %v3596 = vunpack.c.l.b16 %v3274
    %v3597 = vunpack.c.h.b16 %v3274
    %v3598 = vunpack.c.l.b16 %v3275
    %v3599 = vunpack.c.h.b16 %v3275
    %v3600 = vunpack.c.l.b16 %v3276
    %v3601 = vunpack.c.h.b16 %v3276
    %v3602 = vunpack.c.l.b16 %v3277
    %v3603 = vunpack.c.h.b16 %v3277
    %v3604 = vunpack.c.l.b16 %v3278
    %v3605 = vunpack.c.h.b16 %v3278
    %v3606 = vunpack.c.l.b16 %v3279
    %v3607 = vunpack.c.h.b16 %v3279
    %v3608 = vunpack.c.l.b16 %v3280
    %v3609 = vunpack.c.h.b16 %v3280
    %v3610 = vunpack.c.l.b16 %v3281
    %v3611 = vunpack.c.h.b16 %v3281
    %v3612 = vunpack.c.l.b16 %v3282
    %v3613 = vunpack.c.h.b16 %v3282
    %v3614 = vunpack.c.l.b16 %v3283
    %v3615 = vunpack.c.h.b16 %v3283
    %v3616 = vunpack.c.l.b16 %v3284
    %v3617 = vunpack.c.h.b16 %v3284
    %v3618 = vunpack.c.l.b16 %v3285
    %v3619 = vunpack.c.h.b16 %v3285
    %v3620 = vunpack.c.l.b16 %v3286
    %v3621 = vunpack.c.h.b16 %v3286
    %v3622 = vunpack.c.l.b16 %v3287
    %v3623 = vunpack.c.h.b16 %v3287
    %v3624 = vunpack.c.l.b16 %v3288
    %v3625 = vunpack.c.h.b16 %v3288
    %v3626 = vunpack.c.l.b16 %v3289
    %v3627 = vunpack.c.h.b16 %v3289
    %v3628 = vunpack.c.l.b16 %v3290
    %v3629 = vunpack.c.h.b16 %v3290
    %v3630 = vunpack.c.l.b16 %v3291
    %v3631 = vunpack.c.h.b16 %v3291
    %v3632 = vunpack.c.l.b16 %v3292
    %v3633 = vunpack.c.h.b16 %v3292
    %v3634 = vunpack.c.l.b16 %v3293
    %v3635 = vunpack.c.h.b16 %v3293
    %v3636 = vunpack.c.l.b16 %v3294
    %v3637 = vunpack.c.h.b16 %v3294
    %v3638 = vunpack.c.l.b16 %v3295
    %v3639 = vunpack.c.h.b16 %v3295
    %v3640 = vunpack.c.l.b16 %v3296
    %v3641 = vunpack.c.h.b16 %v3296
    %v3642 = vunpack.c.l.b16 %v3297
    %v3643 = vunpack.c.h.b16 %v3297
    %v3644 = vunpack.c.l.b16 %v3298
    %v3645 = vunpack.c.h.b16 %v3298
    %v3646 = vunpack.c.l.b16 %v3299
    %v3647 = vunpack.c.h.b16 %v3299
    %v3648 = vunpack.c.l.b16 %v3300
    %v3649 = vunpack.c.h.b16 %v3300
    %v3650 = vunpack.c.l.b16 %v3301
    %v3651 = vunpack.c.h.b16 %v3301
    %v3652 = vunpack.c.l.b16 %v3302
    %v3653 = vunpack.c.h.b16 %v3302
    %v3654 = vunpack.c.l.b16 %v3303
    %v3655 = vunpack.c.h.b16 %v3303
    %v3656 = vunpack.c.l.b16 %v3304
    %v3657 = vunpack.c.h.b16 %v3304
    %v3658 = vunpack.c.l.b16 %v3305
    %v3659 = vunpack.c.h.b16 %v3305
    %v3660 = vunpack.c.l.b16 %v3306
    %v3661 = vunpack.c.h.b16 %v3306
    %v3662 = vunpack.c.l.b16 %v3307
    %v3663 = vunpack.c.h.b16 %v3307
    %v3664 = vunpack.c.l.b16 %v3308
    %v3665 = vunpack.c.h.b16 %v3308
    %v3666 = vunpack.c.l.b16 %v3309
    %v3667 = vunpack.c.h.b16 %v3309
    %v3668 = vunpack.c.l.b16 %v3310
    %v3669 = vunpack.c.h.b16 %v3310
    %v3670 = vunpack.c.l.b16 %v3311
    %v3671 = vunpack.c.h.b16 %v3311
    %v3672 = vunpack.c.l.b16 %v3312
    %v3673 = vunpack.c.h.b16 %v3312
    %v3674 = vunpack.c.l.b16 %v3313
    %v3675 = vunpack.c.h.b16 %v3313
    %v3676 = vunpack.c.l.b16 %v3314
    %v3677 = vunpack.c.h.b16 %v3314
    %v3678 = vunpack.c.l.b16 %v3315
    %v3679 = vunpack.c.h.b16 %v3315
    %v3680 = vunpack.c.l.b16 %v3316
    %v3681 = vunpack.c.h.b16 %v3316
    %v3682 = vunpack.c.l.b16 %v3317
    %v3683 = vunpack.c.h.b16 %v3317
    %v3684 = vunpack.c.l.b16 %v3318
    %v3685 = vunpack.c.h.b16 %v3318
    %v3686 = vunpack.c.l.b16 %v3319
    %v3687 = vunpack.c.h.b16 %v3319
    %v3688 = vunpack.c.l.b16 %v3320
    %v3689 = vunpack.c.h.b16 %v3320
    %v3690 = vunpack.c.l.b16 %v3321
    %v3691 = vunpack.c.h.b16 %v3321
    %v3692 = vunpack.c.l.b16 %v3322
    %v3693 = vunpack.c.h.b16 %v3322
    %v3694 = vunpack.c.l.b16 %v3323
    %v3695 = vunpack.c.h.b16 %v3323
    %v3696 = vunpack.c.l.b16 %v3324
    %v3697 = vunpack.c.h.b16 %v3324
    %v3698 = vunpack.c.l.b16 %v3325
    %v3699 = vunpack.c.h.b16 %v3325
    %v3700 = vunpack.c.l.b16 %v3326
    %v3701 = vunpack.c.h.b16 %v3326
    %v3702 = vunpack.c.l.b16 %v3327
    %v3703 = vunpack.c.h.b16 %v3327
    %v3704 = vunpack.c.l.b16 %v3328
    %v3705 = vunpack.c.h.b16 %v3328
    %v3706 = vunpack.c.l.b16 %v3329
    %v3707 = vunpack.c.h.b16 %v3329
    %v3708 = vunpack.c.l.b16 %v3330
    %v3709 = vunpack.c.h.b16 %v3330
    %v3710 = vunpack.c.l.b16 %v3331
    %v3711 = vunpack.c.h.b16 %v3331
    %v3712 = vunpack.c.l.b16 %v3332
    %v3713 = vunpack.c.h.b16 %v3332
    %v3714 = vunpack.c.l.b16 %v3333
    %v3715 = vunpack.c.h.b16 %v3333
    %v3716 = vunpack.c.l.b16 %v3334
    %v3717 = vunpack.c.h.b16 %v3334
    %v3718 = vunpack.c.l.b16 %v3335
    %v3719 = vunpack.c.h.b16 %v3335
    %v3720 = vunpack.c.l.b16 %v3336
    %v3721 = vunpack.c.h.b16 %v3336
    %v3722 = vunpack.c.l.b16 %v3337
    %v3723 = vunpack.c.h.b16 %v3337
    %v3724 = vunpack.c.l.b16 %v3338
    %v3725 = vunpack.c.h.b16 %v3338
    %v3726 = vunpack.c.l.b16 %v3339
    %v3727 = vunpack.c.h.b16 %v3339
    %v3728 = vunpack.c.l.b16 %v3340
    %v3729 = vunpack.c.h.b16 %v3340
    %v3730 = vunpack.c.l.b16 %v3341
    %v3731 = vunpack.c.h.b16 %v3341
    %v3732 = vunpack.c.l.b16 %v3342
    %v3733 = vunpack.c.h.b16 %v3342
    %v3734 = vunpack.c.l.b16 %v3343
    %v3735 = vunpack.c.h.b16 %v3343
    %v3736 = vunpack.c.l.b16 %v3344
    %v3737 = vunpack.c.h.b16 %v3344
    %v3738 = vunpack.c.l.b16 %v3345
    %v3739 = vunpack.c.h.b16 %v3345
    %v3740 = vunpack.c.l.b16 %v3346
    %v3741 = vunpack.c.h.b16 %v3346
    %v3742 = vunpack.c.l.b16 %v3347
    %v3743 = vunpack.c.h.b16 %v3347
    %v3744 = vunpack.c.l.b16 %v3348
    %v3745 = vunpack.c.h.b16 %v3348
    %v3746 = vunpack.c.l.b16 %v3349
    %v3747 = vunpack.c.h.b16 %v3349
    %v3748 = vunpack.c.l.b16 %v3350
    %v3749 = vunpack.c.h.b16 %v3350
    %v3750 = vunpack.c.l.b16 %v3351
    %v3751 = vunpack.c.h.b16 %v3351
    %v3752 = vunpack.c.l.b16 %v3352
    %v3753 = vunpack.c.h.b16 %v3352
    %v3754 = vunpack.c.l.b16 %v3353
    %v3755 = vunpack.c.h.b16 %v3353
    %v3756 = vunpack.c.l.b16 %v3354
    %v3757 = vunpack.c.h.b16 %v3354
    %v3758 = vunpack.c.l.b16 %v3355
    %v3759 = vunpack.c.h.b16 %v3355
    %v3760 = vunpack.c.l.b16 %v3356
    %v3761 = vunpack.c.h.b16 %v3356
    %v3762 = vunpack.c.l.b16 %v3357
    %v3763 = vunpack.c.h.b16 %v3357
    %v3764 = vunpack.c.l.b16 %v3358
    %v3765 = vunpack.c.h.b16 %v3358
    %v3766 = vunpack.c.l.b16 %v3359
    %v3767 = vunpack.c.h.b16 %v3359
    %v3768 = vunpack.c.l.b16 %v3360
    %v3769 = vunpack.c.h.b16 %v3360
    %v3770 = vunpack.c.l.b16 %v3361
    %v3771 = vunpack.c.h.b16 %v3361
    %v3772 = vunpack.c.l.b16 %v3362
    %v3773 = vunpack.c.h.b16 %v3362
    %v3774 = vunpack.c.l.b16 %v3363
    %v3775 = vunpack.c.h.b16 %v3363
    %v3776 = vunpack.c.l.b16 %v3364
    %v3777 = vunpack.c.h.b16 %v3364
    %v3778 = vunpack.c.l.b16 %v3365
    %v3779 = vunpack.c.h.b16 %v3365
    %v3780 = vunpack.c.l.b16 %v3366
    %v3781 = vunpack.c.h.b16 %v3366
    %v3782 = vunpack.c.l.b16 %v3367
    %v3783 = vunpack.c.h.b16 %v3367
    %v3784 = vunpack.c.l.b16 %v3368
    %v3785 = vunpack.c.h.b16 %v3368
    %v3786 = vunpack.c.l.b16 %v3369
    %v3787 = vunpack.c.h.b16 %v3369
    %v3788 = vunpack.c.l.b16 %v3370
    %v3789 = vunpack.c.h.b16 %v3370
    %v3790 = vunpack.c.l.b16 %v3371
    %v3791 = vunpack.c.h.b16 %v3371
    %v3792 = vunpack.c.l.b16 %v3372
    %v3793 = vunpack.c.h.b16 %v3372
    %v3794 = vunpack.c.l.b16 %v3373
    %v3795 = vunpack.c.h.b16 %v3373
    %v3796 = vunpack.c.l.b16 %v3374
    %v3797 = vunpack.c.h.b16 %v3374
    %v3798 = vunpack.c.l.b16 %v3375
    %v3799 = vunpack.c.h.b16 %v3375
    %v3800 = vunpack.c.l.b16 %v3376
    %v3801 = vunpack.c.h.b16 %v3376
    %v3802 = vunpack.c.l.b16 %v3377
    %v3803 = vunpack.c.h.b16 %v3377
    %v3804 = vpack.c.b16 %v3556, %v3548
    %v3805 = vpack.c.b16 %v3557, %v3549
    %v3806 = vpack.c.b16 %v3558, %v3550
    %v3807 = vpack.c.b16 %v3559, %v3551
    %v3808 = vpack.c.b16 %v3560, %v3552
    %v3809 = vpack.c.b16 %v3561, %v3553
    %v3810 = vpack.c.b16 %v3562, %v3554
    %v3811 = vpack.c.b16 %v3563, %v3555
    %v3812 = vpack.c.b16 %v3572, %v3564
    %v3813 = vpack.c.b16 %v3573, %v3565
    %v3814 = vpack.c.b16 %v3574, %v3566
    %v3815 = vpack.c.b16 %v3575, %v3567
    %v3816 = vpack.c.b16 %v3576, %v3568
    %v3817 = vpack.c.b16 %v3577, %v3569
    %v3818 = vpack.c.b16 %v3578, %v3570
    %v3819 = vpack.c.b16 %v3579, %v3571
    %v3820 = vpack.c.b16 %v3588, %v3580
    %v3821 = vpack.c.b16 %v3589, %v3581
    %v3822 = vpack.c.b16 %v3590, %v3582
    %v3823 = vpack.c.b16 %v3591, %v3583
    %v3824 = vpack.c.b16 %v3592, %v3584
    %v3825 = vpack.c.b16 %v3593, %v3585
    %v3826 = vpack.c.b16 %v3594, %v3586
    %v3827 = vpack.c.b16 %v3595, %v3587
    %v3828 = vpack.c.b16 %v3604, %v3596
    %v3829 = vpack.c.b16 %v3605, %v3597
    %v3830 = vpack.c.b16 %v3606, %v3598
    %v3831 = vpack.c.b16 %v3607, %v3599
    %v3832 = vpack.c.b16 %v3608, %v3600
    %v3833 = vpack.c.b16 %v3609, %v3601
    %v3834 = vpack.c.b16 %v3610, %v3602
    %v3835 = vpack.c.b16 %v3611, %v3603
    %v3836 = vpack.c.b16 %v3620, %v3612
    %v3837 = vpack.c.b16 %v3621, %v3613
    %v3838 = vpack.c.b16 %v3622, %v3614
    %v3839 = vpack.c.b16 %v3623, %v3615
    %v3840 = vpack.c.b16 %v3624, %v3616
    %v3841 = vpack.c.b16 %v3625, %v3617
    %v3842 = vpack.c.b16 %v3626, %v3618
    %v3843 = vpack.c.b16 %v3627, %v3619
    %v3844 = vpack.c.b16 %v3636, %v3628
    %v3845 = vpack.c.b16 %v3637, %v3629
    %v3846 = vpack.c.b16 %v3638, %v3630
    %v3847 = vpack.c.b16 %v3639, %v3631
    %v3848 = vpack.c.b16 %v3640, %v3632
    %v3849 = vpack.c.b16 %v3641, %v3633
    %v3850 = vpack.c.b16 %v3642, %v3634
    %v3851 = vpack.c.b16 %v3643, %v3635
    %v3852 = vpack.c.b16 %v3652, %v3644
    %v3853 = vpack.c.b16 %v3653, %v3645
    %v3854 = vpack.c.b16 %v3654, %v3646
    %v3855 = vpack.c.b16 %v3655, %v3647
    %v3856 = vpack.c.b16 %v3656, %v3648
    %v3857 = vpack.c.b16 %v3657, %v3649
    %v3858 = vpack.c.b16 %v3658, %v3650
    %v3859 = vpack.c.b16 %v3659, %v3651
    %v3860 = vpack.c.b16 %v3668, %v3660
    %v3861 = vpack.c.b16 %v3669, %v3661
    %v3862 = vpack.c.b16 %v3670, %v3662
    %v3863 = vpack.c.b16 %v3671, %v3663
    %v3864 = vpack.c.b16 %v3672, %v3664
    %v3865 = vpack.c.b16 %v3673, %v3665
    %v3866 = vpack.c.b16 %v3674, %v3666
    %v3867 = vpack.c.b16 %v3675, %v3667
    %v3868 = vpack.c.b16 %v3684, %v3676
    %v3869 = vpack.c.b16 %v3685, %v3677
    %v3870 = vpack.c.b16 %v3686, %v3678
    %v3871 = vpack.c.b16 %v3687, %v3679
    %v3872 = vpack.c.b16 %v3688, %v3680
    %v3873 = vpack.c.b16 %v3689, %v3681
    %v3874 = vpack.c.b16 %v3690, %v3682
    %v3875 = vpack.c.b16 %v3691, %v3683
    %v3876 = vpack.c.b16 %v3700, %v3692
    %v3877 = vpack.c.b16 %v3701, %v3693
    %v3878 = vpack.c.b16 %v3702, %v3694
    %v3879 = vpack.c.b16 %v3703, %v3695
    %v3880 = vpack.c.b16 %v3704, %v3696
    %v3881 = vpack.c.b16 %v3705, %v3697
    %v3882 = vpack.c.b16 %v3706, %v3698
    %v3883 = vpack.c.b16 %v3707, %v3699
    %v3884 = vpack.c.b16 %v3716, %v3708
    %v3885 = vpack.c.b16 %v3717, %v3709
    %v3886 = vpack.c.b16 %v3718, %v3710
    %v3887 = vpack.c.b16 %v3719, %v3711
    %v3888 = vpack.c.b16 %v3720, %v3712
    %v3889 = vpack.c.b16 %v3721, %v3713
    %v3890 = vpack.c.b16 %v3722, %v3714
    %v3891 = vpack.c.b16 %v3723, %v3715
    %v3892 = vpack.c.b16 %v3732, %v3724
    %v3893 = vpack.c.b16 %v3733, %v3725
    %v3894 = vpack.c.b16 %v3734, %v3726
    %v3895 = vpack.c.b16 %v3735, %v3727
    %v3896 = vpack.c.b16 %v3736, %v3728
    %v3897 = vpack.c.b16 %v3737, %v3729
    %v3898 = vpack.c.b16 %v3738, %v3730
    %v3899 = vpack.c.b16 %v3739, %v3731
    %v3900 = vpack.c.b16 %v3748, %v3740
    %v3901 = vpack.c.b16 %v3749, %v3741
    %v3902 = vpack.c.b16 %v3750, %v3742
    %v3903 = vpack.c.b16 %v3751, %v3743
    %v3904 = vpack.c.b16 %v3752, %v3744
    %v3905 = vpack.c.b16 %v3753, %v3745
    %v3906 = vpack.c.b16 %v3754, %v3746
    %v3907 = vpack.c.b16 %v3755, %v3747
    %v3908 = vpack.c.b16 %v3764, %v3756
    %v3909 = vpack.c.b16 %v3765, %v3757
    %v3910 = vpack.c.b16 %v3766, %v3758
    %v3911 = vpack.c.b16 %v3767, %v3759
    %v3912 = vpack.c.b16 %v3768, %v3760
    %v3913 = vpack.c.b16 %v3769, %v3761
    %v3914 = vpack.c.b16 %v3770, %v3762
    %v3915 = vpack.c.b16 %v3771, %v3763
    %v3916 = vpack.c.b16 %v3780, %v3772
    %v3917 = vpack.c.b16 %v3781, %v3773
    %v3918 = vpack.c.b16 %v3782, %v3774
    %v3919 = vpack.c.b16 %v3783, %v3775
    %v3920 = vpack.c.b16 %v3784, %v3776
    %v3921 = vpack.c.b16 %v3785, %v3777
    %v3922 = vpack.c.b16 %v3786, %v3778
    %v3923 = vpack.c.b16 %v3787, %v3779
    %v3924 = vpack.c.b16 %v3796, %v3788
    %v3925 = vpack.c.b16 %v3797, %v3789
    %v3926 = vpack.c.b16 %v3798, %v3790
    %v3927 = vpack.c.b16 %v3799, %v3791
    %v3928 = vpack.c.b16 %v3800, %v3792
    %v3929 = vpack.c.b16 %v3801, %v3793
    %v3930 = vpack.c.b16 %v3802, %v3794
    %v3931 = vpack.c.b16 %v3803, %v3795
    %4060 = vmatprep.subr.bf16.mxu0 %v3861
    %4061 = vmatpush1.bf16.msra.mxu0 %v3860
    %4062 = vmatprep.subr.bf16.mxu0 %v3853
    %4063 = vmatpush1.bf16.msra.mxu0 %v3852
    %4064 = vmatprep.subr.bf16.mxu0 %v3845
    %4065 = vmatpush1.bf16.msra.mxu0 %v3844
    %4066 = vmatprep.subr.bf16.mxu0 %v3837
    %4067 = vmatpush1.bf16.msra.mxu0 %v3836
    %4068 = vmatprep.subr.bf16.mxu0 %v3829
    %4069 = vmatpush1.bf16.msra.mxu0 %v3828
    %4070 = vmatprep.subr.bf16.mxu0 %v3821
    %4071 = vmatpush1.bf16.msra.mxu0 %v3820
    %4072 = vmatprep.subr.bf16.mxu0 %v3813
    %4073 = vmatpush1.bf16.msra.mxu0 %v3812
    %4074 = vmatprep.subr.bf16.mxu0 %v3805
    %4075 = vmatpush1.bf16.msra.mxu0 %v3804
    %4076 = vmatprep.subr.bf16.mxu0 %v3925
    %4077 = vmatpush2.bf16.msra.mxu0 %v3924
    %4078 = vmatprep.subr.bf16.mxu0 %v3917
    %4079 = vmatpush2.bf16.msra.mxu0 %v3916
    %4080 = vmatprep.subr.bf16.mxu0 %v3909
    %4081 = vmatpush2.bf16.msra.mxu0 %v3908
    %4082 = vmatprep.subr.bf16.mxu0 %v3901
    %4083 = vmatpush2.bf16.msra.mxu0 %v3900
    %4084 = vmatprep.subr.bf16.mxu0 %v3893
    %4085 = vmatpush2.bf16.msra.mxu0 %v3892
    %4086 = vmatprep.subr.bf16.mxu0 %v3885
    %4087 = vmatpush2.bf16.msra.mxu0 %v3884
    %4088 = vmatprep.subr.bf16.mxu0 %v3877
    %4089 = vmatpush2.bf16.msra.mxu0 %v3876
    %4090 = vmatprep.subr.bf16.mxu0 %v3869
    %4091 = vmatpush2.bf16.msra.mxu0 %v3868
    %4092 = vmatprep.mubr.bf16.mxu0 %v3235
    %4093 = vmatmul.mubr.bf16.gmra.mxu0 %v3234
    %v4094 = vpop.f32.mrf.mxu0
    %v4095 = vadd.f32 %v3383, %v4094
    %v4096 = vpop.f32.mrf.mxu0
    %v4097 = vadd.f32 %v3387, %v4096
    %v4098 = vpop.f32.mrf.mxu0
    %v4099 = vadd.f32 %v3383, %v4098
    %v4100 = vpop.f32.mrf.mxu0
    %v4101 = vadd.f32 %v3387, %v4100
    %4102 = vmatprep.mubr.bf16.mxu0 %v3237
    %4103 = vmatmul.mubr.bf16.gmra.mxu0 %v3236
    %v4104 = vpop.f32.mrf.mxu0
    %v4105 = vadd.f32 %v3383, %v4104
    %v4106 = vpop.f32.mrf.mxu0
    %v4107 = vadd.f32 %v3387, %v4106
    %v4108 = vpop.f32.mrf.mxu0
    %v4109 = vadd.f32 %v3383, %v4108
    %v4110 = vpop.f32.mrf.mxu0
    %v4111 = vadd.f32 %v3387, %v4110
    %4112 = vmatprep.mubr.bf16.mxu0 %v3239
    %4113 = vmatmul.mubr.bf16.gmra.mxu0 %v3238
    %v4114 = vpop.f32.mrf.mxu0
    %v4115 = vadd.f32 %v3383, %v4114
    %v4116 = vpop.f32.mrf.mxu0
    %v4117 = vadd.f32 %v3387, %v4116
    %v4118 = vpop.f32.mrf.mxu0
    %v4119 = vadd.f32 %v3383, %v4118
    %v4120 = vpop.f32.mrf.mxu0
    %v4121 = vadd.f32 %v3387, %v4120
    %4122 = vmatprep.mubr.bf16.mxu0 %v3241
    %4123 = vmatmul.mubr.bf16.gmra.mxu0 %v3240
    %v4124 = vpop.f32.mrf.mxu0
    %v4125 = vadd.f32 %v3383, %v4124
    %v4126 = vpop.f32.mrf.mxu0
    %v4127 = vadd.f32 %v3387, %v4126
    %v4128 = vpop.f32.mrf.mxu0
    %v4129 = vadd.f32 %v3383, %v4128
    %v4130 = vpop.f32.mrf.mxu0
    %v4131 = vadd.f32 %v3387, %v4130
    %4132 = vmatprep.mubr.bf16.mxu0 %v3243
    %4133 = vmatmul.mubr.bf16.gmra.mxu0 %v3242
    %v4134 = vpop.f32.mrf.mxu0
    %v4135 = vadd.f32 %v3383, %v4134
    %v4136 = vpop.f32.mrf.mxu0
    %v4137 = vadd.f32 %v3387, %v4136
    %v4138 = vpop.f32.mrf.mxu0
    %v4139 = vadd.f32 %v3383, %v4138
    %v4140 = vpop.f32.mrf.mxu0
    %v4141 = vadd.f32 %v3387, %v4140
    %4142 = vmatprep.mubr.bf16.mxu0 %v3245
    %4143 = vmatmul.mubr.bf16.gmra.mxu0 %v3244
    %v4144 = vpop.f32.mrf.mxu0
    %v4145 = vadd.f32 %v3383, %v4144
    %v4146 = vpop.f32.mrf.mxu0
    %v4147 = vadd.f32 %v3387, %v4146
    %v4148 = vpop.f32.mrf.mxu0
    %v4149 = vadd.f32 %v3383, %v4148
    %v4150 = vpop.f32.mrf.mxu0
    %v4151 = vadd.f32 %v3387, %v4150
    %4152 = vmatprep.mubr.bf16.mxu0 %v3247
    %4153 = vmatmul.mubr.bf16.gmra.mxu0 %v3246
    %v4154 = vpop.f32.mrf.mxu0
    %v4155 = vadd.f32 %v3383, %v4154
    %v4156 = vpop.f32.mrf.mxu0
    %v4157 = vadd.f32 %v3387, %v4156
    %v4158 = vpop.f32.mrf.mxu0
    %v4159 = vadd.f32 %v3383, %v4158
    %v4160 = vpop.f32.mrf.mxu0
    %v4161 = vadd.f32 %v3387, %v4160
    %4162 = vmatprep.mubr.bf16.mxu0 %v3249
    %4163 = vmatmul.mubr.bf16.gmra.mxu0 %v3248
    %v4164 = vpop.f32.mrf.mxu0
    %v4165 = vadd.f32 %v3383, %v4164
    %v4166 = vpop.f32.mrf.mxu0
    %v4167 = vadd.f32 %v3387, %v4166
    %v4168 = vpop.f32.mrf.mxu0
    %v4169 = vadd.f32 %v3383, %v4168
    %v4170 = vpop.f32.mrf.mxu0
    %v4171 = vadd.f32 %v3387, %v4170
    %4172 = vdwg.mxu0
    %4173 = vmatprep.subr.bf16.mxu0 %v3863
    %4174 = vmatpush1.bf16.msra.mxu0 %v3862
    %4175 = vmatprep.subr.bf16.mxu0 %v3855
    %4176 = vmatpush1.bf16.msra.mxu0 %v3854
    %4177 = vmatprep.subr.bf16.mxu0 %v3847
    %4178 = vmatpush1.bf16.msra.mxu0 %v3846
    %4179 = vmatprep.subr.bf16.mxu0 %v3839
    %4180 = vmatpush1.bf16.msra.mxu0 %v3838
    %4181 = vmatprep.subr.bf16.mxu0 %v3831
    %4182 = vmatpush1.bf16.msra.mxu0 %v3830
    %4183 = vmatprep.subr.bf16.mxu0 %v3823
    %4184 = vmatpush1.bf16.msra.mxu0 %v3822
    %4185 = vmatprep.subr.bf16.mxu0 %v3815
    %4186 = vmatpush1.bf16.msra.mxu0 %v3814
    %4187 = vmatprep.subr.bf16.mxu0 %v3807
    %4188 = vmatpush1.bf16.msra.mxu0 %v3806
    %4189 = vmatprep.subr.bf16.mxu0 %v3927
    %4190 = vmatpush2.bf16.msra.mxu0 %v3926
    %4191 = vmatprep.subr.bf16.mxu0 %v3919
    %4192 = vmatpush2.bf16.msra.mxu0 %v3918
    %4193 = vmatprep.subr.bf16.mxu0 %v3911
    %4194 = vmatpush2.bf16.msra.mxu0 %v3910
    %4195 = vmatprep.subr.bf16.mxu0 %v3903
    %4196 = vmatpush2.bf16.msra.mxu0 %v3902
    %4197 = vmatprep.subr.bf16.mxu0 %v3895
    %4198 = vmatpush2.bf16.msra.mxu0 %v3894
    %4199 = vmatprep.subr.bf16.mxu0 %v3887
    %4200 = vmatpush2.bf16.msra.mxu0 %v3886
    %4201 = vmatprep.subr.bf16.mxu0 %v3879
    %4202 = vmatpush2.bf16.msra.mxu0 %v3878
    %4203 = vmatprep.subr.bf16.mxu0 %v3871
    %4204 = vmatpush2.bf16.msra.mxu0 %v3870
    %4205 = vmatprep.mubr.bf16.mxu0 %v3235
    %4206 = vmatmul.mubr.bf16.gmra.mxu0 %v3234
    %v4207 = vpop.f32.mrf.mxu0
    %v4208 = vadd.f32 %v3391, %v4207
    %v4209 = vpop.f32.mrf.mxu0
    %v4210 = vadd.f32 %v3395, %v4209
    %v4211 = vpop.f32.mrf.mxu0
    %v4212 = vadd.f32 %v3391, %v4211
    %v4213 = vpop.f32.mrf.mxu0
    %v4214 = vadd.f32 %v3395, %v4213
    %4215 = vmatprep.mubr.bf16.mxu0 %v3237
    %4216 = vmatmul.mubr.bf16.gmra.mxu0 %v3236
    %v4217 = vpop.f32.mrf.mxu0
    %v4218 = vadd.f32 %v3391, %v4217
    %v4219 = vpop.f32.mrf.mxu0
    %v4220 = vadd.f32 %v3395, %v4219
    %v4221 = vpop.f32.mrf.mxu0
    %v4222 = vadd.f32 %v3391, %v4221
    %v4223 = vpop.f32.mrf.mxu0
    %v4224 = vadd.f32 %v3395, %v4223
    %4225 = vmatprep.mubr.bf16.mxu0 %v3239
    %4226 = vmatmul.mubr.bf16.gmra.mxu0 %v3238
    %v4227 = vpop.f32.mrf.mxu0
    %v4228 = vadd.f32 %v3391, %v4227
    %v4229 = vpop.f32.mrf.mxu0
    %v4230 = vadd.f32 %v3395, %v4229
    %v4231 = vpop.f32.mrf.mxu0
    %v4232 = vadd.f32 %v3391, %v4231
    %v4233 = vpop.f32.mrf.mxu0
    %v4234 = vadd.f32 %v3395, %v4233
    %4235 = vmatprep.mubr.bf16.mxu0 %v3241
    %4236 = vmatmul.mubr.bf16.gmra.mxu0 %v3240
    %v4237 = vpop.f32.mrf.mxu0
    %v4238 = vadd.f32 %v3391, %v4237
    %v4239 = vpop.f32.mrf.mxu0
    %v4240 = vadd.f32 %v3395, %v4239
    %v4241 = vpop.f32.mrf.mxu0
    %v4242 = vadd.f32 %v3391, %v4241
    %v4243 = vpop.f32.mrf.mxu0
    %v4244 = vadd.f32 %v3395, %v4243
    %4245 = vmatprep.mubr.bf16.mxu0 %v3243
    %4246 = vmatmul.mubr.bf16.gmra.mxu0 %v3242
    %v4247 = vpop.f32.mrf.mxu0
    %v4248 = vadd.f32 %v3391, %v4247
    %v4249 = vpop.f32.mrf.mxu0
    %v4250 = vadd.f32 %v3395, %v4249
    %v4251 = vpop.f32.mrf.mxu0
    %v4252 = vadd.f32 %v3391, %v4251
    %v4253 = vpop.f32.mrf.mxu0
    %v4254 = vadd.f32 %v3395, %v4253
    %4255 = vmatprep.mubr.bf16.mxu0 %v3245
    %4256 = vmatmul.mubr.bf16.gmra.mxu0 %v3244
    %v4257 = vpop.f32.mrf.mxu0
    %v4258 = vadd.f32 %v3391, %v4257
    %v4259 = vpop.f32.mrf.mxu0
    %v4260 = vadd.f32 %v3395, %v4259
    %v4261 = vpop.f32.mrf.mxu0
    %v4262 = vadd.f32 %v3391, %v4261
    %v4263 = vpop.f32.mrf.mxu0
    %v4264 = vadd.f32 %v3395, %v4263
    %4265 = vmatprep.mubr.bf16.mxu0 %v3247
    %4266 = vmatmul.mubr.bf16.gmra.mxu0 %v3246
    %v4267 = vpop.f32.mrf.mxu0
    %v4268 = vadd.f32 %v3391, %v4267
    %v4269 = vpop.f32.mrf.mxu0
    %v4270 = vadd.f32 %v3395, %v4269
    %v4271 = vpop.f32.mrf.mxu0
    %v4272 = vadd.f32 %v3391, %v4271
    %v4273 = vpop.f32.mrf.mxu0
    %v4274 = vadd.f32 %v3395, %v4273
    %4275 = vmatprep.mubr.bf16.mxu0 %v3249
    %4276 = vmatmul.mubr.bf16.gmra.mxu0 %v3248
    %v4277 = vpop.f32.mrf.mxu0
    %v4278 = vadd.f32 %v3391, %v4277
    %v4279 = vpop.f32.mrf.mxu0
    %v4280 = vadd.f32 %v3395, %v4279
    %v4281 = vpop.f32.mrf.mxu0
    %v4282 = vadd.f32 %v3391, %v4281
    %v4283 = vpop.f32.mrf.mxu0
    %v4284 = vadd.f32 %v3395, %v4283
    %4285 = vdwg.mxu0
    %4286 = vmatprep.subr.bf16.mxu0 %v3865
    %4287 = vmatpush1.bf16.msra.mxu0 %v3864
    %4288 = vmatprep.subr.bf16.mxu0 %v3857
    %4289 = vmatpush1.bf16.msra.mxu0 %v3856
    %4290 = vmatprep.subr.bf16.mxu0 %v3849
    %4291 = vmatpush1.bf16.msra.mxu0 %v3848
    %4292 = vmatprep.subr.bf16.mxu0 %v3841
    %4293 = vmatpush1.bf16.msra.mxu0 %v3840
    %4294 = vmatprep.subr.bf16.mxu0 %v3833
    %4295 = vmatpush1.bf16.msra.mxu0 %v3832
    %4296 = vmatprep.subr.bf16.mxu0 %v3825
    %4297 = vmatpush1.bf16.msra.mxu0 %v3824
    %4298 = vmatprep.subr.bf16.mxu0 %v3817
    %4299 = vmatpush1.bf16.msra.mxu0 %v3816
    %4300 = vmatprep.subr.bf16.mxu0 %v3809
    %4301 = vmatpush1.bf16.msra.mxu0 %v3808
    %4302 = vmatprep.subr.bf16.mxu0 %v3929
    %4303 = vmatpush2.bf16.msra.mxu0 %v3928
    %4304 = vmatprep.subr.bf16.mxu0 %v3921
    %4305 = vmatpush2.bf16.msra.mxu0 %v3920
    %4306 = vmatprep.subr.bf16.mxu0 %v3913
    %4307 = vmatpush2.bf16.msra.mxu0 %v3912
    %4308 = vmatprep.subr.bf16.mxu0 %v3905
    %4309 = vmatpush2.bf16.msra.mxu0 %v3904
    %4310 = vmatprep.subr.bf16.mxu0 %v3897
    %4311 = vmatpush2.bf16.msra.mxu0 %v3896
    %4312 = vmatprep.subr.bf16.mxu0 %v3889
    %4313 = vmatpush2.bf16.msra.mxu0 %v3888
    %4314 = vmatprep.subr.bf16.mxu0 %v3881
    %4315 = vmatpush2.bf16.msra.mxu0 %v3880
    %4316 = vmatprep.subr.bf16.mxu0 %v3873
    %4317 = vmatpush2.bf16.msra.mxu0 %v3872
    %4318 = vmatprep.mubr.bf16.mxu0 %v3235
    %4319 = vmatmul.mubr.bf16.gmra.mxu0 %v3234
    %v4320 = vpop.f32.mrf.mxu0
    %v4321 = vadd.f32 %v3399, %v4320
    %v4322 = vpop.f32.mrf.mxu0
    %v4323 = vadd.f32 %v3403, %v4322
    %v4324 = vpop.f32.mrf.mxu0
    %v4325 = vadd.f32 %v3399, %v4324
    %v4326 = vpop.f32.mrf.mxu0
    %v4327 = vadd.f32 %v3403, %v4326
    %4328 = vmatprep.mubr.bf16.mxu0 %v3237
    %4329 = vmatmul.mubr.bf16.gmra.mxu0 %v3236
    %v4330 = vpop.f32.mrf.mxu0
    %v4331 = vadd.f32 %v3399, %v4330
    %v4332 = vpop.f32.mrf.mxu0
    %v4333 = vadd.f32 %v3403, %v4332
    %v4334 = vpop.f32.mrf.mxu0
    %v4335 = vadd.f32 %v3399, %v4334
    %v4336 = vpop.f32.mrf.mxu0
    %v4337 = vadd.f32 %v3403, %v4336
    %4338 = vmatprep.mubr.bf16.mxu0 %v3239
    %4339 = vmatmul.mubr.bf16.gmra.mxu0 %v3238
    %v4340 = vpop.f32.mrf.mxu0
    %v4341 = vadd.f32 %v3399, %v4340
    %v4342 = vpop.f32.mrf.mxu0
    %v4343 = vadd.f32 %v3403, %v4342
    %v4344 = vpop.f32.mrf.mxu0
    %v4345 = vadd.f32 %v3399, %v4344
    %v4346 = vpop.f32.mrf.mxu0
    %v4347 = vadd.f32 %v3403, %v4346
    %4348 = vmatprep.mubr.bf16.mxu0 %v3241
    %4349 = vmatmul.mubr.bf16.gmra.mxu0 %v3240
    %v4350 = vpop.f32.mrf.mxu0
    %v4351 = vadd.f32 %v3399, %v4350
    %v4352 = vpop.f32.mrf.mxu0
    %v4353 = vadd.f32 %v3403, %v4352
    %v4354 = vpop.f32.mrf.mxu0
    %v4355 = vadd.f32 %v3399, %v4354
    %v4356 = vpop.f32.mrf.mxu0
    %v4357 = vadd.f32 %v3403, %v4356
    %4358 = vmatprep.mubr.bf16.mxu0 %v3243
    %4359 = vmatmul.mubr.bf16.gmra.mxu0 %v3242
    %v4360 = vpop.f32.mrf.mxu0
    %v4361 = vadd.f32 %v3399, %v4360
    %v4362 = vpop.f32.mrf.mxu0
    %v4363 = vadd.f32 %v3403, %v4362
    %v4364 = vpop.f32.mrf.mxu0
    %v4365 = vadd.f32 %v3399, %v4364
    %v4366 = vpop.f32.mrf.mxu0
    %v4367 = vadd.f32 %v3403, %v4366
    %4368 = vmatprep.mubr.bf16.mxu0 %v3245
    %4369 = vmatmul.mubr.bf16.gmra.mxu0 %v3244
    %v4370 = vpop.f32.mrf.mxu0
    %v4371 = vadd.f32 %v3399, %v4370
    %v4372 = vpop.f32.mrf.mxu0
    %v4373 = vadd.f32 %v3403, %v4372
    %v4374 = vpop.f32.mrf.mxu0
    %v4375 = vadd.f32 %v3399, %v4374
    %v4376 = vpop.f32.mrf.mxu0
    %v4377 = vadd.f32 %v3403, %v4376
    %4378 = vmatprep.mubr.bf16.mxu0 %v3247
    %4379 = vmatmul.mubr.bf16.gmra.mxu0 %v3246
    %v4380 = vpop.f32.mrf.mxu0
    %v4381 = vadd.f32 %v3399, %v4380
    %v4382 = vpop.f32.mrf.mxu0
    %v4383 = vadd.f32 %v3403, %v4382
    %v4384 = vpop.f32.mrf.mxu0
    %v4385 = vadd.f32 %v3399, %v4384
    %v4386 = vpop.f32.mrf.mxu0
    %v4387 = vadd.f32 %v3403, %v4386
    %4388 = vmatprep.mubr.bf16.mxu0 %v3249
    %4389 = vmatmul.mubr.bf16.gmra.mxu0 %v3248
    %v4390 = vpop.f32.mrf.mxu0
    %v4391 = vadd.f32 %v3399, %v4390
    %v4392 = vpop.f32.mrf.mxu0
    %v4393 = vadd.f32 %v3403, %v4392
    %v4394 = vpop.f32.mrf.mxu0
    %v4395 = vadd.f32 %v3399, %v4394
    %v4396 = vpop.f32.mrf.mxu0
    %v4397 = vadd.f32 %v3403, %v4396
    %4398 = vdwg.mxu0
    %4399 = vmatprep.subr.bf16.mxu0 %v3867
    %4400 = vmatpush1.bf16.msra.mxu0 %v3866
    %4401 = vmatprep.subr.bf16.mxu0 %v3859
    %4402 = vmatpush1.bf16.msra.mxu0 %v3858
    %4403 = vmatprep.subr.bf16.mxu0 %v3851
    %4404 = vmatpush1.bf16.msra.mxu0 %v3850
    %4405 = vmatprep.subr.bf16.mxu0 %v3843
    %4406 = vmatpush1.bf16.msra.mxu0 %v3842
    %4407 = vmatprep.subr.bf16.mxu0 %v3835
    %4408 = vmatpush1.bf16.msra.mxu0 %v3834
    %4409 = vmatprep.subr.bf16.mxu0 %v3827
    %4410 = vmatpush1.bf16.msra.mxu0 %v3826
    %4411 = vmatprep.subr.bf16.mxu0 %v3819
    %4412 = vmatpush1.bf16.msra.mxu0 %v3818
    %4413 = vmatprep.subr.bf16.mxu0 %v3811
    %4414 = vmatpush1.bf16.msra.mxu0 %v3810
    %4415 = vmatprep.subr.bf16.mxu0 %v3931
    %4416 = vmatpush2.bf16.msra.mxu0 %v3930
    %4417 = vmatprep.subr.bf16.mxu0 %v3923
    %4418 = vmatpush2.bf16.msra.mxu0 %v3922
    %4419 = vmatprep.subr.bf16.mxu0 %v3915
    %4420 = vmatpush2.bf16.msra.mxu0 %v3914
    %4421 = vmatprep.subr.bf16.mxu0 %v3907
    %4422 = vmatpush2.bf16.msra.mxu0 %v3906
    %4423 = vmatprep.subr.bf16.mxu0 %v3899
    %4424 = vmatpush2.bf16.msra.mxu0 %v3898
    %4425 = vmatprep.subr.bf16.mxu0 %v3891
    %4426 = vmatpush2.bf16.msra.mxu0 %v3890
    %4427 = vmatprep.subr.bf16.mxu0 %v3883
    %4428 = vmatpush2.bf16.msra.mxu0 %v3882
    %4429 = vmatprep.subr.bf16.mxu0 %v3875
    %4430 = vmatpush2.bf16.msra.mxu0 %v3874
    %4431 = vmatprep.mubr.bf16.mxu0 %v3235
    %4432 = vmatmul.mubr.bf16.gmra.mxu0 %v3234
    %v4433 = vpop.f32.mrf.mxu0
    %v4434 = vadd.f32 %v3407, %v4433
    %v4435 = vpop.f32.mrf.mxu0
    %v4436 = vadd.f32 %v3411, %v4435
    %v4437 = vpop.f32.mrf.mxu0
    %v4438 = vadd.f32 %v3407, %v4437
    %v4439 = vpop.f32.mrf.mxu0
    %v4440 = vadd.f32 %v3411, %v4439
    %4441 = vmatprep.mubr.bf16.mxu0 %v3237
    %4442 = vmatmul.mubr.bf16.gmra.mxu0 %v3236
    %v4443 = vpop.f32.mrf.mxu0
    %v4444 = vadd.f32 %v3407, %v4443
    %v4445 = vpop.f32.mrf.mxu0
    %v4446 = vadd.f32 %v3411, %v4445
    %v4447 = vpop.f32.mrf.mxu0
    %v4448 = vadd.f32 %v3407, %v4447
    %v4449 = vpop.f32.mrf.mxu0
    %v4450 = vadd.f32 %v3411, %v4449
    %4451 = vmatprep.mubr.bf16.mxu0 %v3239
    %4452 = vmatmul.mubr.bf16.gmra.mxu0 %v3238
    %v4453 = vpop.f32.mrf.mxu0
    %v4454 = vadd.f32 %v3407, %v4453
    %v4455 = vpop.f32.mrf.mxu0
    %v4456 = vadd.f32 %v3411, %v4455
    %v4457 = vpop.f32.mrf.mxu0
    %v4458 = vadd.f32 %v3407, %v4457
    %v4459 = vpop.f32.mrf.mxu0
    %v4460 = vadd.f32 %v3411, %v4459
    %4461 = vmatprep.mubr.bf16.mxu0 %v3241
    %4462 = vmatmul.mubr.bf16.gmra.mxu0 %v3240
    %v4463 = vpop.f32.mrf.mxu0
    %v4464 = vadd.f32 %v3407, %v4463
    %v4465 = vpop.f32.mrf.mxu0
    %v4466 = vadd.f32 %v3411, %v4465
    %v4467 = vpop.f32.mrf.mxu0
    %v4468 = vadd.f32 %v3407, %v4467
    %v4469 = vpop.f32.mrf.mxu0
    %v4470 = vadd.f32 %v3411, %v4469
    %4471 = vmatprep.mubr.bf16.mxu0 %v3243
    %4472 = vmatmul.mubr.bf16.gmra.mxu0 %v3242
    %v4473 = vpop.f32.mrf.mxu0
    %v4474 = vadd.f32 %v3407, %v4473
    %v4475 = vpop.f32.mrf.mxu0
    %v4476 = vadd.f32 %v3411, %v4475
    %v4477 = vpop.f32.mrf.mxu0
    %v4478 = vadd.f32 %v3407, %v4477
    %v4479 = vpop.f32.mrf.mxu0
    %v4480 = vadd.f32 %v3411, %v4479
    %4481 = vmatprep.mubr.bf16.mxu0 %v3245
    %4482 = vmatmul.mubr.bf16.gmra.mxu0 %v3244
    %v4483 = vpop.f32.mrf.mxu0
    %v4484 = vadd.f32 %v3407, %v4483
    %v4485 = vpop.f32.mrf.mxu0
    %v4486 = vadd.f32 %v3411, %v4485
    %v4487 = vpop.f32.mrf.mxu0
    %v4488 = vadd.f32 %v3407, %v4487
    %v4489 = vpop.f32.mrf.mxu0
    %v4490 = vadd.f32 %v3411, %v4489
    %4491 = vmatprep.mubr.bf16.mxu0 %v3247
    %4492 = vmatmul.mubr.bf16.gmra.mxu0 %v3246
    %v4493 = vpop.f32.mrf.mxu0
    %v4494 = vadd.f32 %v3407, %v4493
    %v4495 = vpop.f32.mrf.mxu0
    %v4496 = vadd.f32 %v3411, %v4495
    %v4497 = vpop.f32.mrf.mxu0
    %v4498 = vadd.f32 %v3407, %v4497
    %v4499 = vpop.f32.mrf.mxu0
    %v4500 = vadd.f32 %v3411, %v4499
    %4501 = vmatprep.mubr.bf16.mxu0 %v3249
    %4502 = vmatmul.mubr.bf16.gmra.mxu0 %v3248
    %v4503 = vpop.f32.mrf.mxu0
    %v4504 = vadd.f32 %v3407, %v4503
    %v4505 = vpop.f32.mrf.mxu0
    %v4506 = vadd.f32 %v3411, %v4505
    %v4507 = vpop.f32.mrf.mxu0
    %v4508 = vadd.f32 %v3407, %v4507
    %v4509 = vpop.f32.mrf.mxu0
    %v4510 = vadd.f32 %v3411, %v4509
    %4511 = vdwg.mxu0
    %v4512 = vunpack.c.l.bf16 %v56
    %v4513 = vunpack.c.h.bf16 %v56
    %v4514 = vunpack.c.l.bf16 %v57
    %v4515 = vunpack.c.h.bf16 %v57
    %v4516 = vunpack.c.l.bf16 %v58
    %v4517 = vunpack.c.h.bf16 %v58
    %v4518 = vunpack.c.l.bf16 %v59
    %v4519 = vunpack.c.h.bf16 %v59
    %v4520 = vunpack.c.l.bf16 %v60
    %v4521 = vunpack.c.h.bf16 %v60
    %v4522 = vunpack.c.l.bf16 %v61
    %v4523 = vunpack.c.h.bf16 %v61
    %v4524 = vunpack.c.l.bf16 %v62
    %v4525 = vunpack.c.h.bf16 %v62
    %v4526 = vunpack.c.l.bf16 %v63
    %v4527 = vunpack.c.h.bf16 %v63
    %v4528 = vunpack.c.l.bf16 %v64
    %v4529 = vunpack.c.h.bf16 %v64
    %v4530 = vunpack.c.l.bf16 %v65
    %v4531 = vunpack.c.h.bf16 %v65
    %v4532 = vunpack.c.l.bf16 %v66
    %v4533 = vunpack.c.h.bf16 %v66
    %v4534 = vunpack.c.l.bf16 %v67
    %v4535 = vunpack.c.h.bf16 %v67
    %v4536 = vunpack.c.l.bf16 %v68
    %v4537 = vunpack.c.h.bf16 %v68
    %v4538 = vunpack.c.l.bf16 %v69
    %v4539 = vunpack.c.h.bf16 %v69
    %v4540 = vunpack.c.l.bf16 %v70
    %v4541 = vunpack.c.h.bf16 %v70
    %v4542 = vunpack.c.l.bf16 %v71
    %v4543 = vunpack.c.h.bf16 %v71
    %v4544 = vunpack.c.l.bf16 %v72
    %v4545 = vunpack.c.h.bf16 %v72
    %v4546 = vunpack.c.l.bf16 %v73
    %v4547 = vunpack.c.h.bf16 %v73
    %v4548 = vunpack.c.l.bf16 %v74
    %v4549 = vunpack.c.h.bf16 %v74
    %v4550 = vunpack.c.l.bf16 %v75
    %v4551 = vunpack.c.h.bf16 %v75
    %v4552 = vunpack.c.l.bf16 %v76
    %v4553 = vunpack.c.h.bf16 %v76
    %v4554 = vunpack.c.l.bf16 %v77
    %v4555 = vunpack.c.h.bf16 %v77
    %v4556 = vunpack.c.l.bf16 %v78
    %v4557 = vunpack.c.h.bf16 %v78
    %v4558 = vunpack.c.l.bf16 %v79
    %v4559 = vunpack.c.h.bf16 %v79
    %v4560 = vunpack.c.l.bf16 %v80
    %v4561 = vunpack.c.h.bf16 %v80
    %v4562 = vunpack.c.l.bf16 %v81
    %v4563 = vunpack.c.h.bf16 %v81
    %v4564 = vunpack.c.l.bf16 %v82
    %v4565 = vunpack.c.h.bf16 %v82
    %v4566 = vunpack.c.l.bf16 %v83
    %v4567 = vunpack.c.h.bf16 %v83
    %v4568 = vunpack.c.l.bf16 %v84
    %v4569 = vunpack.c.h.bf16 %v84
    %v4570 = vunpack.c.l.bf16 %v85
    %v4571 = vunpack.c.h.bf16 %v85
    %v4572 = vunpack.c.l.bf16 %v86
    %v4573 = vunpack.c.h.bf16 %v86
    %v4574 = vunpack.c.l.bf16 %v87
    %v4575 = vunpack.c.h.bf16 %v87
    %v4576 = vunpack.c.l.bf16 %v88
    %v4577 = vunpack.c.h.bf16 %v88
    %v4578 = vunpack.c.l.bf16 %v89
    %v4579 = vunpack.c.h.bf16 %v89
    %v4580 = vunpack.c.l.bf16 %v90
    %v4581 = vunpack.c.h.bf16 %v90
    %v4582 = vunpack.c.l.bf16 %v91
    %v4583 = vunpack.c.h.bf16 %v91
    %v4584 = vunpack.c.l.bf16 %v92
    %v4585 = vunpack.c.h.bf16 %v92
    %v4586 = vunpack.c.l.bf16 %v93
    %v4587 = vunpack.c.h.bf16 %v93
    %v4588 = vunpack.c.l.bf16 %v94
    %v4589 = vunpack.c.h.bf16 %v94
    %v4590 = vunpack.c.l.bf16 %v95
    %v4591 = vunpack.c.h.bf16 %v95
    %v4592 = vunpack.c.l.bf16 %v96
    %v4593 = vunpack.c.h.bf16 %v96
    %v4594 = vunpack.c.l.bf16 %v97
    %v4595 = vunpack.c.h.bf16 %v97
    %v4596 = vunpack.c.l.bf16 %v98
    %v4597 = vunpack.c.h.bf16 %v98
    %v4598 = vunpack.c.l.bf16 %v99
    %v4599 = vunpack.c.h.bf16 %v99
    %v4600 = vunpack.c.l.bf16 %v100
    %v4601 = vunpack.c.h.bf16 %v100
    %v4602 = vunpack.c.l.bf16 %v101
    %v4603 = vunpack.c.h.bf16 %v101
    %v4604 = vunpack.c.l.bf16 %v102
    %v4605 = vunpack.c.h.bf16 %v102
    %v4606 = vunpack.c.l.bf16 %v103
    %v4607 = vunpack.c.h.bf16 %v103
    %v4608 = vunpack.c.l.bf16 %v104
    %v4609 = vunpack.c.h.bf16 %v104
    %v4610 = vunpack.c.l.bf16 %v105
    %v4611 = vunpack.c.h.bf16 %v105
    %v4612 = vunpack.c.l.bf16 %v106
    %v4613 = vunpack.c.h.bf16 %v106
    %v4614 = vunpack.c.l.bf16 %v107
    %v4615 = vunpack.c.h.bf16 %v107
    %v4616 = vunpack.c.l.bf16 %v108
    %v4617 = vunpack.c.h.bf16 %v108
    %v4618 = vunpack.c.l.bf16 %v109
    %v4619 = vunpack.c.h.bf16 %v109
    %v4620 = vunpack.c.l.bf16 %v110
    %v4621 = vunpack.c.h.bf16 %v110
    %v4622 = vunpack.c.l.bf16 %v111
    %v4623 = vunpack.c.h.bf16 %v111
    %v4624 = vunpack.c.l.bf16 %v112
    %v4625 = vunpack.c.h.bf16 %v112
    %v4626 = vunpack.c.l.bf16 %v113
    %v4627 = vunpack.c.h.bf16 %v113
    %v4628 = vunpack.c.l.bf16 %v114
    %v4629 = vunpack.c.h.bf16 %v114
    %v4630 = vunpack.c.l.bf16 %v115
    %v4631 = vunpack.c.h.bf16 %v115
    %v4632 = vunpack.c.l.bf16 %v116
    %v4633 = vunpack.c.h.bf16 %v116
    %v4634 = vunpack.c.l.bf16 %v117
    %v4635 = vunpack.c.h.bf16 %v117
    %v4636 = vunpack.c.l.bf16 %v118
    %v4637 = vunpack.c.h.bf16 %v118
    %v4638 = vunpack.c.l.bf16 %v119
    %v4639 = vunpack.c.h.bf16 %v119
    %v4640 = vadd.f32 %v4095, %v4512
    %v4641 = vadd.f32 %v4097, %v4513
    %v4642 = vadd.f32 %v4208, %v4514
    %v4643 = vadd.f32 %v4210, %v4515
    %v4644 = vadd.f32 %v4321, %v4516
    %v4645 = vadd.f32 %v4323, %v4517
    %v4646 = vadd.f32 %v4434, %v4518
    %v4647 = vadd.f32 %v4436, %v4519
    %v4648 = vadd.f32 %v4099, %v4520
    %v4649 = vadd.f32 %v4101, %v4521
    %v4650 = vadd.f32 %v4212, %v4522
    %v4651 = vadd.f32 %v4214, %v4523
    %v4652 = vadd.f32 %v4325, %v4524
    %v4653 = vadd.f32 %v4327, %v4525
    %v4654 = vadd.f32 %v4438, %v4526
    %v4655 = vadd.f32 %v4440, %v4527
    %v4656 = vadd.f32 %v4105, %v4528
    %v4657 = vadd.f32 %v4107, %v4529
    %v4658 = vadd.f32 %v4218, %v4530
    %v4659 = vadd.f32 %v4220, %v4531
    %v4660 = vadd.f32 %v4331, %v4532
    %v4661 = vadd.f32 %v4333, %v4533
    %v4662 = vadd.f32 %v4444, %v4534
    %v4663 = vadd.f32 %v4446, %v4535
    %v4664 = vadd.f32 %v4109, %v4536
    %v4665 = vadd.f32 %v4111, %v4537
    %v4666 = vadd.f32 %v4222, %v4538
    %v4667 = vadd.f32 %v4224, %v4539
    %v4668 = vadd.f32 %v4335, %v4540
    %v4669 = vadd.f32 %v4337, %v4541
    %v4670 = vadd.f32 %v4448, %v4542
    %v4671 = vadd.f32 %v4450, %v4543
    %v4672 = vadd.f32 %v4115, %v4544
    %v4673 = vadd.f32 %v4117, %v4545
    %v4674 = vadd.f32 %v4228, %v4546
    %v4675 = vadd.f32 %v4230, %v4547
    %v4676 = vadd.f32 %v4341, %v4548
    %v4677 = vadd.f32 %v4343, %v4549
    %v4678 = vadd.f32 %v4454, %v4550
    %v4679 = vadd.f32 %v4456, %v4551
    %v4680 = vadd.f32 %v4119, %v4552
    %v4681 = vadd.f32 %v4121, %v4553
    %v4682 = vadd.f32 %v4232, %v4554
    %v4683 = vadd.f32 %v4234, %v4555
    %v4684 = vadd.f32 %v4345, %v4556
    %v4685 = vadd.f32 %v4347, %v4557
    %v4686 = vadd.f32 %v4458, %v4558
    %v4687 = vadd.f32 %v4460, %v4559
    %v4688 = vadd.f32 %v4125, %v4560
    %v4689 = vadd.f32 %v4127, %v4561
    %v4690 = vadd.f32 %v4238, %v4562
    %v4691 = vadd.f32 %v4240, %v4563
    %v4692 = vadd.f32 %v4351, %v4564
    %v4693 = vadd.f32 %v4353, %v4565
    %v4694 = vadd.f32 %v4464, %v4566
    %v4695 = vadd.f32 %v4466, %v4567
    %v4696 = vadd.f32 %v4129, %v4568
    %v4697 = vadd.f32 %v4131, %v4569
    %v4698 = vadd.f32 %v4242, %v4570
    %v4699 = vadd.f32 %v4244, %v4571
    %v4700 = vadd.f32 %v4355, %v4572
    %v4701 = vadd.f32 %v4357, %v4573
    %v4702 = vadd.f32 %v4468, %v4574
    %v4703 = vadd.f32 %v4470, %v4575
    %v4704 = vadd.f32 %v4135, %v4576
    %v4705 = vadd.f32 %v4137, %v4577
    %v4706 = vadd.f32 %v4248, %v4578
    %v4707 = vadd.f32 %v4250, %v4579
    %v4708 = vadd.f32 %v4361, %v4580
    %v4709 = vadd.f32 %v4363, %v4581
    %v4710 = vadd.f32 %v4474, %v4582
    %v4711 = vadd.f32 %v4476, %v4583
    %v4712 = vadd.f32 %v4139, %v4584
    %v4713 = vadd.f32 %v4141, %v4585
    %v4714 = vadd.f32 %v4252, %v4586
    %v4715 = vadd.f32 %v4254, %v4587
    %v4716 = vadd.f32 %v4365, %v4588
    %v4717 = vadd.f32 %v4367, %v4589
    %v4718 = vadd.f32 %v4478, %v4590
    %v4719 = vadd.f32 %v4480, %v4591
    %v4720 = vadd.f32 %v4145, %v4592
    %v4721 = vadd.f32 %v4147, %v4593
    %v4722 = vadd.f32 %v4258, %v4594
    %v4723 = vadd.f32 %v4260, %v4595
    %v4724 = vadd.f32 %v4371, %v4596
    %v4725 = vadd.f32 %v4373, %v4597
    %v4726 = vadd.f32 %v4484, %v4598
    %v4727 = vadd.f32 %v4486, %v4599
    %v4728 = vadd.f32 %v4149, %v4600
    %v4729 = vadd.f32 %v4151, %v4601
    %v4730 = vadd.f32 %v4262, %v4602
    %v4731 = vadd.f32 %v4264, %v4603
    %v4732 = vadd.f32 %v4375, %v4604
    %v4733 = vadd.f32 %v4377, %v4605
    %v4734 = vadd.f32 %v4488, %v4606
    %v4735 = vadd.f32 %v4490, %v4607
    %v4736 = vadd.f32 %v4155, %v4608
    %v4737 = vadd.f32 %v4157, %v4609
    %v4738 = vadd.f32 %v4268, %v4610
    %v4739 = vadd.f32 %v4270, %v4611
    %v4740 = vadd.f32 %v4381, %v4612
    %v4741 = vadd.f32 %v4383, %v4613
    %v4742 = vadd.f32 %v4494, %v4614
    %v4743 = vadd.f32 %v4496, %v4615
    %v4744 = vadd.f32 %v4159, %v4616
    %v4745 = vadd.f32 %v4161, %v4617
    %v4746 = vadd.f32 %v4272, %v4618
    %v4747 = vadd.f32 %v4274, %v4619
    %v4748 = vadd.f32 %v4385, %v4620
    %v4749 = vadd.f32 %v4387, %v4621
    %v4750 = vadd.f32 %v4498, %v4622
    %v4751 = vadd.f32 %v4500, %v4623
    %v4752 = vadd.f32 %v4165, %v4624
    %v4753 = vadd.f32 %v4167, %v4625
    %v4754 = vadd.f32 %v4278, %v4626
    %v4755 = vadd.f32 %v4280, %v4627
    %v4756 = vadd.f32 %v4391, %v4628
    %v4757 = vadd.f32 %v4393, %v4629
    %v4758 = vadd.f32 %v4504, %v4630
    %v4759 = vadd.f32 %v4506, %v4631
    %v4760 = vadd.f32 %v4169, %v4632
    %v4761 = vadd.f32 %v4171, %v4633
    %v4762 = vadd.f32 %v4282, %v4634
    %v4763 = vadd.f32 %v4284, %v4635
    %v4764 = vadd.f32 %v4395, %v4636
    %v4765 = vadd.f32 %v4397, %v4637
    %v4766 = vadd.f32 %v4508, %v4638
    %v4767 = vadd.f32 %v4510, %v4639
    %v4768 = vmax.f32 %v4640, 0.0
    %v4769 = vmax.f32 %v4641, 0.0
    %v4770 = vmax.f32 %v4642, 0.0
    %v4771 = vmax.f32 %v4643, 0.0
    %v4772 = vmax.f32 %v4644, 0.0
    %v4773 = vmax.f32 %v4645, 0.0
    %v4774 = vmax.f32 %v4646, 0.0
    %v4775 = vmax.f32 %v4647, 0.0
    %v4776 = vmax.f32 %v4648, 0.0
    %v4777 = vmax.f32 %v4649, 0.0
    %v4778 = vmax.f32 %v4650, 0.0
    %v4779 = vmax.f32 %v4651, 0.0
    %v4780 = vmax.f32 %v4652, 0.0
    %v4781 = vmax.f32 %v4653, 0.0
    %v4782 = vmax.f32 %v4654, 0.0
    %v4783 = vmax.f32 %v4655, 0.0
    %v4784 = vmax.f32 %v4656, 0.0
    %v4785 = vmax.f32 %v4657, 0.0
    %v4786 = vmax.f32 %v4658, 0.0
    %v4787 = vmax.f32 %v4659, 0.0
    %v4788 = vmax.f32 %v4660, 0.0
    %v4789 = vmax.f32 %v4661, 0.0
    %v4790 = vmax.f32 %v4662, 0.0
    %v4791 = vmax.f32 %v4663, 0.0
    %v4792 = vmax.f32 %v4664, 0.0
    %v4793 = vmax.f32 %v4665, 0.0
    %v4794 = vmax.f32 %v4666, 0.0
    %v4795 = vmax.f32 %v4667, 0.0
    %v4796 = vmax.f32 %v4668, 0.0
    %v4797 = vmax.f32 %v4669, 0.0
    %v4798 = vmax.f32 %v4670, 0.0
    %v4799 = vmax.f32 %v4671, 0.0
    %v4800 = vmax.f32 %v4672, 0.0
    %v4801 = vmax.f32 %v4673, 0.0
    %v4802 = vmax.f32 %v4674, 0.0
    %v4803 = vmax.f32 %v4675, 0.0
    %v4804 = vmax.f32 %v4676, 0.0
    %v4805 = vmax.f32 %v4677, 0.0
    %v4806 = vmax.f32 %v4678, 0.0
    %v4807 = vmax.f32 %v4679, 0.0
    %v4808 = vmax.f32 %v4680, 0.0
    %v4809 = vmax.f32 %v4681, 0.0
    %v4810 = vmax.f32 %v4682, 0.0
    %v4811 = vmax.f32 %v4683, 0.0
    %v4812 = vmax.f32 %v4684, 0.0
    %v4813 = vmax.f32 %v4685, 0.0
    %v4814 = vmax.f32 %v4686, 0.0
    %v4815 = vmax.f32 %v4687, 0.0
    %v4816 = vmax.f32 %v4688, 0.0
    %v4817 = vmax.f32 %v4689, 0.0
    %v4818 = vmax.f32 %v4690, 0.0
    %v4819 = vmax.f32 %v4691, 0.0
    %v4820 = vmax.f32 %v4692, 0.0
    %v4821 = vmax.f32 %v4693, 0.0
    %v4822 = vmax.f32 %v4694, 0.0
    %v4823 = vmax.f32 %v4695, 0.0
    %v4824 = vmax.f32 %v4696, 0.0
    %v4825 = vmax.f32 %v4697, 0.0
    %v4826 = vmax.f32 %v4698, 0.0
    %v4827 = vmax.f32 %v4699, 0.0
    %v4828 = vmax.f32 %v4700, 0.0
    %v4829 = vmax.f32 %v4701, 0.0
    %v4830 = vmax.f32 %v4702, 0.0
    %v4831 = vmax.f32 %v4703, 0.0
    %v4832 = vmax.f32 %v4704, 0.0
    %v4833 = vmax.f32 %v4705, 0.0
    %v4834 = vmax.f32 %v4706, 0.0
    %v4835 = vmax.f32 %v4707, 0.0
    %v4836 = vmax.f32 %v4708, 0.0
    %v4837 = vmax.f32 %v4709, 0.0
    %v4838 = vmax.f32 %v4710, 0.0
    %v4839 = vmax.f32 %v4711, 0.0
    %v4840 = vmax.f32 %v4712, 0.0
    %v4841 = vmax.f32 %v4713, 0.0
    %v4842 = vmax.f32 %v4714, 0.0
    %v4843 = vmax.f32 %v4715, 0.0
    %v4844 = vmax.f32 %v4716, 0.0
    %v4845 = vmax.f32 %v4717, 0.0
    %v4846 = vmax.f32 %v4718, 0.0
    %v4847 = vmax.f32 %v4719, 0.0
    %v4848 = vmax.f32 %v4720, 0.0
    %v4849 = vmax.f32 %v4721, 0.0
    %v4850 = vmax.f32 %v4722, 0.0
    %v4851 = vmax.f32 %v4723, 0.0
    %v4852 = vmax.f32 %v4724, 0.0
    %v4853 = vmax.f32 %v4725, 0.0
    %v4854 = vmax.f32 %v4726, 0.0
    %v4855 = vmax.f32 %v4727, 0.0
    %v4856 = vmax.f32 %v4728, 0.0
    %v4857 = vmax.f32 %v4729, 0.0
    %v4858 = vmax.f32 %v4730, 0.0
    %v4859 = vmax.f32 %v4731, 0.0
    %v4860 = vmax.f32 %v4732, 0.0
    %v4861 = vmax.f32 %v4733, 0.0
    %v4862 = vmax.f32 %v4734, 0.0
    %v4863 = vmax.f32 %v4735, 0.0
    %v4864 = vmax.f32 %v4736, 0.0
    %v4865 = vmax.f32 %v4737, 0.0
    %v4866 = vmax.f32 %v4738, 0.0
    %v4867 = vmax.f32 %v4739, 0.0
    %v4868 = vmax.f32 %v4740, 0.0
    %v4869 = vmax.f32 %v4741, 0.0
    %v4870 = vmax.f32 %v4742, 0.0
    %v4871 = vmax.f32 %v4743, 0.0
    %v4872 = vmax.f32 %v4744, 0.0
    %v4873 = vmax.f32 %v4745, 0.0
    %v4874 = vmax.f32 %v4746, 0.0
    %v4875 = vmax.f32 %v4747, 0.0
    %v4876 = vmax.f32 %v4748, 0.0
    %v4877 = vmax.f32 %v4749, 0.0
    %v4878 = vmax.f32 %v4750, 0.0
    %v4879 = vmax.f32 %v4751, 0.0
    %v4880 = vmax.f32 %v4752, 0.0
    %v4881 = vmax.f32 %v4753, 0.0
    %v4882 = vmax.f32 %v4754, 0.0
    %v4883 = vmax.f32 %v4755, 0.0
    %v4884 = vmax.f32 %v4756, 0.0
    %v4885 = vmax.f32 %v4757, 0.0
    %v4886 = vmax.f32 %v4758, 0.0
    %v4887 = vmax.f32 %v4759, 0.0
    %v4888 = vmax.f32 %v4760, 0.0
    %v4889 = vmax.f32 %v4761, 0.0
    %v4890 = vmax.f32 %v4762, 0.0
    %v4891 = vmax.f32 %v4763, 0.0
    %v4892 = vmax.f32 %v4764, 0.0
    %v4893 = vmax.f32 %v4765, 0.0
    %v4894 = vmax.f32 %v4766, 0.0
    %v4895 = vmax.f32 %v4767, 0.0
    %v4896 = vpack.c.bf16 %v4776, %v4768
    %v4897 = vpack.c.bf16 %v4777, %v4769
    %v4898 = vpack.c.bf16 %v4778, %v4770
    %v4899 = vpack.c.bf16 %v4779, %v4771
    %v4900 = vpack.c.bf16 %v4780, %v4772
    %v4901 = vpack.c.bf16 %v4781, %v4773
    %v4902 = vpack.c.bf16 %v4782, %v4774
    %v4903 = vpack.c.bf16 %v4783, %v4775
    %v4904 = vpack.c.bf16 %v4792, %v4784
    %v4905 = vpack.c.bf16 %v4793, %v4785
    %v4906 = vpack.c.bf16 %v4794, %v4786
    %v4907 = vpack.c.bf16 %v4795, %v4787
    %v4908 = vpack.c.bf16 %v4796, %v4788
    %v4909 = vpack.c.bf16 %v4797, %v4789
    %v4910 = vpack.c.bf16 %v4798, %v4790
    %v4911 = vpack.c.bf16 %v4799, %v4791
    %v4912 = vpack.c.bf16 %v4808, %v4800
    %v4913 = vpack.c.bf16 %v4809, %v4801
    %v4914 = vpack.c.bf16 %v4810, %v4802
    %v4915 = vpack.c.bf16 %v4811, %v4803
    %v4916 = vpack.c.bf16 %v4812, %v4804
    %v4917 = vpack.c.bf16 %v4813, %v4805
    %v4918 = vpack.c.bf16 %v4814, %v4806
    %v4919 = vpack.c.bf16 %v4815, %v4807
    %v4920 = vpack.c.bf16 %v4824, %v4816
    %v4921 = vpack.c.bf16 %v4825, %v4817
    %v4922 = vpack.c.bf16 %v4826, %v4818
    %v4923 = vpack.c.bf16 %v4827, %v4819
    %v4924 = vpack.c.bf16 %v4828, %v4820
    %v4925 = vpack.c.bf16 %v4829, %v4821
    %v4926 = vpack.c.bf16 %v4830, %v4822
    %v4927 = vpack.c.bf16 %v4831, %v4823
    %v4928 = vpack.c.bf16 %v4840, %v4832
    %v4929 = vpack.c.bf16 %v4841, %v4833
    %v4930 = vpack.c.bf16 %v4842, %v4834
    %v4931 = vpack.c.bf16 %v4843, %v4835
    %v4932 = vpack.c.bf16 %v4844, %v4836
    %v4933 = vpack.c.bf16 %v4845, %v4837
    %v4934 = vpack.c.bf16 %v4846, %v4838
    %v4935 = vpack.c.bf16 %v4847, %v4839
    %v4936 = vpack.c.bf16 %v4856, %v4848
    %v4937 = vpack.c.bf16 %v4857, %v4849
    %v4938 = vpack.c.bf16 %v4858, %v4850
    %v4939 = vpack.c.bf16 %v4859, %v4851
    %v4940 = vpack.c.bf16 %v4860, %v4852
    %v4941 = vpack.c.bf16 %v4861, %v4853
    %v4942 = vpack.c.bf16 %v4862, %v4854
    %v4943 = vpack.c.bf16 %v4863, %v4855
    %v4944 = vpack.c.bf16 %v4872, %v4864
    %v4945 = vpack.c.bf16 %v4873, %v4865
    %v4946 = vpack.c.bf16 %v4874, %v4866
    %v4947 = vpack.c.bf16 %v4875, %v4867
    %v4948 = vpack.c.bf16 %v4876, %v4868
    %v4949 = vpack.c.bf16 %v4877, %v4869
    %v4950 = vpack.c.bf16 %v4878, %v4870
    %v4951 = vpack.c.bf16 %v4879, %v4871
    %v4952 = vpack.c.bf16 %v4888, %v4880
    %v4953 = vpack.c.bf16 %v4889, %v4881
    %v4954 = vpack.c.bf16 %v4890, %v4882
    %v4955 = vpack.c.bf16 %v4891, %v4883
    %v4956 = vpack.c.bf16 %v4892, %v4884
    %v4957 = vpack.c.bf16 %v4893, %v4885
    %v4958 = vpack.c.bf16 %v4894, %v4886
    %v4959 = vpack.c.bf16 %v4895, %v4887
    %v5024 = vunpack.c.l.b16 %v4896
    %v5025 = vunpack.c.l.b16 %v4897
    %v5026 = vunpack.c.l.b16 %v4898
    %v5027 = vunpack.c.l.b16 %v4899
    %v5028 = vunpack.c.l.b16 %v4900
    %v5029 = vunpack.c.l.b16 %v4901
    %v5030 = vunpack.c.l.b16 %v4902
    %v5031 = vunpack.c.l.b16 %v4903
    %v5032 = vunpack.c.h.b16 %v4896
    %v5033 = vunpack.c.h.b16 %v4897
    %v5034 = vunpack.c.h.b16 %v4898
    %v5035 = vunpack.c.h.b16 %v4899
    %v5036 = vunpack.c.h.b16 %v4900
    %v5037 = vunpack.c.h.b16 %v4901
    %v5038 = vunpack.c.h.b16 %v4902
    %v5039 = vunpack.c.h.b16 %v4903
    %v5040 = vunpack.c.l.b16 %v4904
    %v5041 = vunpack.c.l.b16 %v4905
    %v5042 = vunpack.c.l.b16 %v4906
    %v5043 = vunpack.c.l.b16 %v4907
    %v5044 = vunpack.c.l.b16 %v4908
    %v5045 = vunpack.c.l.b16 %v4909
    %v5046 = vunpack.c.l.b16 %v4910
    %v5047 = vunpack.c.l.b16 %v4911
    %v5048 = vunpack.c.h.b16 %v4904
    %v5049 = vunpack.c.h.b16 %v4905
    %v5050 = vunpack.c.h.b16 %v4906
    %v5051 = vunpack.c.h.b16 %v4907
    %v5052 = vunpack.c.h.b16 %v4908
    %v5053 = vunpack.c.h.b16 %v4909
    %v5054 = vunpack.c.h.b16 %v4910
    %v5055 = vunpack.c.h.b16 %v4911
    %v5056 = vunpack.c.l.b16 %v4912
    %v5057 = vunpack.c.l.b16 %v4913
    %v5058 = vunpack.c.l.b16 %v4914
    %v5059 = vunpack.c.l.b16 %v4915
    %v5060 = vunpack.c.l.b16 %v4916
    %v5061 = vunpack.c.l.b16 %v4917
    %v5062 = vunpack.c.l.b16 %v4918
    %v5063 = vunpack.c.l.b16 %v4919
    %v5064 = vunpack.c.h.b16 %v4912
    %v5065 = vunpack.c.h.b16 %v4913
    %v5066 = vunpack.c.h.b16 %v4914
    %v5067 = vunpack.c.h.b16 %v4915
    %v5068 = vunpack.c.h.b16 %v4916
    %v5069 = vunpack.c.h.b16 %v4917
    %v5070 = vunpack.c.h.b16 %v4918
    %v5071 = vunpack.c.h.b16 %v4919
    %v5072 = vunpack.c.l.b16 %v4920
    %v5073 = vunpack.c.l.b16 %v4921
    %v5074 = vunpack.c.l.b16 %v4922
    %v5075 = vunpack.c.l.b16 %v4923
    %v5076 = vunpack.c.l.b16 %v4924
    %v5077 = vunpack.c.l.b16 %v4925
    %v5078 = vunpack.c.l.b16 %v4926
    %v5079 = vunpack.c.l.b16 %v4927
    %v5080 = vunpack.c.h.b16 %v4920
    %v5081 = vunpack.c.h.b16 %v4921
    %v5082 = vunpack.c.h.b16 %v4922
    %v5083 = vunpack.c.h.b16 %v4923
    %v5084 = vunpack.c.h.b16 %v4924
    %v5085 = vunpack.c.h.b16 %v4925
    %v5086 = vunpack.c.h.b16 %v4926
    %v5087 = vunpack.c.h.b16 %v4927
    %v5088 = vunpack.c.l.b16 %v4928
    %v5089 = vunpack.c.l.b16 %v4929
    %v5090 = vunpack.c.l.b16 %v4930
    %v5091 = vunpack.c.l.b16 %v4931
    %v5092 = vunpack.c.l.b16 %v4932
    %v5093 = vunpack.c.l.b16 %v4933
    %v5094 = vunpack.c.l.b16 %v4934
    %v5095 = vunpack.c.l.b16 %v4935
    %v5096 = vunpack.c.h.b16 %v4928
    %v5097 = vunpack.c.h.b16 %v4929
    %v5098 = vunpack.c.h.b16 %v4930
    %v5099 = vunpack.c.h.b16 %v4931
    %v5100 = vunpack.c.h.b16 %v4932
    %v5101 = vunpack.c.h.b16 %v4933
    %v5102 = vunpack.c.h.b16 %v4934
    %v5103 = vunpack.c.h.b16 %v4935
    %v5104 = vunpack.c.l.b16 %v4936
    %v5105 = vunpack.c.l.b16 %v4937
    %v5106 = vunpack.c.l.b16 %v4938
    %v5107 = vunpack.c.l.b16 %v4939
    %v5108 = vunpack.c.l.b16 %v4940
    %v5109 = vunpack.c.l.b16 %v4941
    %v5110 = vunpack.c.l.b16 %v4942
    %v5111 = vunpack.c.l.b16 %v4943
    %v5112 = vunpack.c.h.b16 %v4936
    %v5113 = vunpack.c.h.b16 %v4937
    %v5114 = vunpack.c.h.b16 %v4938
    %v5115 = vunpack.c.h.b16 %v4939
    %v5116 = vunpack.c.h.b16 %v4940
    %v5117 = vunpack.c.h.b16 %v4941
    %v5118 = vunpack.c.h.b16 %v4942
    %v5119 = vunpack.c.h.b16 %v4943
    %v5120 = vunpack.c.l.b16 %v4944
    %v5121 = vunpack.c.l.b16 %v4945
    %v5122 = vunpack.c.l.b16 %v4946
    %v5123 = vunpack.c.l.b16 %v4947
    %v5124 = vunpack.c.l.b16 %v4948
    %v5125 = vunpack.c.l.b16 %v4949
    %v5126 = vunpack.c.l.b16 %v4950
    %v5127 = vunpack.c.l.b16 %v4951
    %v5128 = vunpack.c.h.b16 %v4944
    %v5129 = vunpack.c.h.b16 %v4945
    %v5130 = vunpack.c.h.b16 %v4946
    %v5131 = vunpack.c.h.b16 %v4947
    %v5132 = vunpack.c.h.b16 %v4948
    %v5133 = vunpack.c.h.b16 %v4949
    %v5134 = vunpack.c.h.b16 %v4950
    %v5135 = vunpack.c.h.b16 %v4951
    %v5136 = vunpack.c.l.b16 %v4952
    %v5137 = vunpack.c.l.b16 %v4953
    %v5138 = vunpack.c.l.b16 %v4954
    %v5139 = vunpack.c.l.b16 %v4955
    %v5140 = vunpack.c.l.b16 %v4956
    %v5141 = vunpack.c.l.b16 %v4957
    %v5142 = vunpack.c.l.b16 %v4958
    %v5143 = vunpack.c.l.b16 %v4959
    %v5144 = vunpack.c.h.b16 %v4952
    %v5145 = vunpack.c.h.b16 %v4953
    %v5146 = vunpack.c.h.b16 %v4954
    %v5147 = vunpack.c.h.b16 %v4955
    %v5148 = vunpack.c.h.b16 %v4956
    %v5149 = vunpack.c.h.b16 %v4957
    %v5150 = vunpack.c.h.b16 %v4958
    %v5151 = vunpack.c.h.b16 %v4959
    %v5152 = vpack.c.b16 %v5025, %v5024
    %v5153 = vpack.c.b16 %v5027, %v5026
    %v5154 = vpack.c.b16 %v5029, %v5028
    %v5155 = vpack.c.b16 %v5031, %v5030
    %v5156 = vpack.c.b16 %v5033, %v5032
    %v5157 = vpack.c.b16 %v5035, %v5034
    %v5158 = vpack.c.b16 %v5037, %v5036
    %v5159 = vpack.c.b16 %v5039, %v5038
    %v5160 = vpack.c.b16 %v5041, %v5040
    %v5161 = vpack.c.b16 %v5043, %v5042
    %v5162 = vpack.c.b16 %v5045, %v5044
    %v5163 = vpack.c.b16 %v5047, %v5046
    %v5164 = vpack.c.b16 %v5049, %v5048
    %v5165 = vpack.c.b16 %v5051, %v5050
    %v5166 = vpack.c.b16 %v5053, %v5052
    %v5167 = vpack.c.b16 %v5055, %v5054
    %v5168 = vpack.c.b16 %v5057, %v5056
    %v5169 = vpack.c.b16 %v5059, %v5058
    %v5170 = vpack.c.b16 %v5061, %v5060
    %v5171 = vpack.c.b16 %v5063, %v5062
    %v5172 = vpack.c.b16 %v5065, %v5064
    %v5173 = vpack.c.b16 %v5067, %v5066
    %v5174 = vpack.c.b16 %v5069, %v5068
    %v5175 = vpack.c.b16 %v5071, %v5070
    %v5176 = vpack.c.b16 %v5073, %v5072
    %v5177 = vpack.c.b16 %v5075, %v5074
    %v5178 = vpack.c.b16 %v5077, %v5076
    %v5179 = vpack.c.b16 %v5079, %v5078
    %v5180 = vpack.c.b16 %v5081, %v5080
    %v5181 = vpack.c.b16 %v5083, %v5082
    %v5182 = vpack.c.b16 %v5085, %v5084
    %v5183 = vpack.c.b16 %v5087, %v5086
    %v5184 = vpack.c.b16 %v5089, %v5088
    %v5185 = vpack.c.b16 %v5091, %v5090
    %v5186 = vpack.c.b16 %v5093, %v5092
    %v5187 = vpack.c.b16 %v5095, %v5094
    %v5188 = vpack.c.b16 %v5097, %v5096
    %v5189 = vpack.c.b16 %v5099, %v5098
    %v5190 = vpack.c.b16 %v5101, %v5100
    %v5191 = vpack.c.b16 %v5103, %v5102
    %v5192 = vpack.c.b16 %v5105, %v5104
    %v5193 = vpack.c.b16 %v5107, %v5106
    %v5194 = vpack.c.b16 %v5109, %v5108
    %v5195 = vpack.c.b16 %v5111, %v5110
    %v5196 = vpack.c.b16 %v5113, %v5112
    %v5197 = vpack.c.b16 %v5115, %v5114
    %v5198 = vpack.c.b16 %v5117, %v5116
    %v5199 = vpack.c.b16 %v5119, %v5118
    %v5200 = vpack.c.b16 %v5121, %v5120
    %v5201 = vpack.c.b16 %v5123, %v5122
    %v5202 = vpack.c.b16 %v5125, %v5124
    %v5203 = vpack.c.b16 %v5127, %v5126
    %v5204 = vpack.c.b16 %v5129, %v5128
    %v5205 = vpack.c.b16 %v5131, %v5130
    %v5206 = vpack.c.b16 %v5133, %v5132
    %v5207 = vpack.c.b16 %v5135, %v5134
    %v5208 = vpack.c.b16 %v5137, %v5136
    %v5209 = vpack.c.b16 %v5139, %v5138
    %v5210 = vpack.c.b16 %v5141, %v5140
    %v5211 = vpack.c.b16 %v5143, %v5142
    %v5212 = vpack.c.b16 %v5145, %v5144
    %v5213 = vpack.c.b16 %v5147, %v5146
    %v5214 = vpack.c.b16 %v5149, %v5148
    %v5215 = vpack.c.b16 %v5151, %v5150
    %5280 = vst [vmem:[#allocation8] sm:$0xff] %v5152
    %5281 = vst [vmem:[#allocation8 + $0x8] sm:$0xff] %v5153
    %5282 = vst [vmem:[#allocation8 + $0x10] sm:$0xff] %v5154
    %5283 = vst [vmem:[#allocation8 + $0x18] sm:$0xff] %v5155
    %5284 = vst [vmem:[#allocation8 + $0x20] sm:$0xff] %v5156
    %5285 = vst [vmem:[#allocation8 + $0x28] sm:$0xff] %v5157
    %5286 = vst [vmem:[#allocation8 + $0x30] sm:$0xff] %v5158
    %5287 = vst [vmem:[#allocation8 + $0x38] sm:$0xff] %v5159
    %5288 = vst [vmem:[#allocation8 + $0x40] sm:$0xff] %v5160
    %5289 = vst [vmem:[#allocation8 + $0x48] sm:$0xff] %v5161
    %5290 = vst [vmem:[#allocation8 + $0x50] sm:$0xff] %v5162
    %5291 = vst [vmem:[#allocation8 + $0x58] sm:$0xff] %v5163
    %5292 = vst [vmem:[#allocation8 + $0x60] sm:$0xff] %v5164
    %5293 = vst [vmem:[#allocation8 + $0x68] sm:$0xff] %v5165
    %5294 = vst [vmem:[#allocation8 + $0x70] sm:$0xff] %v5166
    %5295 = vst [vmem:[#allocation8 + $0x78] sm:$0xff] %v5167
    %5296 = vst [vmem:[#allocation8 + $0x80] sm:$0xff] %v5168
    %5297 = vst [vmem:[#allocation8 + $0x88] sm:$0xff] %v5169
    %5298 = vst [vmem:[#allocation8 + $0x90] sm:$0xff] %v5170
    %5299 = vst [vmem:[#allocation8 + $0x98] sm:$0xff] %v5171
    %5300 = vst [vmem:[#allocation8 + $0xa0] sm:$0xff] %v5172
    %5301 = vst [vmem:[#allocation8 + $0xa8] sm:$0xff] %v5173
    %5302 = vst [vmem:[#allocation8 + $0xb0] sm:$0xff] %v5174
    %5303 = vst [vmem:[#allocation8 + $0xb8] sm:$0xff] %v5175
    %5304 = vst [vmem:[#allocation8 + $0xc0] sm:$0xff] %v5176
    %5305 = vst [vmem:[#allocation8 + $0xc8] sm:$0xff] %v5177
    %5306 = vst [vmem:[#allocation8 + $0xd0] sm:$0xff] %v5178
    %5307 = vst [vmem:[#allocation8 + $0xd8] sm:$0xff] %v5179
    %5308 = vst [vmem:[#allocation8 + $0xe0] sm:$0xff] %v5180
    %5309 = vst [vmem:[#allocation8 + $0xe8] sm:$0xff] %v5181
    %5310 = vst [vmem:[#allocation8 + $0xf0] sm:$0xff] %v5182
    %5311 = vst [vmem:[#allocation8 + $0xf8] sm:$0xff] %v5183
    %5312 = vst [vmem:[#allocation8 + $0x100] sm:$0xff] %v5184
    %5313 = vst [vmem:[#allocation8 + $0x108] sm:$0xff] %v5185
    %5314 = vst [vmem:[#allocation8 + $0x110] sm:$0xff] %v5186
    %5315 = vst [vmem:[#allocation8 + $0x118] sm:$0xff] %v5187
    %5316 = vst [vmem:[#allocation8 + $0x120] sm:$0xff] %v5188
    %5317 = vst [vmem:[#allocation8 + $0x128] sm:$0xff] %v5189
    %5318 = vst [vmem:[#allocation8 + $0x130] sm:$0xff] %v5190
    %5319 = vst [vmem:[#allocation8 + $0x138] sm:$0xff] %v5191
    %5320 = vst [vmem:[#allocation8 + $0x140] sm:$0xff] %v5192
    %5321 = vst [vmem:[#allocation8 + $0x148] sm:$0xff] %v5193
    %5322 = vst [vmem:[#allocation8 + $0x150] sm:$0xff] %v5194
    %5323 = vst [vmem:[#allocation8 + $0x158] sm:$0xff] %v5195
    %5324 = vst [vmem:[#allocation8 + $0x160] sm:$0xff] %v5196
    %5325 = vst [vmem:[#allocation8 + $0x168] sm:$0xff] %v5197
    %5326 = vst [vmem:[#allocation8 + $0x170] sm:$0xff] %v5198
    %5327 = vst [vmem:[#allocation8 + $0x178] sm:$0xff] %v5199
    %5328 = vst [vmem:[#allocation8 + $0x180] sm:$0xff] %v5200
    %5329 = vst [vmem:[#allocation8 + $0x188] sm:$0xff] %v5201
    %5330 = vst [vmem:[#allocation8 + $0x190] sm:$0xff] %v5202
    %5331 = vst [vmem:[#allocation8 + $0x198] sm:$0xff] %v5203
    %5332 = vst [vmem:[#allocation8 + $0x1a0] sm:$0xff] %v5204
    %5333 = vst [vmem:[#allocation8 + $0x1a8] sm:$0xff] %v5205
    %5334 = vst [vmem:[#allocation8 + $0x1b0] sm:$0xff] %v5206
    %5335 = vst [vmem:[#allocation8 + $0x1b8] sm:$0xff] %v5207
    %5336 = vst [vmem:[#allocation8 + $0x1c0] sm:$0xff] %v5208
    %5337 = vst [vmem:[#allocation8 + $0x1c8] sm:$0xff] %v5209
    %5338 = vst [vmem:[#allocation8 + $0x1d0] sm:$0xff] %v5210
    %5339 = vst [vmem:[#allocation8 + $0x1d8] sm:$0xff] %v5211
    %5340 = vst [vmem:[#allocation8 + $0x1e0] sm:$0xff] %v5212
    %5341 = vst [vmem:[#allocation8 + $0x1e8] sm:$0xff] %v5213
    %5342 = vst [vmem:[#allocation8 + $0x1f0] sm:$0xff] %v5214
    %5343 = vst [vmem:[#allocation8 + $0x1f8] sm:$0xff] %v5215
    // Predicated region
    $region38: #{tpu_custom_call.1} parent=1 // pred_check
      _
    $region39: #{tpu_custom_call.1} parent=1 // pred_check_branch
      %5345 = sbr.rel (0) target = $region41
    $region40: #{tpu_custom_call.1} parent=1 // pred_region
      %s5347 = ssub.s32 8192, 8192
      %5348 = vsyncadd [#allocation5], %s5347
      %s5349 = sshll.u32 [#allocation8], 4
      %s5350 = int_to_ptr.vmem [resolvable:$true] %s5349
      %5355 = dma.vmem_to_hbm [thread:$0]  %s5350, 8192, %s7, [#allocation5], 512, 512, 32
    $region41: #{tpu_custom_call.1} parent=1 // pred_fallthru
      _
    // Predicated region
    $region42: #{tpu_custom_call.1} parent=1 // pred_check
      _
    $region43: #{tpu_custom_call.1} parent=1 // pred_check_branch
      %5357 = sbr.rel (0) target = $region45
    $region44: #{tpu_custom_call.1} parent=1 // pred_region
      %5358 = dma.done [#allocation5], 8192
    $region45: #{tpu_custom_call.1} parent=1 // pred_fallthru
      _
    %5359 = vsyncpa [#allocation4], 1
    %5360 = vsyncpa [#allocation7], 1
    %5361 = vsyncpa [#allocation5], 1

</llo_original>
